<compile_context>
chip_gen: v5e
topology: v5e:2x2
jax: 0.10.0
libtpu: 0.0.40
codegen_flags: <defaults>
</compile_context>

<pallas_src>
import jax
import jax.numpy as jnp
from jax import lax
from jax.experimental import pallas as pl
from jax.experimental.pallas import tpu as pltpu


# --------------------------------------------------------------------------
# In-kernel helpers
# --------------------------------------------------------------------------
def _roll1(x, shift, axis):
    """jnp.roll with a static shift written as slice+concat (direction-safe)."""
    n = x.shape[axis]
    s = shift % n
    if s == 0:
        return x
    lo = lax.slice_in_dim(x, n - s, n, axis=axis)
    hi = lax.slice_in_dim(x, 0, n - s, axis=axis)
    return lax.concatenate([lo, hi], dimension=axis)


def _flat_roll(p, shift, wrap_mask):
    """torch.roll(p, shifts=shift) with NO dims on a (B, N) tensor == roll of
    the flattened view (slot 0 of batch b wraps in from the last slot of batch
    b-1 for shift=+1, and the reverse for shift=-1).  Computed here on the
    (B, N, 1) layout.  `wrap_mask` marks the wrap column (hoisted iota)."""
    within = _roll1(p, shift, axis=1)        # roll inside each batch row
    across = _roll1(within, shift, axis=0)   # fix the cross-batch wrap column
    return jnp.where(wrap_mask, across, within)


def _make_kernel(B, N, Vp, Tb, rem):
    """Kernel processing Tb consecutive Stack.forward steps per grid step.
    `rem` = number of valid steps in the LAST grid block (tail masking)."""

    def kernel(sharpen_ref,          # SMEM (1,)
               gates_ref,            # SMEM (Tp*3*B,)  [t, (push,pop,null), b]
               stack0_ref,           # (B, N, Vp)   initial state (fetched once)
               ptr0_ref,             # (B, N, 1)
               zero_ref,             # (B, 1, Vp)
               values_ref,           # (Tb, B, 1, Vp) streamed per grid step
               popped_ref,           # (Tb, B, Vp)    streamed output
               stack_ref, ptr_ref):  # VMEM-resident state outputs
        g = pl.program_id(0)

        # Seed the resident state from the initial stack / pointer once.
        @pl.when(g == 0)
        def _():
            stack_ref[...] = stack0_ref[...]
            ptr_ref[...] = ptr0_ref[...]

        sharpen = sharpen_ref[0]
        zero_b1v = zero_ref[...]                        # (B, 1, Vp)
        not_last = (g + 1) < pl.num_programs(0)

        # Loop-invariant wrap masks for the flattened roll (hoisted).
        col = lax.broadcasted_iota(jnp.int32, (B, N, 1), 1)
        wrap_first = col == 0
        wrap_last = col == (N - 1)

        stack = stack_ref[...]                          # (B, N, Vp)
        pointer = ptr_ref[...]                          # (B, N, 1)

        def read_gate(t, k, shape):
            """Rebuild a per-batch gate multiplier from SMEM scalars."""
            base = (t * 3 + k) * B
            parts = [jnp.full(shape, gates_ref[base + b], dtype=jnp.float32)
                     for b in range(B)]
            return parts[0] if B == 1 else jnp.concatenate(parts, axis=0)

        for tb in range(Tb):                            # static unroll
            t = g * Tb + tb

            s_push = read_gate(t, 0, (1, 1, 1))         # (B,1,1)
            s_pop = read_gate(t, 1, (1, 1, 1))
            s_null = read_gate(t, 2, (1, 1, 1))
            s_pop_row = read_gate(t, 1, (1, 1))         # (B,1) for popped (B,Vp)

            value = values_ref[tb]                      # (B, 1, Vp)

            # Flattened torch.roll of the pointer (push_ / pop_ pointers).
            push_p = _flat_roll(pointer, 1, wrap_first)   # (B, N, 1)
            pop_p = _flat_roll(pointer, -1, wrap_last)    # (B, N, 1)

            # pop_() reads the top of the *old* stack; scaled by should_pop.
            read_val = jnp.sum(stack * pointer, axis=1)   # (B, Vp)
            popped_ref[tb] = read_val * s_pop_row

            # Factored superposition of {null, push, pop}:
            #   new_stack = stack*[null + push*(1-push_p) + pop*(1-ptr)]
            #             + value*(push*push_p) + zero_vec*(pop*ptr)
            stack_coef = (s_null + s_push * (1.0 - push_p)
                          + s_pop * (1.0 - pointer))      # (B, N, 1)
            push_w = s_push * push_p                      # (B, N, 1)
            pop_w = s_pop * pointer                       # (B, N, 1)
            new_stack = (stack * stack_coef
                         + value * push_w
                         + zero_b1v * pop_w)              # (B, N, Vp)

            new_ptr = (pointer * s_null + push_p * s_push
                       + pop_p * s_pop)                   # (B, N, 1)

            # Pointer sharpening (softmax over the stack axis).  The module's
            # post-softmax renormalisation is a mathematical no-op -> dropped.
            # Exact divide: (B,1,1) tile, essentially free, no drift over T.
            logits = new_ptr * sharpen
            logits = logits - jnp.max(logits, axis=1, keepdims=True)
            e = jnp.exp(logits)
            new_p = e / jnp.sum(e, axis=1, keepdims=True)

            if tb < rem:
                stack, pointer = new_stack, new_p
            else:
                # Tail-padding steps only exist in the last grid block.
                stack = jnp.where(not_last, new_stack, stack)
                pointer = jnp.where(not_last, new_p, pointer)

        stack_ref[...] = stack
        ptr_ref[...] = pointer

    return kernel


# --------------------------------------------------------------------------
# Wrappers
# --------------------------------------------------------------------------
def _pad_axis(x, axis, target):
    cur = x.shape[axis]
    if cur == target:
        return x
    cfg = [(0, 0)] * x.ndim
    cfg[axis] = (0, target - cur)
    return jnp.pad(x, cfg)


def stack_forward_sequence(stack, pointer, zero_vec, sharpen_pointer,
                           should_push, should_pop, should_null_op, values,
                           block_t=16):
    """Run T consecutive Stack.forward steps in a single fused kernel.

    Args:
      stack:    (B, N, V)  initial stack state
      pointer:  (B, N)     initial pointer state
      zero_vec: (B, V)
      sharpen_pointer: scalar
      should_push / should_pop / should_null_op: (T, B)
      values:   (T, B, V)
      block_t:  timesteps processed per grid step (amortizes grid overhead)

    Returns (popped (T, B, V), final_stack (B, N, V), final_pointer (B, N)).
    """
    f32 = jnp.float32
    B, N, V = stack.shape
    T = values.shape[0]
    Vp = ((V + 127) // 128) * 128            # lane-dense pad of the vector dim
    Tb = max(1, min(block_t, T))
    num_blocks = -(-T // Tb)
    Tp = num_blocks * Tb
    rem = T - (num_blocks - 1) * Tb          # valid steps in the last block

    stack_p = _pad_axis(jnp.asarray(stack, f32), 2, Vp)              # (B,N,Vp)
    ptr_p = jnp.asarray(pointer, f32).reshape(B, N, 1)               # (B,N,1)
    zero_p = _pad_axis(jnp.asarray(zero_vec, f32), 1, Vp).reshape(B, 1, Vp)
    values_p = _pad_axis(jnp.asarray(values, f32), 2, Vp)
    values_p = _pad_axis(values_p, 0, Tp).reshape(Tp, B, 1, Vp)

    gates = jnp.stack([jnp.asarray(should_push, f32),
                       jnp.asarray(should_pop, f32),
                       jnp.asarray(should_null_op, f32)], axis=1)    # (T,3,B)
    gates = _pad_axis(gates, 0, Tp).reshape(-1)                      # (Tp*3*B,)
    sharpen = jnp.asarray(sharpen_pointer, f32).reshape(1)

    kernel = _make_kernel(B, N, Vp, Tb, rem)

    in_specs = [
        pl.BlockSpec(memory_space=pltpu.MemorySpace.SMEM),       # sharpen
        pl.BlockSpec(memory_space=pltpu.MemorySpace.SMEM),       # gates (flat)
        pl.BlockSpec((B, N, Vp), lambda g: (0, 0, 0)),           # stack0
        pl.BlockSpec((B, N, 1), lambda g: (0, 0, 0)),            # pointer0
        pl.BlockSpec((B, 1, Vp), lambda g: (0, 0, 0)),           # zero_vec
        pl.BlockSpec((Tb, B, 1, Vp), lambda g: (g, 0, 0, 0)),    # values
    ]
    out_specs = (
        pl.BlockSpec((Tb, B, Vp), lambda g: (g, 0, 0)),          # popped
        pl.BlockSpec((B, N, Vp), lambda g: (0, 0, 0)),           # stack state
        pl.BlockSpec((B, N, 1), lambda g: (0, 0, 0)),            # pointer state
    )
    out_shape = (
        jax.ShapeDtypeStruct((Tp, B, Vp), f32),
        jax.ShapeDtypeStruct((B, N, Vp), f32),
        jax.ShapeDtypeStruct((B, N, 1), f32),
    )

    popped, new_stack, new_pointer = pl.pallas_call(
        kernel,
        grid=(num_blocks,),
        in_specs=in_specs,
        out_specs=out_specs,
        out_shape=out_shape,
        compiler_params=pltpu.CompilerParams(
            # Recurrent axis -> sequential.  Default scoped-VMEM limits are
            # ample at these shapes; re-derive per generation when scaling.
            dimension_semantics=("arbitrary",)),
    )(sharpen, gates, stack_p, ptr_p, zero_p, values_p)

    return (popped[:T, :, :V], new_stack[..., :V],
            new_pointer.reshape(B, N))


def stack_forward(stack, pointer, zero_vec, sharpen_pointer,
                  should_push, should_pop, should_null_op, value):
    """Functional equivalent of a single Stack.forward call."""
    popped, new_stack, new_pointer = stack_forward_sequence(
        stack, pointer, zero_vec, sharpen_pointer,
        should_push[None], should_pop[None], should_null_op[None], value[None])
    return popped[0], new_stack, new_pointer


# --------------------------------------------------------------------------
# Pure-JAX reference (mirrors the PyTorch forward exactly, incl. the flattened
# torch.roll and the redundant post-softmax renorm).
# --------------------------------------------------------------------------
def _reference_step(stack, pointer, zero_vec, sharpen, push, pop, null, value):
    B, N, _ = stack.shape
    push_p = jnp.roll(pointer.reshape(-1), 1).reshape(B, N)
    pop_p = jnp.roll(pointer.reshape(-1), -1).reshape(B, N)
    push_stack = (stack * (1 - push_p)[:, :, None]
                  + value[:, None, :] * push_p[:, :, None])
    read_val = jnp.einsum('bnv,bn->bv', stack, pointer)
    pop_stack = (stack * (1 - pointer)[:, :, None]
                 + zero_vec[:, None, :] * pointer[:, :, None])
    new_stack = (stack * null[:, None, None] + push_stack * push[:, None, None]
                 + pop_stack * pop[:, None, None])
    new_ptr = pointer * null[:, None] + push_p * push[:, None] + pop_p * pop[:, None]
    p = jax.nn.softmax(new_ptr * sharpen, axis=1)
    psum = p.sum(axis=1, keepdims=True)
    p = p / jnp.maximum(psum, 1e-8)
    return read_val * pop[:, None], new_stack, p


def _reference_sequence(stack, pointer, zero_vec, sharpen, push, pop, null, values):
    popped_all = []
    for t in range(values.shape[0]):
        popped, stack, pointer = _reference_step(
            stack, pointer, zero_vec, sharpen, push[t], pop[t], null[t], values[t])
        popped_all.append(popped)
    return jnp.stack(popped_all), stack, pointer


# --------------------------------------------------------------------------
if __name__ == "__main__":
    B, N_STACK, VEC_SIZE, T = 2, 8, 32, 8
    ZERO_OFFSET = 1e-3
    SHARPEN = 5.0
    TOL = 1e-4

    # Stack.init(batch_size, zero_offset, ...)
    pointer0 = jnp.zeros((B, N_STACK), jnp.float32).at[:, 0].set(1.0)
    stack0 = jnp.full((B, N_STACK, VEC_SIZE), ZERO_OFFSET, jnp.float32)
    zero_vec = jnp.full((B, VEC_SIZE), ZERO_OFFSET, jnp.float32)

    key = jax.random.PRNGKey(0)
    k1, k2, k3, k4 = jax.random.split(key, 4)
    should_push = jax.random.uniform(k1, (T, B), jnp.float32)
    should_pop = jax.random.uniform(k2, (T, B), jnp.float32)
    should_null = jax.random.uniform(k3, (T, B), jnp.float32)
    values = jax.random.normal(k4, (T, B, VEC_SIZE), jnp.float32)

    # Fused T-step rollout (one pallas_call, state resident in VMEM).
    popped, new_stack, new_pointer = jax.tree.map(
        jax.block_until_ready,
        stack_forward_sequence(stack0, pointer0, zero_vec, SHARPEN,
                               should_push, should_pop, should_null, values))
    ref_popped, ref_stack, ref_pointer = _reference_sequence(
        stack0, pointer0, zero_vec, SHARPEN,
        should_push, should_pop, should_null, values)
    assert popped.shape == (T, B, VEC_SIZE)
    assert jnp.allclose(popped, ref_popped, atol=TOL, rtol=TOL)
    assert jnp.allclose(new_stack, ref_stack, atol=TOL, rtol=TOL)
    assert jnp.allclose(new_pointer, ref_pointer, atol=TOL, rtol=TOL)

    # Single-step path (== one Stack.forward call).
    p1, s1, q1 = jax.tree.map(
        jax.block_until_ready,
        stack_forward(stack0, pointer0, zero_vec, SHARPEN,
                      should_push[0], should_pop[0], should_null[0], values[0]))
    rp1, rs1, rq1 = _reference_step(stack0, pointer0, zero_vec, SHARPEN,
                                    should_push[0], should_pop[0], should_null[0],
                                    values[0])
    assert jnp.allclose(p1, rp1, atol=TOL, rtol=TOL)
    assert jnp.allclose(s1, rs1, atol=TOL, rtol=TOL)
    assert jnp.allclose(q1, rq1, atol=TOL, rtol=TOL)

    # Ragged rollout (T not a multiple of the time block) -> exercises the
    # tail mask of the time-blocked kernel.
    T2 = 11
    k5, k6, k7, k8 = jax.random.split(jax.random.PRNGKey(1), 4)
    sp2 = jax.random.uniform(k5, (T2, B), jnp.float32)
    so2 = jax.random.uniform(k6, (T2, B), jnp.float32)
    sn2 = jax.random.uniform(k7, (T2, B), jnp.float32)
    vals2 = jax.random.normal(k8, (T2, B, VEC_SIZE), jnp.float32)
    pop2, st2, pt2 = jax.tree.map(
        jax.block_until_ready,
        stack_forward_sequence(stack0, pointer0, zero_vec, SHARPEN,
                               sp2, so2, sn2, vals2, block_t=4))
    rpop2, rst2, rpt2 = _reference_sequence(
        stack0, pointer0, zero_vec, SHARPEN, sp2, so2, sn2, vals2)
    assert pop2.shape == (T2, B, VEC_SIZE)
    assert jnp.allclose(pop2, rpop2, atol=TOL, rtol=TOL)
    assert jnp.allclose(st2, rst2, atol=TOL, rtol=TOL)
    assert jnp.allclose(pt2, rpt2, atol=TOL, rtol=TOL)

    print("KERNEL_OK")
</pallas_src>

<mosaic_0001>
module attributes {stable_mosaic.version = 11 : i64} {
  func.func @kernel(%arg0: i32, %arg1: memref<1xf32, #tpu.memory_space<smem>>, %arg2: memref<48xf32, #tpu.memory_space<smem>>, %arg3: memref<2x8x128xf32, #tpu.memory_space<vmem>>, %arg4: memref<2x8x1xf32, #tpu.memory_space<vmem>>, %arg5: memref<2x1x128xf32, #tpu.memory_space<vmem>>, %arg6: memref<8x2x1x128xf32, #tpu.memory_space<vmem>>, %arg7: memref<8x2x128xf32, #tpu.memory_space<vmem>>, %arg8: memref<2x8x128xf32, #tpu.memory_space<vmem>>, %arg9: memref<2x8x1xf32, #tpu.memory_space<vmem>>) attributes {dimension_semantics = [#tpu.dimension_semantics<arbitrary>], iteration_bounds = array<i64: 1>, scalar_prefetch = 0 : i64, scratch_operands = 0 : i64, tpu.core_type = #tpu.core_type<tc>, window_params = [{transform_indices = @transform_0, window_bounds = array<i64: 1>}, {transform_indices = @transform_1, window_bounds = array<i64: 48>}, {pipeline_mode = #tpu.pipeline_mode<synchronous>, transform_indices = @transform_2, window_bounds = array<i64: 2, 8, 128>}, {pipeline_mode = #tpu.pipeline_mode<synchronous>, transform_indices = @transform_3, window_bounds = array<i64: 2, 8, 1>}, {pipeline_mode = #tpu.pipeline_mode<synchronous>, transform_indices = @transform_4, window_bounds = array<i64: 2, 1, 128>}, {transform_indices = @transform_5, window_bounds = array<i64: 8, 2, 1, 128>}, {transform_indices = @transform_6, window_bounds = array<i64: 8, 2, 128>}, {pipeline_mode = #tpu.pipeline_mode<synchronous>, transform_indices = @transform_7, window_bounds = array<i64: 2, 8, 128>}, {pipeline_mode = #tpu.pipeline_mode<synchronous>, transform_indices = @transform_8, window_bounds = array<i64: 2, 8, 1>}]} {
    %c0_i32 = arith.constant 0 : i32
    %0 = arith.cmpi eq, %arg0, %c0_i32 : i32
    %1 = arith.extui %0 : i1 to i32
    %c0_i32_0 = arith.constant 0 : i32
    %2 = arith.cmpi ne, %1, %c0_i32_0 : i32
    scf.if %2 {
      %c0_274 = arith.constant 0 : index
      %c0_275 = arith.constant 0 : index
      %c0_276 = arith.constant 0 : index
      %958 = vector.load %arg3[%c0_274, %c0_275, %c0_276] : memref<2x8x128xf32, #tpu.memory_space<vmem>>, vector<2x8x128xf32>
      %c0_277 = arith.constant 0 : index
      %c0_278 = arith.constant 0 : index
      %c0_279 = arith.constant 0 : index
      %959 = vector.load %arg8[%c0_277, %c0_278, %c0_279] : memref<2x8x128xf32, #tpu.memory_space<vmem>>, vector<2x8x128xf32>
      tpu.vector_store %arg8[%c0_277, %c0_278, %c0_279], %958 {strides = array<i32>} : memref<2x8x128xf32, #tpu.memory_space<vmem>>, vector<2x8x128xf32>,
      %c0_280 = arith.constant 0 : index
      %c0_281 = arith.constant 0 : index
      %c0_282 = arith.constant 0 : index
      %960 = vector.load %arg4[%c0_280, %c0_281, %c0_282] : memref<2x8x1xf32, #tpu.memory_space<vmem>>, vector<2x8x1xf32>
      %c0_283 = arith.constant 0 : index
      %c0_284 = arith.constant 0 : index
      %c0_285 = arith.constant 0 : index
      %961 = vector.load %arg9[%c0_283, %c0_284, %c0_285] : memref<2x8x1xf32, #tpu.memory_space<vmem>>, vector<2x8x1xf32>
      tpu.vector_store %arg9[%c0_283, %c0_284, %c0_285], %960 {strides = array<i32>} : memref<2x8x1xf32, #tpu.memory_space<vmem>>, vector<2x8x1xf32>,
    } else {
    }
    %c0 = arith.constant 0 : index
    %3 = memref.load %arg1[%c0] : memref<1xf32, #tpu.memory_space<smem>>
    %c0_1 = arith.constant 0 : index
    %c0_2 = arith.constant 0 : index
    %c0_3 = arith.constant 0 : index
    %4 = vector.load %arg5[%c0_1, %c0_2, %c0_3] : memref<2x1x128xf32, #tpu.memory_space<vmem>>, vector<2x1x128xf32>
    %5 = tpu.iota {dimensions = array<i32: 1>} : vector<2x8x1xi32>
    %c0_i32_4 = arith.constant 0 : i32
    %6 = vector.broadcast %c0_i32_4 : i32 to vector<2x8x1xi32>
    %7 = arith.cmpi eq, %5, %6 : vector<2x8x1xi32>
    %c7_i32 = arith.constant 7 : i32
    %8 = vector.broadcast %c7_i32 : i32 to vector<2x8x1xi32>
    %9 = arith.cmpi eq, %5, %8 : vector<2x8x1xi32>
    %c0_5 = arith.constant 0 : index
    %c0_6 = arith.constant 0 : index
    %c0_7 = arith.constant 0 : index
    %10 = vector.load %arg8[%c0_5, %c0_6, %c0_7] : memref<2x8x128xf32, #tpu.memory_space<vmem>>, vector<2x8x128xf32>
    %c0_8 = arith.constant 0 : index
    %c0_9 = arith.constant 0 : index
    %c0_10 = arith.constant 0 : index
    %11 = vector.load %arg9[%c0_8, %c0_9, %c0_10] : memref<2x8x1xf32, #tpu.memory_space<vmem>>, vector<2x8x1xf32>
    %c8_i32 = arith.constant 8 : i32
    %12 = arith.muli %arg0, %c8_i32 : i32
    %c0_i32_11 = arith.constant 0 : i32
    %13 = arith.addi %12, %c0_i32_11 : i32
    %c3_i32 = arith.constant 3 : i32
    %14 = arith.muli %13, %c3_i32 : i32
    %c0_i32_12 = arith.constant 0 : i32
    %15 = arith.addi %14, %c0_i32_12 : i32
    %c2_i32 = arith.constant 2 : i32
    %16 = arith.muli %15, %c2_i32 : i32
    %c0_i32_13 = arith.constant 0 : i32
    %17 = arith.addi %16, %c0_i32_13 : i32
    %18 = arith.index_cast %17 : i32 to index
    %19 = memref.load %arg2[%18] : memref<48xf32, #tpu.memory_space<smem>>
    %20 = vector.broadcast %19 : f32 to vector<1x1x1xf32>
    %c1_i32 = arith.constant 1 : i32
    %21 = arith.addi %16, %c1_i32 : i32
    %22 = arith.index_cast %21 : i32 to index
    %23 = memref.load %arg2[%22] : memref<48xf32, #tpu.memory_space<smem>>
    %24 = vector.broadcast %23 : f32 to vector<1x1x1xf32>
    %25 = tpu.concatenate %20, %24 in 0 : vector<1x1x1xf32>, vector<1x1x1xf32> -> vector<2x1x1xf32>
    %c3_i32_14 = arith.constant 3 : i32
    %26 = arith.muli %13, %c3_i32_14 : i32
    %c1_i32_15 = arith.constant 1 : i32
    %27 = arith.addi %26, %c1_i32_15 : i32
    %c2_i32_16 = arith.constant 2 : i32
    %28 = arith.muli %27, %c2_i32_16 : i32
    %c0_i32_17 = arith.constant 0 : i32
    %29 = arith.addi %28, %c0_i32_17 : i32
    %30 = arith.index_cast %29 : i32 to index
    %31 = memref.load %arg2[%30] : memref<48xf32, #tpu.memory_space<smem>>
    %32 = vector.broadcast %31 : f32 to vector<1x1x1xf32>
    %c1_i32_18 = arith.constant 1 : i32
    %33 = arith.addi %28, %c1_i32_18 : i32
    %34 = arith.index_cast %33 : i32 to index
    %35 = memref.load %arg2[%34] : memref<48xf32, #tpu.memory_space<smem>>
    %36 = vector.broadcast %35 : f32 to vector<1x1x1xf32>
    %37 = tpu.concatenate %32, %36 in 0 : vector<1x1x1xf32>, vector<1x1x1xf32> -> vector<2x1x1xf32>
    %c3_i32_19 = arith.constant 3 : i32
    %38 = arith.muli %13, %c3_i32_19 : i32
    %c2_i32_20 = arith.constant 2 : i32
    %39 = arith.addi %38, %c2_i32_20 : i32
    %c2_i32_21 = arith.constant 2 : i32
    %40 = arith.muli %39, %c2_i32_21 : i32
    %c0_i32_22 = arith.constant 0 : i32
    %41 = arith.addi %40, %c0_i32_22 : i32
    %42 = arith.index_cast %41 : i32 to index
    %43 = memref.load %arg2[%42] : memref<48xf32, #tpu.memory_space<smem>>
    %44 = vector.broadcast %43 : f32 to vector<1x1x1xf32>
    %c1_i32_23 = arith.constant 1 : i32
    %45 = arith.addi %40, %c1_i32_23 : i32
    %46 = arith.index_cast %45 : i32 to index
    %47 = memref.load %arg2[%46] : memref<48xf32, #tpu.memory_space<smem>>
    %48 = vector.broadcast %47 : f32 to vector<1x1x1xf32>
    %49 = tpu.concatenate %44, %48 in 0 : vector<1x1x1xf32>, vector<1x1x1xf32> -> vector<2x1x1xf32>
    %c3_i32_24 = arith.constant 3 : i32
    %50 = arith.muli %13, %c3_i32_24 : i32
    %c1_i32_25 = arith.constant 1 : i32
    %51 = arith.addi %50, %c1_i32_25 : i32
    %c2_i32_26 = arith.constant 2 : i32
    %52 = arith.muli %51, %c2_i32_26 : i32
    %c0_i32_27 = arith.constant 0 : i32
    %53 = arith.addi %52, %c0_i32_27 : i32
    %54 = arith.index_cast %53 : i32 to index
    %55 = memref.load %arg2[%54] : memref<48xf32, #tpu.memory_space<smem>>
    %56 = vector.broadcast %55 : f32 to vector<1x1xf32>
    %c1_i32_28 = arith.constant 1 : i32
    %57 = arith.addi %52, %c1_i32_28 : i32
    %58 = arith.index_cast %57 : i32 to index
    %59 = memref.load %arg2[%58] : memref<48xf32, #tpu.memory_space<smem>>
    %60 = vector.broadcast %59 : f32 to vector<1x1xf32>
    %61 = tpu.concatenate %56, %60 in 0 : vector<1x1xf32>, vector<1x1xf32> -> vector<2x1xf32>
    %c0_29 = arith.constant 0 : index
    %c0_30 = arith.constant 0 : index
    %c0_31 = arith.constant 0 : index
    %c0_32 = arith.constant 0 : index
    %62 = vector.load %arg6[%c0_29, %c0_30, %c0_31, %c0_32] : memref<8x2x1x128xf32, #tpu.memory_space<vmem>>, vector<1x2x1x128xf32>
    %63 = vector.shape_cast %62 : vector<1x2x1x128xf32> to vector<2x1x128xf32>
    %64 = vector.extract_strided_slice %11 {offsets = [0, 7, 0], sizes = [2, 1, 1], strides = [1, 1, 1]} : vector<2x8x1xf32> to vector<2x1x1xf32>
    %65 = vector.extract_strided_slice %11 {offsets = [0, 0, 0], sizes = [2, 7, 1], strides = [1, 1, 1]} : vector<2x8x1xf32> to vector<2x7x1xf32>
    %66 = tpu.concatenate %64, %65 in 1 : vector<2x1x1xf32>, vector<2x7x1xf32> -> vector<2x8x1xf32>
    %67 = vector.extract_strided_slice %66 {offsets = [1, 0, 0], sizes = [1, 8, 1], strides = [1, 1, 1]} : vector<2x8x1xf32> to vector<1x8x1xf32>
    %68 = vector.extract_strided_slice %66 {offsets = [0, 0, 0], sizes = [1, 8, 1], strides = [1, 1, 1]} : vector<2x8x1xf32> to vector<1x8x1xf32>
    %69 = tpu.concatenate %67, %68 in 0 : vector<1x8x1xf32>, vector<1x8x1xf32> -> vector<2x8x1xf32>
    %70 = arith.select %7, %69, %66 : vector<2x8x1xi1>, vector<2x8x1xf32>
    %71 = vector.extract_strided_slice %11 {offsets = [0, 1, 0], sizes = [2, 7, 1], strides = [1, 1, 1]} : vector<2x8x1xf32> to vector<2x7x1xf32>
    %72 = vector.extract_strided_slice %11 {offsets = [0, 0, 0], sizes = [2, 1, 1], strides = [1, 1, 1]} : vector<2x8x1xf32> to vector<2x1x1xf32>
    %73 = tpu.concatenate %71, %72 in 1 : vector<2x7x1xf32>, vector<2x1x1xf32> -> vector<2x8x1xf32>
    %74 = vector.extract_strided_slice %73 {offsets = [1, 0, 0], sizes = [1, 8, 1], strides = [1, 1, 1]} : vector<2x8x1xf32> to vector<1x8x1xf32>
    %75 = vector.extract_strided_slice %73 {offsets = [0, 0, 0], sizes = [1, 8, 1], strides = [1, 1, 1]} : vector<2x8x1xf32> to vector<1x8x1xf32>
    %76 = tpu.concatenate %74, %75 in 0 : vector<1x8x1xf32>, vector<1x8x1xf32> -> vector<2x8x1xf32>
    %77 = arith.select %9, %76, %73 : vector<2x8x1xi1>, vector<2x8x1xf32>
    %78 = vector.broadcast %11 : vector<2x8x1xf32> to vector<2x8x128xf32>
    %79 = arith.mulf %10, %78 : vector<2x8x128xf32>
    %cst = arith.constant dense<0.000000e+00> : vector<2x128xf32>
    %80 = vector.multi_reduction <add>, %79, %cst [1] : vector<2x8x128xf32> to vector<2x128xf32>
    %81 = vector.broadcast %61 : vector<2x1xf32> to vector<2x128xf32>
    %82 = arith.mulf %80, %81 : vector<2x128xf32>
    %c0_33 = arith.constant 0 : index
    %c0_34 = arith.constant 0 : index
    %c0_35 = arith.constant 0 : index
    %83 = vector.load %arg7[%c0_33, %c0_34, %c0_35] : memref<8x2x128xf32, #tpu.memory_space<vmem>>, vector<1x2x128xf32>
    %84 = vector.shape_cast %83 : vector<1x2x128xf32> to vector<2x128xf32>
    %85 = vector.shape_cast %82 : vector<2x128xf32> to vector<1x2x128xf32>
    tpu.vector_store %arg7[%c0_33, %c0_34, %c0_35], %85 {strides = array<i32>} : memref<8x2x128xf32, #tpu.memory_space<vmem>>, vector<1x2x128xf32>,
    %cst_36 = arith.constant 1.000000e+00 : f32
    %86 = vector.broadcast %cst_36 : f32 to vector<2x8x1xf32>
    %87 = arith.subf %86, %70 : vector<2x8x1xf32>
    %88 = vector.broadcast %25 : vector<2x1x1xf32> to vector<2x8x1xf32>
    %89 = arith.mulf %88, %87 : vector<2x8x1xf32>
    %90 = vector.broadcast %49 : vector<2x1x1xf32> to vector<2x8x1xf32>
    %91 = arith.addf %90, %89 : vector<2x8x1xf32>
    %cst_37 = arith.constant 1.000000e+00 : f32
    %92 = vector.broadcast %cst_37 : f32 to vector<2x8x1xf32>
    %93 = arith.subf %92, %11 : vector<2x8x1xf32>
    %94 = vector.broadcast %37 : vector<2x1x1xf32> to vector<2x8x1xf32>
    %95 = arith.mulf %94, %93 : vector<2x8x1xf32>
    %96 = arith.addf %91, %95 : vector<2x8x1xf32>
    %97 = vector.broadcast %25 : vector<2x1x1xf32> to vector<2x8x1xf32>
    %98 = arith.mulf %97, %70 : vector<2x8x1xf32>
    %99 = vector.broadcast %37 : vector<2x1x1xf32> to vector<2x8x1xf32>
    %100 = arith.mulf %99, %11 : vector<2x8x1xf32>
    %101 = vector.broadcast %96 : vector<2x8x1xf32> to vector<2x8x128xf32>
    %102 = arith.mulf %10, %101 : vector<2x8x128xf32>
    %103 = vector.broadcast %63 : vector<2x1x128xf32> to vector<2x8x128xf32>
    %104 = vector.broadcast %98 : vector<2x8x1xf32> to vector<2x8x128xf32>
    %105 = arith.mulf %103, %104 : vector<2x8x128xf32>
    %106 = arith.addf %102, %105 : vector<2x8x128xf32>
    %107 = vector.broadcast %4 : vector<2x1x128xf32> to vector<2x8x128xf32>
    %108 = vector.broadcast %100 : vector<2x8x1xf32> to vector<2x8x128xf32>
    %109 = arith.mulf %107, %108 : vector<2x8x128xf32>
    %110 = arith.addf %106, %109 : vector<2x8x128xf32>
    %111 = vector.broadcast %49 : vector<2x1x1xf32> to vector<2x8x1xf32>
    %112 = arith.mulf %11, %111 : vector<2x8x1xf32>
    %113 = vector.broadcast %25 : vector<2x1x1xf32> to vector<2x8x1xf32>
    %114 = arith.mulf %70, %113 : vector<2x8x1xf32>
    %115 = arith.addf %112, %114 : vector<2x8x1xf32>
    %116 = vector.broadcast %37 : vector<2x1x1xf32> to vector<2x8x1xf32>
    %117 = arith.mulf %77, %116 : vector<2x8x1xf32>
    %118 = arith.addf %115, %117 : vector<2x8x1xf32>
    %119 = vector.broadcast %3 : f32 to vector<2x8x1xf32>
    %120 = arith.mulf %118, %119 : vector<2x8x1xf32>
    %cst_38 = arith.constant dense<0xFF800000> : vector<2x1xf32>
    %121 = vector.multi_reduction <maximumf>, %120, %cst_38 [1] : vector<2x8x1xf32> to vector<2x1xf32>
    %122 = vector.shape_cast %121 : vector<2x1xf32> to vector<2x1x1xf32>
    %123 = vector.broadcast %122 : vector<2x1x1xf32> to vector<2x8x1xf32>
    %124 = arith.subf %120, %123 : vector<2x8x1xf32>
    %125 = math.exp %124 : vector<2x8x1xf32>
    %cst_39 = arith.constant dense<0.000000e+00> : vector<2x1xf32>
    %126 = vector.multi_reduction <add>, %125, %cst_39 [1] : vector<2x8x1xf32> to vector<2x1xf32>
    %127 = vector.shape_cast %126 : vector<2x1xf32> to vector<2x1x1xf32>
    %128 = vector.broadcast %127 : vector<2x1x1xf32> to vector<2x8x1xf32>
    %129 = arith.divf %125, %128 : vector<2x8x1xf32>
    %c8_i32_40 = arith.constant 8 : i32
    %130 = arith.muli %arg0, %c8_i32_40 : i32
    %c1_i32_41 = arith.constant 1 : i32
    %131 = arith.addi %130, %c1_i32_41 : i32
    %c3_i32_42 = arith.constant 3 : i32
    %132 = arith.muli %131, %c3_i32_42 : i32
    %c0_i32_43 = arith.constant 0 : i32
    %133 = arith.addi %132, %c0_i32_43 : i32
    %c2_i32_44 = arith.constant 2 : i32
    %134 = arith.muli %133, %c2_i32_44 : i32
    %c0_i32_45 = arith.constant 0 : i32
    %135 = arith.addi %134, %c0_i32_45 : i32
    %136 = arith.index_cast %135 : i32 to index
    %137 = memref.load %arg2[%136] : memref<48xf32, #tpu.memory_space<smem>>
    %138 = vector.broadcast %137 : f32 to vector<1x1x1xf32>
    %c1_i32_46 = arith.constant 1 : i32
    %139 = arith.addi %134, %c1_i32_46 : i32
    %140 = arith.index_cast %139 : i32 to index
    %141 = memref.load %arg2[%140] : memref<48xf32, #tpu.memory_space<smem>>
    %142 = vector.broadcast %141 : f32 to vector<1x1x1xf32>
    %143 = tpu.concatenate %138, %142 in 0 : vector<1x1x1xf32>, vector<1x1x1xf32> -> vector<2x1x1xf32>
    %c3_i32_47 = arith.constant 3 : i32
    %144 = arith.muli %131, %c3_i32_47 : i32
    %c1_i32_48 = arith.constant 1 : i32
    %145 = arith.addi %144, %c1_i32_48 : i32
    %c2_i32_49 = arith.constant 2 : i32
    %146 = arith.muli %145, %c2_i32_49 : i32
    %c0_i32_50 = arith.constant 0 : i32
    %147 = arith.addi %146, %c0_i32_50 : i32
    %148 = arith.index_cast %147 : i32 to index
    %149 = memref.load %arg2[%148] : memref<48xf32, #tpu.memory_space<smem>>
    %150 = vector.broadcast %149 : f32 to vector<1x1x1xf32>
    %c1_i32_51 = arith.constant 1 : i32
    %151 = arith.addi %146, %c1_i32_51 : i32
    %152 = arith.index_cast %151 : i32 to index
    %153 = memref.load %arg2[%152] : memref<48xf32, #tpu.memory_space<smem>>
    %154 = vector.broadcast %153 : f32 to vector<1x1x1xf32>
    %155 = tpu.concatenate %150, %154 in 0 : vector<1x1x1xf32>, vector<1x1x1xf32> -> vector<2x1x1xf32>
    %c3_i32_52 = arith.constant 3 : i32
    %156 = arith.muli %131, %c3_i32_52 : i32
    %c2_i32_53 = arith.constant 2 : i32
    %157 = arith.addi %156, %c2_i32_53 : i32
    %c2_i32_54 = arith.constant 2 : i32
    %158 = arith.muli %157, %c2_i32_54 : i32
    %c0_i32_55 = arith.constant 0 : i32
    %159 = arith.addi %158, %c0_i32_55 : i32
    %160 = arith.index_cast %159 : i32 to index
    %161 = memref.load %arg2[%160] : memref<48xf32, #tpu.memory_space<smem>>
    %162 = vector.broadcast %161 : f32 to vector<1x1x1xf32>
    %c1_i32_56 = arith.constant 1 : i32
    %163 = arith.addi %158, %c1_i32_56 : i32
    %164 = arith.index_cast %163 : i32 to index
    %165 = memref.load %arg2[%164] : memref<48xf32, #tpu.memory_space<smem>>
    %166 = vector.broadcast %165 : f32 to vector<1x1x1xf32>
    %167 = tpu.concatenate %162, %166 in 0 : vector<1x1x1xf32>, vector<1x1x1xf32> -> vector<2x1x1xf32>
    %c3_i32_57 = arith.constant 3 : i32
    %168 = arith.muli %131, %c3_i32_57 : i32
    %c1_i32_58 = arith.constant 1 : i32
    %169 = arith.addi %168, %c1_i32_58 : i32
    %c2_i32_59 = arith.constant 2 : i32
    %170 = arith.muli %169, %c2_i32_59 : i32
    %c0_i32_60 = arith.constant 0 : i32
    %171 = arith.addi %170, %c0_i32_60 : i32
    %172 = arith.index_cast %171 : i32 to index
    %173 = memref.load %arg2[%172] : memref<48xf32, #tpu.memory_space<smem>>
    %174 = vector.broadcast %173 : f32 to vector<1x1xf32>
    %c1_i32_61 = arith.constant 1 : i32
    %175 = arith.addi %170, %c1_i32_61 : i32
    %176 = arith.index_cast %175 : i32 to index
    %177 = memref.load %arg2[%176] : memref<48xf32, #tpu.memory_space<smem>>
    %178 = vector.broadcast %177 : f32 to vector<1x1xf32>
    %179 = tpu.concatenate %174, %178 in 0 : vector<1x1xf32>, vector<1x1xf32> -> vector<2x1xf32>
    %c1 = arith.constant 1 : index
    %c0_62 = arith.constant 0 : index
    %c0_63 = arith.constant 0 : index
    %c0_64 = arith.constant 0 : index
    %180 = vector.load %arg6[%c1, %c0_62, %c0_63, %c0_64] : memref<8x2x1x128xf32, #tpu.memory_space<vmem>>, vector<1x2x1x128xf32>
    %181 = vector.shape_cast %180 : vector<1x2x1x128xf32> to vector<2x1x128xf32>
    %182 = vector.extract_strided_slice %129 {offsets = [0, 7, 0], sizes = [2, 1, 1], strides = [1, 1, 1]} : vector<2x8x1xf32> to vector<2x1x1xf32>
    %183 = vector.extract_strided_slice %129 {offsets = [0, 0, 0], sizes = [2, 7, 1], strides = [1, 1, 1]} : vector<2x8x1xf32> to vector<2x7x1xf32>
    %184 = tpu.concatenate %182, %183 in 1 : vector<2x1x1xf32>, vector<2x7x1xf32> -> vector<2x8x1xf32>
    %185 = vector.extract_strided_slice %184 {offsets = [1, 0, 0], sizes = [1, 8, 1], strides = [1, 1, 1]} : vector<2x8x1xf32> to vector<1x8x1xf32>
    %186 = vector.extract_strided_slice %184 {offsets = [0, 0, 0], sizes = [1, 8, 1], strides = [1, 1, 1]} : vector<2x8x1xf32> to vector<1x8x1xf32>
    %187 = tpu.concatenate %185, %186 in 0 : vector<1x8x1xf32>, vector<1x8x1xf32> -> vector<2x8x1xf32>
    %188 = arith.select %7, %187, %184 : vector<2x8x1xi1>, vector<2x8x1xf32>
    %189 = vector.extract_strided_slice %129 {offsets = [0, 1, 0], sizes = [2, 7, 1], strides = [1, 1, 1]} : vector<2x8x1xf32> to vector<2x7x1xf32>
    %190 = vector.extract_strided_slice %129 {offsets = [0, 0, 0], sizes = [2, 1, 1], strides = [1, 1, 1]} : vector<2x8x1xf32> to vector<2x1x1xf32>
    %191 = tpu.concatenate %189, %190 in 1 : vector<2x7x1xf32>, vector<2x1x1xf32> -> vector<2x8x1xf32>
    %192 = vector.extract_strided_slice %191 {offsets = [1, 0, 0], sizes = [1, 8, 1], strides = [1, 1, 1]} : vector<2x8x1xf32> to vector<1x8x1xf32>
    %193 = vector.extract_strided_slice %191 {offsets = [0, 0, 0], sizes = [1, 8, 1], strides = [1, 1, 1]} : vector<2x8x1xf32> to vector<1x8x1xf32>
    %194 = tpu.concatenate %192, %193 in 0 : vector<1x8x1xf32>, vector<1x8x1xf32> -> vector<2x8x1xf32>
    %195 = arith.select %9, %194, %191 : vector<2x8x1xi1>, vector<2x8x1xf32>
    %196 = vector.broadcast %129 : vector<2x8x1xf32> to vector<2x8x128xf32>
    %197 = arith.mulf %110, %196 : vector<2x8x128xf32>
    %cst_65 = arith.constant dense<0.000000e+00> : vector<2x128xf32>
    %198 = vector.multi_reduction <add>, %197, %cst_65 [1] : vector<2x8x128xf32> to vector<2x128xf32>
    %199 = vector.broadcast %179 : vector<2x1xf32> to vector<2x128xf32>
    %200 = arith.mulf %198, %199 : vector<2x128xf32>
    %c1_66 = arith.constant 1 : index
    %c0_67 = arith.constant 0 : index
    %c0_68 = arith.constant 0 : index
    %201 = vector.load %arg7[%c1_66, %c0_67, %c0_68] : memref<8x2x128xf32, #tpu.memory_space<vmem>>, vector<1x2x128xf32>
    %202 = vector.shape_cast %201 : vector<1x2x128xf32> to vector<2x128xf32>
    %203 = vector.shape_cast %200 : vector<2x128xf32> to vector<1x2x128xf32>
    tpu.vector_store %arg7[%c1_66, %c0_67, %c0_68], %203 {strides = array<i32>} : memref<8x2x128xf32, #tpu.memory_space<vmem>>, vector<1x2x128xf32>,
    %cst_69 = arith.constant 1.000000e+00 : f32
    %204 = vector.broadcast %cst_69 : f32 to vector<2x8x1xf32>
    %205 = arith.subf %204, %188 : vector<2x8x1xf32>
    %206 = vector.broadcast %143 : vector<2x1x1xf32> to vector<2x8x1xf32>
    %207 = arith.mulf %206, %205 : vector<2x8x1xf32>
    %208 = vector.broadcast %167 : vector<2x1x1xf32> to vector<2x8x1xf32>
    %209 = arith.addf %208, %207 : vector<2x8x1xf32>
    %cst_70 = arith.constant 1.000000e+00 : f32
    %210 = vector.broadcast %cst_70 : f32 to vector<2x8x1xf32>
    %211 = arith.subf %210, %129 : vector<2x8x1xf32>
    %212 = vector.broadcast %155 : vector<2x1x1xf32> to vector<2x8x1xf32>
    %213 = arith.mulf %212, %211 : vector<2x8x1xf32>
    %214 = arith.addf %209, %213 : vector<2x8x1xf32>
    %215 = vector.broadcast %143 : vector<2x1x1xf32> to vector<2x8x1xf32>
    %216 = arith.mulf %215, %188 : vector<2x8x1xf32>
    %217 = vector.broadcast %155 : vector<2x1x1xf32> to vector<2x8x1xf32>
    %218 = arith.mulf %217, %129 : vector<2x8x1xf32>
    %219 = vector.broadcast %214 : vector<2x8x1xf32> to vector<2x8x128xf32>
    %220 = arith.mulf %110, %219 : vector<2x8x128xf32>
    %221 = vector.broadcast %181 : vector<2x1x128xf32> to vector<2x8x128xf32>
    %222 = vector.broadcast %216 : vector<2x8x1xf32> to vector<2x8x128xf32>
    %223 = arith.mulf %221, %222 : vector<2x8x128xf32>
    %224 = arith.addf %220, %223 : vector<2x8x128xf32>
    %225 = vector.broadcast %4 : vector<2x1x128xf32> to vector<2x8x128xf32>
    %226 = vector.broadcast %218 : vector<2x8x1xf32> to vector<2x8x128xf32>
    %227 = arith.mulf %225, %226 : vector<2x8x128xf32>
    %228 = arith.addf %224, %227 : vector<2x8x128xf32>
    %229 = vector.broadcast %167 : vector<2x1x1xf32> to vector<2x8x1xf32>
    %230 = arith.mulf %129, %229 : vector<2x8x1xf32>
    %231 = vector.broadcast %143 : vector<2x1x1xf32> to vector<2x8x1xf32>
    %232 = arith.mulf %188, %231 : vector<2x8x1xf32>
    %233 = arith.addf %230, %232 : vector<2x8x1xf32>
    %234 = vector.broadcast %155 : vector<2x1x1xf32> to vector<2x8x1xf32>
    %235 = arith.mulf %195, %234 : vector<2x8x1xf32>
    %236 = arith.addf %233, %235 : vector<2x8x1xf32>
    %237 = vector.broadcast %3 : f32 to vector<2x8x1xf32>
    %238 = arith.mulf %236, %237 : vector<2x8x1xf32>
    %cst_71 = arith.constant dense<0xFF800000> : vector<2x1xf32>
    %239 = vector.multi_reduction <maximumf>, %238, %cst_71 [1] : vector<2x8x1xf32> to vector<2x1xf32>
    %240 = vector.shape_cast %239 : vector<2x1xf32> to vector<2x1x1xf32>
    %241 = vector.broadcast %240 : vector<2x1x1xf32> to vector<2x8x1xf32>
    %242 = arith.subf %238, %241 : vector<2x8x1xf32>
    %243 = math.exp %242 : vector<2x8x1xf32>
    %cst_72 = arith.constant dense<0.000000e+00> : vector<2x1xf32>
    %244 = vector.multi_reduction <add>, %243, %cst_72 [1] : vector<2x8x1xf32> to vector<2x1xf32>
    %245 = vector.shape_cast %244 : vector<2x1xf32> to vector<2x1x1xf32>
    %246 = vector.broadcast %245 : vector<2x1x1xf32> to vector<2x8x1xf32>
    %247 = arith.divf %243, %246 : vector<2x8x1xf32>
    %c8_i32_73 = arith.constant 8 : i32
    %248 = arith.muli %arg0, %c8_i32_73 : i32
    %c2_i32_74 = arith.constant 2 : i32
    %249 = arith.addi %248, %c2_i32_74 : i32
    %c3_i32_75 = arith.constant 3 : i32
    %250 = arith.muli %249, %c3_i32_75 : i32
    %c0_i32_76 = arith.constant 0 : i32
    %251 = arith.addi %250, %c0_i32_76 : i32
    %c2_i32_77 = arith.constant 2 : i32
    %252 = arith.muli %251, %c2_i32_77 : i32
    %c0_i32_78 = arith.constant 0 : i32
    %253 = arith.addi %252, %c0_i32_78 : i32
    %254 = arith.index_cast %253 : i32 to index
    %255 = memref.load %arg2[%254] : memref<48xf32, #tpu.memory_space<smem>>
    %256 = vector.broadcast %255 : f32 to vector<1x1x1xf32>
    %c1_i32_79 = arith.constant 1 : i32
    %257 = arith.addi %252, %c1_i32_79 : i32
    %258 = arith.index_cast %257 : i32 to index
    %259 = memref.load %arg2[%258] : memref<48xf32, #tpu.memory_space<smem>>
    %260 = vector.broadcast %259 : f32 to vector<1x1x1xf32>
    %261 = tpu.concatenate %256, %260 in 0 : vector<1x1x1xf32>, vector<1x1x1xf32> -> vector<2x1x1xf32>
    %c3_i32_80 = arith.constant 3 : i32
    %262 = arith.muli %249, %c3_i32_80 : i32
    %c1_i32_81 = arith.constant 1 : i32
    %263 = arith.addi %262, %c1_i32_81 : i32
    %c2_i32_82 = arith.constant 2 : i32
    %264 = arith.muli %263, %c2_i32_82 : i32
    %c0_i32_83 = arith.constant 0 : i32
    %265 = arith.addi %264, %c0_i32_83 : i32
    %266 = arith.index_cast %265 : i32 to index
    %267 = memref.load %arg2[%266] : memref<48xf32, #tpu.memory_space<smem>>
    %268 = vector.broadcast %267 : f32 to vector<1x1x1xf32>
    %c1_i32_84 = arith.constant 1 : i32
    %269 = arith.addi %264, %c1_i32_84 : i32
    %270 = arith.index_cast %269 : i32 to index
    %271 = memref.load %arg2[%270] : memref<48xf32, #tpu.memory_space<smem>>
    %272 = vector.broadcast %271 : f32 to vector<1x1x1xf32>
    %273 = tpu.concatenate %268, %272 in 0 : vector<1x1x1xf32>, vector<1x1x1xf32> -> vector<2x1x1xf32>
    %c3_i32_85 = arith.constant 3 : i32
    %274 = arith.muli %249, %c3_i32_85 : i32
    %c2_i32_86 = arith.constant 2 : i32
    %275 = arith.addi %274, %c2_i32_86 : i32
    %c2_i32_87 = arith.constant 2 : i32
    %276 = arith.muli %275, %c2_i32_87 : i32
    %c0_i32_88 = arith.constant 0 : i32
    %277 = arith.addi %276, %c0_i32_88 : i32
    %278 = arith.index_cast %277 : i32 to index
    %279 = memref.load %arg2[%278] : memref<48xf32, #tpu.memory_space<smem>>
    %280 = vector.broadcast %279 : f32 to vector<1x1x1xf32>
    %c1_i32_89 = arith.constant 1 : i32
    %281 = arith.addi %276, %c1_i32_89 : i32
    %282 = arith.index_cast %281 : i32 to index
    %283 = memref.load %arg2[%282] : memref<48xf32, #tpu.memory_space<smem>>
    %284 = vector.broadcast %283 : f32 to vector<1x1x1xf32>
    %285 = tpu.concatenate %280, %284 in 0 : vector<1x1x1xf32>, vector<1x1x1xf32> -> vector<2x1x1xf32>
    %c3_i32_90 = arith.constant 3 : i32
    %286 = arith.muli %249, %c3_i32_90 : i32
    %c1_i32_91 = arith.constant 1 : i32
    %287 = arith.addi %286, %c1_i32_91 : i32
    %c2_i32_92 = arith.constant 2 : i32
    %288 = arith.muli %287, %c2_i32_92 : i32
    %c0_i32_93 = arith.constant 0 : i32
    %289 = arith.addi %288, %c0_i32_93 : i32
    %290 = arith.index_cast %289 : i32 to index
    %291 = memref.load %arg2[%290] : memref<48xf32, #tpu.memory_space<smem>>
    %292 = vector.broadcast %291 : f32 to vector<1x1xf32>
    %c1_i32_94 = arith.constant 1 : i32
    %293 = arith.addi %288, %c1_i32_94 : i32
    %294 = arith.index_cast %293 : i32 to index
    %295 = memref.load %arg2[%294] : memref<48xf32, #tpu.memory_space<smem>>
    %296 = vector.broadcast %295 : f32 to vector<1x1xf32>
    %297 = tpu.concatenate %292, %296 in 0 : vector<1x1xf32>, vector<1x1xf32> -> vector<2x1xf32>
    %c2 = arith.constant 2 : index
    %c0_95 = arith.constant 0 : index
    %c0_96 = arith.constant 0 : index
    %c0_97 = arith.constant 0 : index
    %298 = vector.load %arg6[%c2, %c0_95, %c0_96, %c0_97] : memref<8x2x1x128xf32, #tpu.memory_space<vmem>>, vector<1x2x1x128xf32>
    %299 = vector.shape_cast %298 : vector<1x2x1x128xf32> to vector<2x1x128xf32>
    %300 = vector.extract_strided_slice %247 {offsets = [0, 7, 0], sizes = [2, 1, 1], strides = [1, 1, 1]} : vector<2x8x1xf32> to vector<2x1x1xf32>
    %301 = vector.extract_strided_slice %247 {offsets = [0, 0, 0], sizes = [2, 7, 1], strides = [1, 1, 1]} : vector<2x8x1xf32> to vector<2x7x1xf32>
    %302 = tpu.concatenate %300, %301 in 1 : vector<2x1x1xf32>, vector<2x7x1xf32> -> vector<2x8x1xf32>
    %303 = vector.extract_strided_slice %302 {offsets = [1, 0, 0], sizes = [1, 8, 1], strides = [1, 1, 1]} : vector<2x8x1xf32> to vector<1x8x1xf32>
    %304 = vector.extract_strided_slice %302 {offsets = [0, 0, 0], sizes = [1, 8, 1], strides = [1, 1, 1]} : vector<2x8x1xf32> to vector<1x8x1xf32>
    %305 = tpu.concatenate %303, %304 in 0 : vector<1x8x1xf32>, vector<1x8x1xf32> -> vector<2x8x1xf32>
    %306 = arith.select %7, %305, %302 : vector<2x8x1xi1>, vector<2x8x1xf32>
    %307 = vector.extract_strided_slice %247 {offsets = [0, 1, 0], sizes = [2, 7, 1], strides = [1, 1, 1]} : vector<2x8x1xf32> to vector<2x7x1xf32>
    %308 = vector.extract_strided_slice %247 {offsets = [0, 0, 0], sizes = [2, 1, 1], strides = [1, 1, 1]} : vector<2x8x1xf32> to vector<2x1x1xf32>
    %309 = tpu.concatenate %307, %308 in 1 : vector<2x7x1xf32>, vector<2x1x1xf32> -> vector<2x8x1xf32>
    %310 = vector.extract_strided_slice %309 {offsets = [1, 0, 0], sizes = [1, 8, 1], strides = [1, 1, 1]} : vector<2x8x1xf32> to vector<1x8x1xf32>
    %311 = vector.extract_strided_slice %309 {offsets = [0, 0, 0], sizes = [1, 8, 1], strides = [1, 1, 1]} : vector<2x8x1xf32> to vector<1x8x1xf32>
    %312 = tpu.concatenate %310, %311 in 0 : vector<1x8x1xf32>, vector<1x8x1xf32> -> vector<2x8x1xf32>
    %313 = arith.select %9, %312, %309 : vector<2x8x1xi1>, vector<2x8x1xf32>
    %314 = vector.broadcast %247 : vector<2x8x1xf32> to vector<2x8x128xf32>
    %315 = arith.mulf %228, %314 : vector<2x8x128xf32>
    %cst_98 = arith.constant dense<0.000000e+00> : vector<2x128xf32>
    %316 = vector.multi_reduction <add>, %315, %cst_98 [1] : vector<2x8x128xf32> to vector<2x128xf32>
    %317 = vector.broadcast %297 : vector<2x1xf32> to vector<2x128xf32>
    %318 = arith.mulf %316, %317 : vector<2x128xf32>
    %c2_99 = arith.constant 2 : index
    %c0_100 = arith.constant 0 : index
    %c0_101 = arith.constant 0 : index
    %319 = vector.load %arg7[%c2_99, %c0_100, %c0_101] : memref<8x2x128xf32, #tpu.memory_space<vmem>>, vector<1x2x128xf32>
    %320 = vector.shape_cast %319 : vector<1x2x128xf32> to vector<2x128xf32>
    %321 = vector.shape_cast %318 : vector<2x128xf32> to vector<1x2x128xf32>
    tpu.vector_store %arg7[%c2_99, %c0_100, %c0_101], %321 {strides = array<i32>} : memref<8x2x128xf32, #tpu.memory_space<vmem>>, vector<1x2x128xf32>,
    %cst_102 = arith.constant 1.000000e+00 : f32
    %322 = vector.broadcast %cst_102 : f32 to vector<2x8x1xf32>
    %323 = arith.subf %322, %306 : vector<2x8x1xf32>
    %324 = vector.broadcast %261 : vector<2x1x1xf32> to vector<2x8x1xf32>
    %325 = arith.mulf %324, %323 : vector<2x8x1xf32>
    %326 = vector.broadcast %285 : vector<2x1x1xf32> to vector<2x8x1xf32>
    %327 = arith.addf %326, %325 : vector<2x8x1xf32>
    %cst_103 = arith.constant 1.000000e+00 : f32
    %328 = vector.broadcast %cst_103 : f32 to vector<2x8x1xf32>
    %329 = arith.subf %328, %247 : vector<2x8x1xf32>
    %330 = vector.broadcast %273 : vector<2x1x1xf32> to vector<2x8x1xf32>
    %331 = arith.mulf %330, %329 : vector<2x8x1xf32>
    %332 = arith.addf %327, %331 : vector<2x8x1xf32>
    %333 = vector.broadcast %261 : vector<2x1x1xf32> to vector<2x8x1xf32>
    %334 = arith.mulf %333, %306 : vector<2x8x1xf32>
    %335 = vector.broadcast %273 : vector<2x1x1xf32> to vector<2x8x1xf32>
    %336 = arith.mulf %335, %247 : vector<2x8x1xf32>
    %337 = vector.broadcast %332 : vector<2x8x1xf32> to vector<2x8x128xf32>
    %338 = arith.mulf %228, %337 : vector<2x8x128xf32>
    %339 = vector.broadcast %299 : vector<2x1x128xf32> to vector<2x8x128xf32>
    %340 = vector.broadcast %334 : vector<2x8x1xf32> to vector<2x8x128xf32>
    %341 = arith.mulf %339, %340 : vector<2x8x128xf32>
    %342 = arith.addf %338, %341 : vector<2x8x128xf32>
    %343 = vector.broadcast %4 : vector<2x1x128xf32> to vector<2x8x128xf32>
    %344 = vector.broadcast %336 : vector<2x8x1xf32> to vector<2x8x128xf32>
    %345 = arith.mulf %343, %344 : vector<2x8x128xf32>
    %346 = arith.addf %342, %345 : vector<2x8x128xf32>
    %347 = vector.broadcast %285 : vector<2x1x1xf32> to vector<2x8x1xf32>
    %348 = arith.mulf %247, %347 : vector<2x8x1xf32>
    %349 = vector.broadcast %261 : vector<2x1x1xf32> to vector<2x8x1xf32>
    %350 = arith.mulf %306, %349 : vector<2x8x1xf32>
    %351 = arith.addf %348, %350 : vector<2x8x1xf32>
    %352 = vector.broadcast %273 : vector<2x1x1xf32> to vector<2x8x1xf32>
    %353 = arith.mulf %313, %352 : vector<2x8x1xf32>
    %354 = arith.addf %351, %353 : vector<2x8x1xf32>
    %355 = vector.broadcast %3 : f32 to vector<2x8x1xf32>
    %356 = arith.mulf %354, %355 : vector<2x8x1xf32>
    %cst_104 = arith.constant dense<0xFF800000> : vector<2x1xf32>
    %357 = vector.multi_reduction <maximumf>, %356, %cst_104 [1] : vector<2x8x1xf32> to vector<2x1xf32>
    %358 = vector.shape_cast %357 : vector<2x1xf32> to vector<2x1x1xf32>
    %359 = vector.broadcast %358 : vector<2x1x1xf32> to vector<2x8x1xf32>
    %360 = arith.subf %356, %359 : vector<2x8x1xf32>
    %361 = math.exp %360 : vector<2x8x1xf32>
    %cst_105 = arith.constant dense<0.000000e+00> : vector<2x1xf32>
    %362 = vector.multi_reduction <add>, %361, %cst_105 [1] : vector<2x8x1xf32> to vector<2x1xf32>
    %363 = vector.shape_cast %362 : vector<2x1xf32> to vector<2x1x1xf32>
    %364 = vector.broadcast %363 : vector<2x1x1xf32> to vector<2x8x1xf32>
    %365 = arith.divf %361, %364 : vector<2x8x1xf32>
    %c8_i32_106 = arith.constant 8 : i32
    %366 = arith.muli %arg0, %c8_i32_106 : i32
    %c3_i32_107 = arith.constant 3 : i32
    %367 = arith.addi %366, %c3_i32_107 : i32
    %c3_i32_108 = arith.constant 3 : i32
    %368 = arith.muli %367, %c3_i32_108 : i32
    %c0_i32_109 = arith.constant 0 : i32
    %369 = arith.addi %368, %c0_i32_109 : i32
    %c2_i32_110 = arith.constant 2 : i32
    %370 = arith.muli %369, %c2_i32_110 : i32
    %c0_i32_111 = arith.constant 0 : i32
    %371 = arith.addi %370, %c0_i32_111 : i32
    %372 = arith.index_cast %371 : i32 to index
    %373 = memref.load %arg2[%372] : memref<48xf32, #tpu.memory_space<smem>>
    %374 = vector.broadcast %373 : f32 to vector<1x1x1xf32>
    %c1_i32_112 = arith.constant 1 : i32
    %375 = arith.addi %370, %c1_i32_112 : i32
    %376 = arith.index_cast %375 : i32 to index
    %377 = memref.load %arg2[%376] : memref<48xf32, #tpu.memory_space<smem>>
    %378 = vector.broadcast %377 : f32 to vector<1x1x1xf32>
    %379 = tpu.concatenate %374, %378 in 0 : vector<1x1x1xf32>, vector<1x1x1xf32> -> vector<2x1x1xf32>
    %c3_i32_113 = arith.constant 3 : i32
    %380 = arith.muli %367, %c3_i32_113 : i32
    %c1_i32_114 = arith.constant 1 : i32
    %381 = arith.addi %380, %c1_i32_114 : i32
    %c2_i32_115 = arith.constant 2 : i32
    %382 = arith.muli %381, %c2_i32_115 : i32
    %c0_i32_116 = arith.constant 0 : i32
    %383 = arith.addi %382, %c0_i32_116 : i32
    %384 = arith.index_cast %383 : i32 to index
    %385 = memref.load %arg2[%384] : memref<48xf32, #tpu.memory_space<smem>>
    %386 = vector.broadcast %385 : f32 to vector<1x1x1xf32>
    %c1_i32_117 = arith.constant 1 : i32
    %387 = arith.addi %382, %c1_i32_117 : i32
    %388 = arith.index_cast %387 : i32 to index
    %389 = memref.load %arg2[%388] : memref<48xf32, #tpu.memory_space<smem>>
    %390 = vector.broadcast %389 : f32 to vector<1x1x1xf32>
    %391 = tpu.concatenate %386, %390 in 0 : vector<1x1x1xf32>, vector<1x1x1xf32> -> vector<2x1x1xf32>
    %c3_i32_118 = arith.constant 3 : i32
    %392 = arith.muli %367, %c3_i32_118 : i32
    %c2_i32_119 = arith.constant 2 : i32
    %393 = arith.addi %392, %c2_i32_119 : i32
    %c2_i32_120 = arith.constant 2 : i32
    %394 = arith.muli %393, %c2_i32_120 : i32
    %c0_i32_121 = arith.constant 0 : i32
    %395 = arith.addi %394, %c0_i32_121 : i32
    %396 = arith.index_cast %395 : i32 to index
    %397 = memref.load %arg2[%396] : memref<48xf32, #tpu.memory_space<smem>>
    %398 = vector.broadcast %397 : f32 to vector<1x1x1xf32>
    %c1_i32_122 = arith.constant 1 : i32
    %399 = arith.addi %394, %c1_i32_122 : i32
    %400 = arith.index_cast %399 : i32 to index
    %401 = memref.load %arg2[%400] : memref<48xf32, #tpu.memory_space<smem>>
    %402 = vector.broadcast %401 : f32 to vector<1x1x1xf32>
    %403 = tpu.concatenate %398, %402 in 0 : vector<1x1x1xf32>, vector<1x1x1xf32> -> vector<2x1x1xf32>
    %c3_i32_123 = arith.constant 3 : i32
    %404 = arith.muli %367, %c3_i32_123 : i32
    %c1_i32_124 = arith.constant 1 : i32
    %405 = arith.addi %404, %c1_i32_124 : i32
    %c2_i32_125 = arith.constant 2 : i32
    %406 = arith.muli %405, %c2_i32_125 : i32
    %c0_i32_126 = arith.constant 0 : i32
    %407 = arith.addi %406, %c0_i32_126 : i32
    %408 = arith.index_cast %407 : i32 to index
    %409 = memref.load %arg2[%408] : memref<48xf32, #tpu.memory_space<smem>>
    %410 = vector.broadcast %409 : f32 to vector<1x1xf32>
    %c1_i32_127 = arith.constant 1 : i32
    %411 = arith.addi %406, %c1_i32_127 : i32
    %412 = arith.index_cast %411 : i32 to index
    %413 = memref.load %arg2[%412] : memref<48xf32, #tpu.memory_space<smem>>
    %414 = vector.broadcast %413 : f32 to vector<1x1xf32>
    %415 = tpu.concatenate %410, %414 in 0 : vector<1x1xf32>, vector<1x1xf32> -> vector<2x1xf32>
    %c3 = arith.constant 3 : index
    %c0_128 = arith.constant 0 : index
    %c0_129 = arith.constant 0 : index
    %c0_130 = arith.constant 0 : index
    %416 = vector.load %arg6[%c3, %c0_128, %c0_129, %c0_130] : memref<8x2x1x128xf32, #tpu.memory_space<vmem>>, vector<1x2x1x128xf32>
    %417 = vector.shape_cast %416 : vector<1x2x1x128xf32> to vector<2x1x128xf32>
    %418 = vector.extract_strided_slice %365 {offsets = [0, 7, 0], sizes = [2, 1, 1], strides = [1, 1, 1]} : vector<2x8x1xf32> to vector<2x1x1xf32>
    %419 = vector.extract_strided_slice %365 {offsets = [0, 0, 0], sizes = [2, 7, 1], strides = [1, 1, 1]} : vector<2x8x1xf32> to vector<2x7x1xf32>
    %420 = tpu.concatenate %418, %419 in 1 : vector<2x1x1xf32>, vector<2x7x1xf32> -> vector<2x8x1xf32>
    %421 = vector.extract_strided_slice %420 {offsets = [1, 0, 0], sizes = [1, 8, 1], strides = [1, 1, 1]} : vector<2x8x1xf32> to vector<1x8x1xf32>
    %422 = vector.extract_strided_slice %420 {offsets = [0, 0, 0], sizes = [1, 8, 1], strides = [1, 1, 1]} : vector<2x8x1xf32> to vector<1x8x1xf32>
    %423 = tpu.concatenate %421, %422 in 0 : vector<1x8x1xf32>, vector<1x8x1xf32> -> vector<2x8x1xf32>
    %424 = arith.select %7, %423, %420 : vector<2x8x1xi1>, vector<2x8x1xf32>
    %425 = vector.extract_strided_slice %365 {offsets = [0, 1, 0], sizes = [2, 7, 1], strides = [1, 1, 1]} : vector<2x8x1xf32> to vector<2x7x1xf32>
    %426 = vector.extract_strided_slice %365 {offsets = [0, 0, 0], sizes = [2, 1, 1], strides = [1, 1, 1]} : vector<2x8x1xf32> to vector<2x1x1xf32>
    %427 = tpu.concatenate %425, %426 in 1 : vector<2x7x1xf32>, vector<2x1x1xf32> -> vector<2x8x1xf32>
    %428 = vector.extract_strided_slice %427 {offsets = [1, 0, 0], sizes = [1, 8, 1], strides = [1, 1, 1]} : vector<2x8x1xf32> to vector<1x8x1xf32>
    %429 = vector.extract_strided_slice %427 {offsets = [0, 0, 0], sizes = [1, 8, 1], strides = [1, 1, 1]} : vector<2x8x1xf32> to vector<1x8x1xf32>
    %430 = tpu.concatenate %428, %429 in 0 : vector<1x8x1xf32>, vector<1x8x1xf32> -> vector<2x8x1xf32>
    %431 = arith.select %9, %430, %427 : vector<2x8x1xi1>, vector<2x8x1xf32>
    %432 = vector.broadcast %365 : vector<2x8x1xf32> to vector<2x8x128xf32>
    %433 = arith.mulf %346, %432 : vector<2x8x128xf32>
    %cst_131 = arith.constant dense<0.000000e+00> : vector<2x128xf32>
    %434 = vector.multi_reduction <add>, %433, %cst_131 [1] : vector<2x8x128xf32> to vector<2x128xf32>
    %435 = vector.broadcast %415 : vector<2x1xf32> to vector<2x128xf32>
    %436 = arith.mulf %434, %435 : vector<2x128xf32>
    %c3_132 = arith.constant 3 : index
    %c0_133 = arith.constant 0 : index
    %c0_134 = arith.constant 0 : index
    %437 = vector.load %arg7[%c3_132, %c0_133, %c0_134] : memref<8x2x128xf32, #tpu.memory_space<vmem>>, vector<1x2x128xf32>
    %438 = vector.shape_cast %437 : vector<1x2x128xf32> to vector<2x128xf32>
    %439 = vector.shape_cast %436 : vector<2x128xf32> to vector<1x2x128xf32>
    tpu.vector_store %arg7[%c3_132, %c0_133, %c0_134], %439 {strides = array<i32>} : memref<8x2x128xf32, #tpu.memory_space<vmem>>, vector<1x2x128xf32>,
    %cst_135 = arith.constant 1.000000e+00 : f32
    %440 = vector.broadcast %cst_135 : f32 to vector<2x8x1xf32>
    %441 = arith.subf %440, %424 : vector<2x8x1xf32>
    %442 = vector.broadcast %379 : vector<2x1x1xf32> to vector<2x8x1xf32>
    %443 = arith.mulf %442, %441 : vector<2x8x1xf32>
    %444 = vector.broadcast %403 : vector<2x1x1xf32> to vector<2x8x1xf32>
    %445 = arith.addf %444, %443 : vector<2x8x1xf32>
    %cst_136 = arith.constant 1.000000e+00 : f32
    %446 = vector.broadcast %cst_136 : f32 to vector<2x8x1xf32>
    %447 = arith.subf %446, %365 : vector<2x8x1xf32>
    %448 = vector.broadcast %391 : vector<2x1x1xf32> to vector<2x8x1xf32>
    %449 = arith.mulf %448, %447 : vector<2x8x1xf32>
    %450 = arith.addf %445, %449 : vector<2x8x1xf32>
    %451 = vector.broadcast %379 : vector<2x1x1xf32> to vector<2x8x1xf32>
    %452 = arith.mulf %451, %424 : vector<2x8x1xf32>
    %453 = vector.broadcast %391 : vector<2x1x1xf32> to vector<2x8x1xf32>
    %454 = arith.mulf %453, %365 : vector<2x8x1xf32>
    %455 = vector.broadcast %450 : vector<2x8x1xf32> to vector<2x8x128xf32>
    %456 = arith.mulf %346, %455 : vector<2x8x128xf32>
    %457 = vector.broadcast %417 : vector<2x1x128xf32> to vector<2x8x128xf32>
    %458 = vector.broadcast %452 : vector<2x8x1xf32> to vector<2x8x128xf32>
    %459 = arith.mulf %457, %458 : vector<2x8x128xf32>
    %460 = arith.addf %456, %459 : vector<2x8x128xf32>
    %461 = vector.broadcast %4 : vector<2x1x128xf32> to vector<2x8x128xf32>
    %462 = vector.broadcast %454 : vector<2x8x1xf32> to vector<2x8x128xf32>
    %463 = arith.mulf %461, %462 : vector<2x8x128xf32>
    %464 = arith.addf %460, %463 : vector<2x8x128xf32>
    %465 = vector.broadcast %403 : vector<2x1x1xf32> to vector<2x8x1xf32>
    %466 = arith.mulf %365, %465 : vector<2x8x1xf32>
    %467 = vector.broadcast %379 : vector<2x1x1xf32> to vector<2x8x1xf32>
    %468 = arith.mulf %424, %467 : vector<2x8x1xf32>
    %469 = arith.addf %466, %468 : vector<2x8x1xf32>
    %470 = vector.broadcast %391 : vector<2x1x1xf32> to vector<2x8x1xf32>
    %471 = arith.mulf %431, %470 : vector<2x8x1xf32>
    %472 = arith.addf %469, %471 : vector<2x8x1xf32>
    %473 = vector.broadcast %3 : f32 to vector<2x8x1xf32>
    %474 = arith.mulf %472, %473 : vector<2x8x1xf32>
    %cst_137 = arith.constant dense<0xFF800000> : vector<2x1xf32>
    %475 = vector.multi_reduction <maximumf>, %474, %cst_137 [1] : vector<2x8x1xf32> to vector<2x1xf32>
    %476 = vector.shape_cast %475 : vector<2x1xf32> to vector<2x1x1xf32>
    %477 = vector.broadcast %476 : vector<2x1x1xf32> to vector<2x8x1xf32>
    %478 = arith.subf %474, %477 : vector<2x8x1xf32>
    %479 = math.exp %478 : vector<2x8x1xf32>
    %cst_138 = arith.constant dense<0.000000e+00> : vector<2x1xf32>
    %480 = vector.multi_reduction <add>, %479, %cst_138 [1] : vector<2x8x1xf32> to vector<2x1xf32>
    %481 = vector.shape_cast %480 : vector<2x1xf32> to vector<2x1x1xf32>
    %482 = vector.broadcast %481 : vector<2x1x1xf32> to vector<2x8x1xf32>
    %483 = arith.divf %479, %482 : vector<2x8x1xf32>
    %c8_i32_139 = arith.constant 8 : i32
    %484 = arith.muli %arg0, %c8_i32_139 : i32
    %c4_i32 = arith.constant 4 : i32
    %485 = arith.addi %484, %c4_i32 : i32
    %c3_i32_140 = arith.constant 3 : i32
    %486 = arith.muli %485, %c3_i32_140 : i32
    %c0_i32_141 = arith.constant 0 : i32
    %487 = arith.addi %486, %c0_i32_141 : i32
    %c2_i32_142 = arith.constant 2 : i32
    %488 = arith.muli %487, %c2_i32_142 : i32
    %c0_i32_143 = arith.constant 0 : i32
    %489 = arith.addi %488, %c0_i32_143 : i32
    %490 = arith.index_cast %489 : i32 to index
    %491 = memref.load %arg2[%490] : memref<48xf32, #tpu.memory_space<smem>>
    %492 = vector.broadcast %491 : f32 to vector<1x1x1xf32>
    %c1_i32_144 = arith.constant 1 : i32
    %493 = arith.addi %488, %c1_i32_144 : i32
    %494 = arith.index_cast %493 : i32 to index
    %495 = memref.load %arg2[%494] : memref<48xf32, #tpu.memory_space<smem>>
    %496 = vector.broadcast %495 : f32 to vector<1x1x1xf32>
    %497 = tpu.concatenate %492, %496 in 0 : vector<1x1x1xf32>, vector<1x1x1xf32> -> vector<2x1x1xf32>
    %c3_i32_145 = arith.constant 3 : i32
    %498 = arith.muli %485, %c3_i32_145 : i32
    %c1_i32_146 = arith.constant 1 : i32
    %499 = arith.addi %498, %c1_i32_146 : i32
    %c2_i32_147 = arith.constant 2 : i32
    %500 = arith.muli %499, %c2_i32_147 : i32
    %c0_i32_148 = arith.constant 0 : i32
    %501 = arith.addi %500, %c0_i32_148 : i32
    %502 = arith.index_cast %501 : i32 to index
    %503 = memref.load %arg2[%502] : memref<48xf32, #tpu.memory_space<smem>>
    %504 = vector.broadcast %503 : f32 to vector<1x1x1xf32>
    %c1_i32_149 = arith.constant 1 : i32
    %505 = arith.addi %500, %c1_i32_149 : i32
    %506 = arith.index_cast %505 : i32 to index
    %507 = memref.load %arg2[%506] : memref<48xf32, #tpu.memory_space<smem>>
    %508 = vector.broadcast %507 : f32 to vector<1x1x1xf32>
    %509 = tpu.concatenate %504, %508 in 0 : vector<1x1x1xf32>, vector<1x1x1xf32> -> vector<2x1x1xf32>
    %c3_i32_150 = arith.constant 3 : i32
    %510 = arith.muli %485, %c3_i32_150 : i32
    %c2_i32_151 = arith.constant 2 : i32
    %511 = arith.addi %510, %c2_i32_151 : i32
    %c2_i32_152 = arith.constant 2 : i32
    %512 = arith.muli %511, %c2_i32_152 : i32
    %c0_i32_153 = arith.constant 0 : i32
    %513 = arith.addi %512, %c0_i32_153 : i32
    %514 = arith.index_cast %513 : i32 to index
    %515 = memref.load %arg2[%514] : memref<48xf32, #tpu.memory_space<smem>>
    %516 = vector.broadcast %515 : f32 to vector<1x1x1xf32>
    %c1_i32_154 = arith.constant 1 : i32
    %517 = arith.addi %512, %c1_i32_154 : i32
    %518 = arith.index_cast %517 : i32 to index
    %519 = memref.load %arg2[%518] : memref<48xf32, #tpu.memory_space<smem>>
    %520 = vector.broadcast %519 : f32 to vector<1x1x1xf32>
    %521 = tpu.concatenate %516, %520 in 0 : vector<1x1x1xf32>, vector<1x1x1xf32> -> vector<2x1x1xf32>
    %c3_i32_155 = arith.constant 3 : i32
    %522 = arith.muli %485, %c3_i32_155 : i32
    %c1_i32_156 = arith.constant 1 : i32
    %523 = arith.addi %522, %c1_i32_156 : i32
    %c2_i32_157 = arith.constant 2 : i32
    %524 = arith.muli %523, %c2_i32_157 : i32
    %c0_i32_158 = arith.constant 0 : i32
    %525 = arith.addi %524, %c0_i32_158 : i32
    %526 = arith.index_cast %525 : i32 to index
    %527 = memref.load %arg2[%526] : memref<48xf32, #tpu.memory_space<smem>>
    %528 = vector.broadcast %527 : f32 to vector<1x1xf32>
    %c1_i32_159 = arith.constant 1 : i32
    %529 = arith.addi %524, %c1_i32_159 : i32
    %530 = arith.index_cast %529 : i32 to index
    %531 = memref.load %arg2[%530] : memref<48xf32, #tpu.memory_space<smem>>
    %532 = vector.broadcast %531 : f32 to vector<1x1xf32>
    %533 = tpu.concatenate %528, %532 in 0 : vector<1x1xf32>, vector<1x1xf32> -> vector<2x1xf32>
    %c4 = arith.constant 4 : index
    %c0_160 = arith.constant 0 : index
    %c0_161 = arith.constant 0 : index
    %c0_162 = arith.constant 0 : index
    %534 = vector.load %arg6[%c4, %c0_160, %c0_161, %c0_162] : memref<8x2x1x128xf32, #tpu.memory_space<vmem>>, vector<1x2x1x128xf32>
    %535 = vector.shape_cast %534 : vector<1x2x1x128xf32> to vector<2x1x128xf32>
    %536 = vector.extract_strided_slice %483 {offsets = [0, 7, 0], sizes = [2, 1, 1], strides = [1, 1, 1]} : vector<2x8x1xf32> to vector<2x1x1xf32>
    %537 = vector.extract_strided_slice %483 {offsets = [0, 0, 0], sizes = [2, 7, 1], strides = [1, 1, 1]} : vector<2x8x1xf32> to vector<2x7x1xf32>
    %538 = tpu.concatenate %536, %537 in 1 : vector<2x1x1xf32>, vector<2x7x1xf32> -> vector<2x8x1xf32>
    %539 = vector.extract_strided_slice %538 {offsets = [1, 0, 0], sizes = [1, 8, 1], strides = [1, 1, 1]} : vector<2x8x1xf32> to vector<1x8x1xf32>
    %540 = vector.extract_strided_slice %538 {offsets = [0, 0, 0], sizes = [1, 8, 1], strides = [1, 1, 1]} : vector<2x8x1xf32> to vector<1x8x1xf32>
    %541 = tpu.concatenate %539, %540 in 0 : vector<1x8x1xf32>, vector<1x8x1xf32> -> vector<2x8x1xf32>
    %542 = arith.select %7, %541, %538 : vector<2x8x1xi1>, vector<2x8x1xf32>
    %543 = vector.extract_strided_slice %483 {offsets = [0, 1, 0], sizes = [2, 7, 1], strides = [1, 1, 1]} : vector<2x8x1xf32> to vector<2x7x1xf32>
    %544 = vector.extract_strided_slice %483 {offsets = [0, 0, 0], sizes = [2, 1, 1], strides = [1, 1, 1]} : vector<2x8x1xf32> to vector<2x1x1xf32>
    %545 = tpu.concatenate %543, %544 in 1 : vector<2x7x1xf32>, vector<2x1x1xf32> -> vector<2x8x1xf32>
    %546 = vector.extract_strided_slice %545 {offsets = [1, 0, 0], sizes = [1, 8, 1], strides = [1, 1, 1]} : vector<2x8x1xf32> to vector<1x8x1xf32>
    %547 = vector.extract_strided_slice %545 {offsets = [0, 0, 0], sizes = [1, 8, 1], strides = [1, 1, 1]} : vector<2x8x1xf32> to vector<1x8x1xf32>
    %548 = tpu.concatenate %546, %547 in 0 : vector<1x8x1xf32>, vector<1x8x1xf32> -> vector<2x8x1xf32>
    %549 = arith.select %9, %548, %545 : vector<2x8x1xi1>, vector<2x8x1xf32>
    %550 = vector.broadcast %483 : vector<2x8x1xf32> to vector<2x8x128xf32>
    %551 = arith.mulf %464, %550 : vector<2x8x128xf32>
    %cst_163 = arith.constant dense<0.000000e+00> : vector<2x128xf32>
    %552 = vector.multi_reduction <add>, %551, %cst_163 [1] : vector<2x8x128xf32> to vector<2x128xf32>
    %553 = vector.broadcast %533 : vector<2x1xf32> to vector<2x128xf32>
    %554 = arith.mulf %552, %553 : vector<2x128xf32>
    %c4_164 = arith.constant 4 : index
    %c0_165 = arith.constant 0 : index
    %c0_166 = arith.constant 0 : index
    %555 = vector.load %arg7[%c4_164, %c0_165, %c0_166] : memref<8x2x128xf32, #tpu.memory_space<vmem>>, vector<1x2x128xf32>
    %556 = vector.shape_cast %555 : vector<1x2x128xf32> to vector<2x128xf32>
    %557 = vector.shape_cast %554 : vector<2x128xf32> to vector<1x2x128xf32>
    tpu.vector_store %arg7[%c4_164, %c0_165, %c0_166], %557 {strides = array<i32>} : memref<8x2x128xf32, #tpu.memory_space<vmem>>, vector<1x2x128xf32>,
    %cst_167 = arith.constant 1.000000e+00 : f32
    %558 = vector.broadcast %cst_167 : f32 to vector<2x8x1xf32>
    %559 = arith.subf %558, %542 : vector<2x8x1xf32>
    %560 = vector.broadcast %497 : vector<2x1x1xf32> to vector<2x8x1xf32>
    %561 = arith.mulf %560, %559 : vector<2x8x1xf32>
    %562 = vector.broadcast %521 : vector<2x1x1xf32> to vector<2x8x1xf32>
    %563 = arith.addf %562, %561 : vector<2x8x1xf32>
    %cst_168 = arith.constant 1.000000e+00 : f32
    %564 = vector.broadcast %cst_168 : f32 to vector<2x8x1xf32>
    %565 = arith.subf %564, %483 : vector<2x8x1xf32>
    %566 = vector.broadcast %509 : vector<2x1x1xf32> to vector<2x8x1xf32>
    %567 = arith.mulf %566, %565 : vector<2x8x1xf32>
    %568 = arith.addf %563, %567 : vector<2x8x1xf32>
    %569 = vector.broadcast %497 : vector<2x1x1xf32> to vector<2x8x1xf32>
    %570 = arith.mulf %569, %542 : vector<2x8x1xf32>
    %571 = vector.broadcast %509 : vector<2x1x1xf32> to vector<2x8x1xf32>
    %572 = arith.mulf %571, %483 : vector<2x8x1xf32>
    %573 = vector.broadcast %568 : vector<2x8x1xf32> to vector<2x8x128xf32>
    %574 = arith.mulf %464, %573 : vector<2x8x128xf32>
    %575 = vector.broadcast %535 : vector<2x1x128xf32> to vector<2x8x128xf32>
    %576 = vector.broadcast %570 : vector<2x8x1xf32> to vector<2x8x128xf32>
    %577 = arith.mulf %575, %576 : vector<2x8x128xf32>
    %578 = arith.addf %574, %577 : vector<2x8x128xf32>
    %579 = vector.broadcast %4 : vector<2x1x128xf32> to vector<2x8x128xf32>
    %580 = vector.broadcast %572 : vector<2x8x1xf32> to vector<2x8x128xf32>
    %581 = arith.mulf %579, %580 : vector<2x8x128xf32>
    %582 = arith.addf %578, %581 : vector<2x8x128xf32>
    %583 = vector.broadcast %521 : vector<2x1x1xf32> to vector<2x8x1xf32>
    %584 = arith.mulf %483, %583 : vector<2x8x1xf32>
    %585 = vector.broadcast %497 : vector<2x1x1xf32> to vector<2x8x1xf32>
    %586 = arith.mulf %542, %585 : vector<2x8x1xf32>
    %587 = arith.addf %584, %586 : vector<2x8x1xf32>
    %588 = vector.broadcast %509 : vector<2x1x1xf32> to vector<2x8x1xf32>
    %589 = arith.mulf %549, %588 : vector<2x8x1xf32>
    %590 = arith.addf %587, %589 : vector<2x8x1xf32>
    %591 = vector.broadcast %3 : f32 to vector<2x8x1xf32>
    %592 = arith.mulf %590, %591 : vector<2x8x1xf32>
    %cst_169 = arith.constant dense<0xFF800000> : vector<2x1xf32>
    %593 = vector.multi_reduction <maximumf>, %592, %cst_169 [1] : vector<2x8x1xf32> to vector<2x1xf32>
    %594 = vector.shape_cast %593 : vector<2x1xf32> to vector<2x1x1xf32>
    %595 = vector.broadcast %594 : vector<2x1x1xf32> to vector<2x8x1xf32>
    %596 = arith.subf %592, %595 : vector<2x8x1xf32>
    %597 = math.exp %596 : vector<2x8x1xf32>
    %cst_170 = arith.constant dense<0.000000e+00> : vector<2x1xf32>
    %598 = vector.multi_reduction <add>, %597, %cst_170 [1] : vector<2x8x1xf32> to vector<2x1xf32>
    %599 = vector.shape_cast %598 : vector<2x1xf32> to vector<2x1x1xf32>
    %600 = vector.broadcast %599 : vector<2x1x1xf32> to vector<2x8x1xf32>
    %601 = arith.divf %597, %600 : vector<2x8x1xf32>
    %c8_i32_171 = arith.constant 8 : i32
    %602 = arith.muli %arg0, %c8_i32_171 : i32
    %c5_i32 = arith.constant 5 : i32
    %603 = arith.addi %602, %c5_i32 : i32
    %c3_i32_172 = arith.constant 3 : i32
    %604 = arith.muli %603, %c3_i32_172 : i32
    %c0_i32_173 = arith.constant 0 : i32
    %605 = arith.addi %604, %c0_i32_173 : i32
    %c2_i32_174 = arith.constant 2 : i32
    %606 = arith.muli %605, %c2_i32_174 : i32
    %c0_i32_175 = arith.constant 0 : i32
    %607 = arith.addi %606, %c0_i32_175 : i32
    %608 = arith.index_cast %607 : i32 to index
    %609 = memref.load %arg2[%608] : memref<48xf32, #tpu.memory_space<smem>>
    %610 = vector.broadcast %609 : f32 to vector<1x1x1xf32>
    %c1_i32_176 = arith.constant 1 : i32
    %611 = arith.addi %606, %c1_i32_176 : i32
    %612 = arith.index_cast %611 : i32 to index
    %613 = memref.load %arg2[%612] : memref<48xf32, #tpu.memory_space<smem>>
    %614 = vector.broadcast %613 : f32 to vector<1x1x1xf32>
    %615 = tpu.concatenate %610, %614 in 0 : vector<1x1x1xf32>, vector<1x1x1xf32> -> vector<2x1x1xf32>
    %c3_i32_177 = arith.constant 3 : i32
    %616 = arith.muli %603, %c3_i32_177 : i32
    %c1_i32_178 = arith.constant 1 : i32
    %617 = arith.addi %616, %c1_i32_178 : i32
    %c2_i32_179 = arith.constant 2 : i32
    %618 = arith.muli %617, %c2_i32_179 : i32
    %c0_i32_180 = arith.constant 0 : i32
    %619 = arith.addi %618, %c0_i32_180 : i32
    %620 = arith.index_cast %619 : i32 to index
    %621 = memref.load %arg2[%620] : memref<48xf32, #tpu.memory_space<smem>>
    %622 = vector.broadcast %621 : f32 to vector<1x1x1xf32>
    %c1_i32_181 = arith.constant 1 : i32
    %623 = arith.addi %618, %c1_i32_181 : i32
    %624 = arith.index_cast %623 : i32 to index
    %625 = memref.load %arg2[%624] : memref<48xf32, #tpu.memory_space<smem>>
    %626 = vector.broadcast %625 : f32 to vector<1x1x1xf32>
    %627 = tpu.concatenate %622, %626 in 0 : vector<1x1x1xf32>, vector<1x1x1xf32> -> vector<2x1x1xf32>
    %c3_i32_182 = arith.constant 3 : i32
    %628 = arith.muli %603, %c3_i32_182 : i32
    %c2_i32_183 = arith.constant 2 : i32
    %629 = arith.addi %628, %c2_i32_183 : i32
    %c2_i32_184 = arith.constant 2 : i32
    %630 = arith.muli %629, %c2_i32_184 : i32
    %c0_i32_185 = arith.constant 0 : i32
    %631 = arith.addi %630, %c0_i32_185 : i32
    %632 = arith.index_cast %631 : i32 to index
    %633 = memref.load %arg2[%632] : memref<48xf32, #tpu.memory_space<smem>>
    %634 = vector.broadcast %633 : f32 to vector<1x1x1xf32>
    %c1_i32_186 = arith.constant 1 : i32
    %635 = arith.addi %630, %c1_i32_186 : i32
    %636 = arith.index_cast %635 : i32 to index
    %637 = memref.load %arg2[%636] : memref<48xf32, #tpu.memory_space<smem>>
    %638 = vector.broadcast %637 : f32 to vector<1x1x1xf32>
    %639 = tpu.concatenate %634, %638 in 0 : vector<1x1x1xf32>, vector<1x1x1xf32> -> vector<2x1x1xf32>
    %c3_i32_187 = arith.constant 3 : i32
    %640 = arith.muli %603, %c3_i32_187 : i32
    %c1_i32_188 = arith.constant 1 : i32
    %641 = arith.addi %640, %c1_i32_188 : i32
    %c2_i32_189 = arith.constant 2 : i32
    %642 = arith.muli %641, %c2_i32_189 : i32
    %c0_i32_190 = arith.constant 0 : i32
    %643 = arith.addi %642, %c0_i32_190 : i32
    %644 = arith.index_cast %643 : i32 to index
    %645 = memref.load %arg2[%644] : memref<48xf32, #tpu.memory_space<smem>>
    %646 = vector.broadcast %645 : f32 to vector<1x1xf32>
    %c1_i32_191 = arith.constant 1 : i32
    %647 = arith.addi %642, %c1_i32_191 : i32
    %648 = arith.index_cast %647 : i32 to index
    %649 = memref.load %arg2[%648] : memref<48xf32, #tpu.memory_space<smem>>
    %650 = vector.broadcast %649 : f32 to vector<1x1xf32>
    %651 = tpu.concatenate %646, %650 in 0 : vector<1x1xf32>, vector<1x1xf32> -> vector<2x1xf32>
    %c5 = arith.constant 5 : index
    %c0_192 = arith.constant 0 : index
    %c0_193 = arith.constant 0 : index
    %c0_194 = arith.constant 0 : index
    %652 = vector.load %arg6[%c5, %c0_192, %c0_193, %c0_194] : memref<8x2x1x128xf32, #tpu.memory_space<vmem>>, vector<1x2x1x128xf32>
    %653 = vector.shape_cast %652 : vector<1x2x1x128xf32> to vector<2x1x128xf32>
    %654 = vector.extract_strided_slice %601 {offsets = [0, 7, 0], sizes = [2, 1, 1], strides = [1, 1, 1]} : vector<2x8x1xf32> to vector<2x1x1xf32>
    %655 = vector.extract_strided_slice %601 {offsets = [0, 0, 0], sizes = [2, 7, 1], strides = [1, 1, 1]} : vector<2x8x1xf32> to vector<2x7x1xf32>
    %656 = tpu.concatenate %654, %655 in 1 : vector<2x1x1xf32>, vector<2x7x1xf32> -> vector<2x8x1xf32>
    %657 = vector.extract_strided_slice %656 {offsets = [1, 0, 0], sizes = [1, 8, 1], strides = [1, 1, 1]} : vector<2x8x1xf32> to vector<1x8x1xf32>
    %658 = vector.extract_strided_slice %656 {offsets = [0, 0, 0], sizes = [1, 8, 1], strides = [1, 1, 1]} : vector<2x8x1xf32> to vector<1x8x1xf32>
    %659 = tpu.concatenate %657, %658 in 0 : vector<1x8x1xf32>, vector<1x8x1xf32> -> vector<2x8x1xf32>
    %660 = arith.select %7, %659, %656 : vector<2x8x1xi1>, vector<2x8x1xf32>
    %661 = vector.extract_strided_slice %601 {offsets = [0, 1, 0], sizes = [2, 7, 1], strides = [1, 1, 1]} : vector<2x8x1xf32> to vector<2x7x1xf32>
    %662 = vector.extract_strided_slice %601 {offsets = [0, 0, 0], sizes = [2, 1, 1], strides = [1, 1, 1]} : vector<2x8x1xf32> to vector<2x1x1xf32>
    %663 = tpu.concatenate %661, %662 in 1 : vector<2x7x1xf32>, vector<2x1x1xf32> -> vector<2x8x1xf32>
    %664 = vector.extract_strided_slice %663 {offsets = [1, 0, 0], sizes = [1, 8, 1], strides = [1, 1, 1]} : vector<2x8x1xf32> to vector<1x8x1xf32>
    %665 = vector.extract_strided_slice %663 {offsets = [0, 0, 0], sizes = [1, 8, 1], strides = [1, 1, 1]} : vector<2x8x1xf32> to vector<1x8x1xf32>
    %666 = tpu.concatenate %664, %665 in 0 : vector<1x8x1xf32>, vector<1x8x1xf32> -> vector<2x8x1xf32>
    %667 = arith.select %9, %666, %663 : vector<2x8x1xi1>, vector<2x8x1xf32>
    %668 = vector.broadcast %601 : vector<2x8x1xf32> to vector<2x8x128xf32>
    %669 = arith.mulf %582, %668 : vector<2x8x128xf32>
    %cst_195 = arith.constant dense<0.000000e+00> : vector<2x128xf32>
    %670 = vector.multi_reduction <add>, %669, %cst_195 [1] : vector<2x8x128xf32> to vector<2x128xf32>
    %671 = vector.broadcast %651 : vector<2x1xf32> to vector<2x128xf32>
    %672 = arith.mulf %670, %671 : vector<2x128xf32>
    %c5_196 = arith.constant 5 : index
    %c0_197 = arith.constant 0 : index
    %c0_198 = arith.constant 0 : index
    %673 = vector.load %arg7[%c5_196, %c0_197, %c0_198] : memref<8x2x128xf32, #tpu.memory_space<vmem>>, vector<1x2x128xf32>
    %674 = vector.shape_cast %673 : vector<1x2x128xf32> to vector<2x128xf32>
    %675 = vector.shape_cast %672 : vector<2x128xf32> to vector<1x2x128xf32>
    tpu.vector_store %arg7[%c5_196, %c0_197, %c0_198], %675 {strides = array<i32>} : memref<8x2x128xf32, #tpu.memory_space<vmem>>, vector<1x2x128xf32>,
    %cst_199 = arith.constant 1.000000e+00 : f32
    %676 = vector.broadcast %cst_199 : f32 to vector<2x8x1xf32>
    %677 = arith.subf %676, %660 : vector<2x8x1xf32>
    %678 = vector.broadcast %615 : vector<2x1x1xf32> to vector<2x8x1xf32>
    %679 = arith.mulf %678, %677 : vector<2x8x1xf32>
    %680 = vector.broadcast %639 : vector<2x1x1xf32> to vector<2x8x1xf32>
    %681 = arith.addf %680, %679 : vector<2x8x1xf32>
    %cst_200 = arith.constant 1.000000e+00 : f32
    %682 = vector.broadcast %cst_200 : f32 to vector<2x8x1xf32>
    %683 = arith.subf %682, %601 : vector<2x8x1xf32>
    %684 = vector.broadcast %627 : vector<2x1x1xf32> to vector<2x8x1xf32>
    %685 = arith.mulf %684, %683 : vector<2x8x1xf32>
    %686 = arith.addf %681, %685 : vector<2x8x1xf32>
    %687 = vector.broadcast %615 : vector<2x1x1xf32> to vector<2x8x1xf32>
    %688 = arith.mulf %687, %660 : vector<2x8x1xf32>
    %689 = vector.broadcast %627 : vector<2x1x1xf32> to vector<2x8x1xf32>
    %690 = arith.mulf %689, %601 : vector<2x8x1xf32>
    %691 = vector.broadcast %686 : vector<2x8x1xf32> to vector<2x8x128xf32>
    %692 = arith.mulf %582, %691 : vector<2x8x128xf32>
    %693 = vector.broadcast %653 : vector<2x1x128xf32> to vector<2x8x128xf32>
    %694 = vector.broadcast %688 : vector<2x8x1xf32> to vector<2x8x128xf32>
    %695 = arith.mulf %693, %694 : vector<2x8x128xf32>
    %696 = arith.addf %692, %695 : vector<2x8x128xf32>
    %697 = vector.broadcast %4 : vector<2x1x128xf32> to vector<2x8x128xf32>
    %698 = vector.broadcast %690 : vector<2x8x1xf32> to vector<2x8x128xf32>
    %699 = arith.mulf %697, %698 : vector<2x8x128xf32>
    %700 = arith.addf %696, %699 : vector<2x8x128xf32>
    %701 = vector.broadcast %639 : vector<2x1x1xf32> to vector<2x8x1xf32>
    %702 = arith.mulf %601, %701 : vector<2x8x1xf32>
    %703 = vector.broadcast %615 : vector<2x1x1xf32> to vector<2x8x1xf32>
    %704 = arith.mulf %660, %703 : vector<2x8x1xf32>
    %705 = arith.addf %702, %704 : vector<2x8x1xf32>
    %706 = vector.broadcast %627 : vector<2x1x1xf32> to vector<2x8x1xf32>
    %707 = arith.mulf %667, %706 : vector<2x8x1xf32>
    %708 = arith.addf %705, %707 : vector<2x8x1xf32>
    %709 = vector.broadcast %3 : f32 to vector<2x8x1xf32>
    %710 = arith.mulf %708, %709 : vector<2x8x1xf32>
    %cst_201 = arith.constant dense<0xFF800000> : vector<2x1xf32>
    %711 = vector.multi_reduction <maximumf>, %710, %cst_201 [1] : vector<2x8x1xf32> to vector<2x1xf32>
    %712 = vector.shape_cast %711 : vector<2x1xf32> to vector<2x1x1xf32>
    %713 = vector.broadcast %712 : vector<2x1x1xf32> to vector<2x8x1xf32>
    %714 = arith.subf %710, %713 : vector<2x8x1xf32>
    %715 = math.exp %714 : vector<2x8x1xf32>
    %cst_202 = arith.constant dense<0.000000e+00> : vector<2x1xf32>
    %716 = vector.multi_reduction <add>, %715, %cst_202 [1] : vector<2x8x1xf32> to vector<2x1xf32>
    %717 = vector.shape_cast %716 : vector<2x1xf32> to vector<2x1x1xf32>
    %718 = vector.broadcast %717 : vector<2x1x1xf32> to vector<2x8x1xf32>
    %719 = arith.divf %715, %718 : vector<2x8x1xf32>
    %c8_i32_203 = arith.constant 8 : i32
    %720 = arith.muli %arg0, %c8_i32_203 : i32
    %c6_i32 = arith.constant 6 : i32
    %721 = arith.addi %720, %c6_i32 : i32
    %c3_i32_204 = arith.constant 3 : i32
    %722 = arith.muli %721, %c3_i32_204 : i32
    %c0_i32_205 = arith.constant 0 : i32
    %723 = arith.addi %722, %c0_i32_205 : i32
    %c2_i32_206 = arith.constant 2 : i32
    %724 = arith.muli %723, %c2_i32_206 : i32
    %c0_i32_207 = arith.constant 0 : i32
    %725 = arith.addi %724, %c0_i32_207 : i32
    %726 = arith.index_cast %725 : i32 to index
    %727 = memref.load %arg2[%726] : memref<48xf32, #tpu.memory_space<smem>>
    %728 = vector.broadcast %727 : f32 to vector<1x1x1xf32>
    %c1_i32_208 = arith.constant 1 : i32
    %729 = arith.addi %724, %c1_i32_208 : i32
    %730 = arith.index_cast %729 : i32 to index
    %731 = memref.load %arg2[%730] : memref<48xf32, #tpu.memory_space<smem>>
    %732 = vector.broadcast %731 : f32 to vector<1x1x1xf32>
    %733 = tpu.concatenate %728, %732 in 0 : vector<1x1x1xf32>, vector<1x1x1xf32> -> vector<2x1x1xf32>
    %c3_i32_209 = arith.constant 3 : i32
    %734 = arith.muli %721, %c3_i32_209 : i32
    %c1_i32_210 = arith.constant 1 : i32
    %735 = arith.addi %734, %c1_i32_210 : i32
    %c2_i32_211 = arith.constant 2 : i32
    %736 = arith.muli %735, %c2_i32_211 : i32
    %c0_i32_212 = arith.constant 0 : i32
    %737 = arith.addi %736, %c0_i32_212 : i32
    %738 = arith.index_cast %737 : i32 to index
    %739 = memref.load %arg2[%738] : memref<48xf32, #tpu.memory_space<smem>>
    %740 = vector.broadcast %739 : f32 to vector<1x1x1xf32>
    %c1_i32_213 = arith.constant 1 : i32
    %741 = arith.addi %736, %c1_i32_213 : i32
    %742 = arith.index_cast %741 : i32 to index
    %743 = memref.load %arg2[%742] : memref<48xf32, #tpu.memory_space<smem>>
    %744 = vector.broadcast %743 : f32 to vector<1x1x1xf32>
    %745 = tpu.concatenate %740, %744 in 0 : vector<1x1x1xf32>, vector<1x1x1xf32> -> vector<2x1x1xf32>
    %c3_i32_214 = arith.constant 3 : i32
    %746 = arith.muli %721, %c3_i32_214 : i32
    %c2_i32_215 = arith.constant 2 : i32
    %747 = arith.addi %746, %c2_i32_215 : i32
    %c2_i32_216 = arith.constant 2 : i32
    %748 = arith.muli %747, %c2_i32_216 : i32
    %c0_i32_217 = arith.constant 0 : i32
    %749 = arith.addi %748, %c0_i32_217 : i32
    %750 = arith.index_cast %749 : i32 to index
    %751 = memref.load %arg2[%750] : memref<48xf32, #tpu.memory_space<smem>>
    %752 = vector.broadcast %751 : f32 to vector<1x1x1xf32>
    %c1_i32_218 = arith.constant 1 : i32
    %753 = arith.addi %748, %c1_i32_218 : i32
    %754 = arith.index_cast %753 : i32 to index
    %755 = memref.load %arg2[%754] : memref<48xf32, #tpu.memory_space<smem>>
    %756 = vector.broadcast %755 : f32 to vector<1x1x1xf32>
    %757 = tpu.concatenate %752, %756 in 0 : vector<1x1x1xf32>, vector<1x1x1xf32> -> vector<2x1x1xf32>
    %c3_i32_219 = arith.constant 3 : i32
    %758 = arith.muli %721, %c3_i32_219 : i32
    %c1_i32_220 = arith.constant 1 : i32
    %759 = arith.addi %758, %c1_i32_220 : i32
    %c2_i32_221 = arith.constant 2 : i32
    %760 = arith.muli %759, %c2_i32_221 : i32
    %c0_i32_222 = arith.constant 0 : i32
    %761 = arith.addi %760, %c0_i32_222 : i32
    %762 = arith.index_cast %761 : i32 to index
    %763 = memref.load %arg2[%762] : memref<48xf32, #tpu.memory_space<smem>>
    %764 = vector.broadcast %763 : f32 to vector<1x1xf32>
    %c1_i32_223 = arith.constant 1 : i32
    %765 = arith.addi %760, %c1_i32_223 : i32
    %766 = arith.index_cast %765 : i32 to index
    %767 = memref.load %arg2[%766] : memref<48xf32, #tpu.memory_space<smem>>
    %768 = vector.broadcast %767 : f32 to vector<1x1xf32>
    %769 = tpu.concatenate %764, %768 in 0 : vector<1x1xf32>, vector<1x1xf32> -> vector<2x1xf32>
    %c6 = arith.constant 6 : index
    %c0_224 = arith.constant 0 : index
    %c0_225 = arith.constant 0 : index
    %c0_226 = arith.constant 0 : index
    %770 = vector.load %arg6[%c6, %c0_224, %c0_225, %c0_226] : memref<8x2x1x128xf32, #tpu.memory_space<vmem>>, vector<1x2x1x128xf32>
    %771 = vector.shape_cast %770 : vector<1x2x1x128xf32> to vector<2x1x128xf32>
    %772 = vector.extract_strided_slice %719 {offsets = [0, 7, 0], sizes = [2, 1, 1], strides = [1, 1, 1]} : vector<2x8x1xf32> to vector<2x1x1xf32>
    %773 = vector.extract_strided_slice %719 {offsets = [0, 0, 0], sizes = [2, 7, 1], strides = [1, 1, 1]} : vector<2x8x1xf32> to vector<2x7x1xf32>
    %774 = tpu.concatenate %772, %773 in 1 : vector<2x1x1xf32>, vector<2x7x1xf32> -> vector<2x8x1xf32>
    %775 = vector.extract_strided_slice %774 {offsets = [1, 0, 0], sizes = [1, 8, 1], strides = [1, 1, 1]} : vector<2x8x1xf32> to vector<1x8x1xf32>
    %776 = vector.extract_strided_slice %774 {offsets = [0, 0, 0], sizes = [1, 8, 1], strides = [1, 1, 1]} : vector<2x8x1xf32> to vector<1x8x1xf32>
    %777 = tpu.concatenate %775, %776 in 0 : vector<1x8x1xf32>, vector<1x8x1xf32> -> vector<2x8x1xf32>
    %778 = arith.select %7, %777, %774 : vector<2x8x1xi1>, vector<2x8x1xf32>
    %779 = vector.extract_strided_slice %719 {offsets = [0, 1, 0], sizes = [2, 7, 1], strides = [1, 1, 1]} : vector<2x8x1xf32> to vector<2x7x1xf32>
    %780 = vector.extract_strided_slice %719 {offsets = [0, 0, 0], sizes = [2, 1, 1], strides = [1, 1, 1]} : vector<2x8x1xf32> to vector<2x1x1xf32>
    %781 = tpu.concatenate %779, %780 in 1 : vector<2x7x1xf32>, vector<2x1x1xf32> -> vector<2x8x1xf32>
    %782 = vector.extract_strided_slice %781 {offsets = [1, 0, 0], sizes = [1, 8, 1], strides = [1, 1, 1]} : vector<2x8x1xf32> to vector<1x8x1xf32>
    %783 = vector.extract_strided_slice %781 {offsets = [0, 0, 0], sizes = [1, 8, 1], strides = [1, 1, 1]} : vector<2x8x1xf32> to vector<1x8x1xf32>
    %784 = tpu.concatenate %782, %783 in 0 : vector<1x8x1xf32>, vector<1x8x1xf32> -> vector<2x8x1xf32>
    %785 = arith.select %9, %784, %781 : vector<2x8x1xi1>, vector<2x8x1xf32>
    %786 = vector.broadcast %719 : vector<2x8x1xf32> to vector<2x8x128xf32>
    %787 = arith.mulf %700, %786 : vector<2x8x128xf32>
    %cst_227 = arith.constant dense<0.000000e+00> : vector<2x128xf32>
    %788 = vector.multi_reduction <add>, %787, %cst_227 [1] : vector<2x8x128xf32> to vector<2x128xf32>
    %789 = vector.broadcast %769 : vector<2x1xf32> to vector<2x128xf32>
    %790 = arith.mulf %788, %789 : vector<2x128xf32>
    %c6_228 = arith.constant 6 : index
    %c0_229 = arith.constant 0 : index
    %c0_230 = arith.constant 0 : index
    %791 = vector.load %arg7[%c6_228, %c0_229, %c0_230] : memref<8x2x128xf32, #tpu.memory_space<vmem>>, vector<1x2x128xf32>
    %792 = vector.shape_cast %791 : vector<1x2x128xf32> to vector<2x128xf32>
    %793 = vector.shape_cast %790 : vector<2x128xf32> to vector<1x2x128xf32>
    tpu.vector_store %arg7[%c6_228, %c0_229, %c0_230], %793 {strides = array<i32>} : memref<8x2x128xf32, #tpu.memory_space<vmem>>, vector<1x2x128xf32>,
    %cst_231 = arith.constant 1.000000e+00 : f32
    %794 = vector.broadcast %cst_231 : f32 to vector<2x8x1xf32>
    %795 = arith.subf %794, %778 : vector<2x8x1xf32>
    %796 = vector.broadcast %733 : vector<2x1x1xf32> to vector<2x8x1xf32>
    %797 = arith.mulf %796, %795 : vector<2x8x1xf32>
    %798 = vector.broadcast %757 : vector<2x1x1xf32> to vector<2x8x1xf32>
    %799 = arith.addf %798, %797 : vector<2x8x1xf32>
    %cst_232 = arith.constant 1.000000e+00 : f32
    %800 = vector.broadcast %cst_232 : f32 to vector<2x8x1xf32>
    %801 = arith.subf %800, %719 : vector<2x8x1xf32>
    %802 = vector.broadcast %745 : vector<2x1x1xf32> to vector<2x8x1xf32>
    %803 = arith.mulf %802, %801 : vector<2x8x1xf32>
    %804 = arith.addf %799, %803 : vector<2x8x1xf32>
    %805 = vector.broadcast %733 : vector<2x1x1xf32> to vector<2x8x1xf32>
    %806 = arith.mulf %805, %778 : vector<2x8x1xf32>
    %807 = vector.broadcast %745 : vector<2x1x1xf32> to vector<2x8x1xf32>
    %808 = arith.mulf %807, %719 : vector<2x8x1xf32>
    %809 = vector.broadcast %804 : vector<2x8x1xf32> to vector<2x8x128xf32>
    %810 = arith.mulf %700, %809 : vector<2x8x128xf32>
    %811 = vector.broadcast %771 : vector<2x1x128xf32> to vector<2x8x128xf32>
    %812 = vector.broadcast %806 : vector<2x8x1xf32> to vector<2x8x128xf32>
    %813 = arith.mulf %811, %812 : vector<2x8x128xf32>
    %814 = arith.addf %810, %813 : vector<2x8x128xf32>
    %815 = vector.broadcast %4 : vector<2x1x128xf32> to vector<2x8x128xf32>
    %816 = vector.broadcast %808 : vector<2x8x1xf32> to vector<2x8x128xf32>
    %817 = arith.mulf %815, %816 : vector<2x8x128xf32>
    %818 = arith.addf %814, %817 : vector<2x8x128xf32>
    %819 = vector.broadcast %757 : vector<2x1x1xf32> to vector<2x8x1xf32>
    %820 = arith.mulf %719, %819 : vector<2x8x1xf32>
    %821 = vector.broadcast %733 : vector<2x1x1xf32> to vector<2x8x1xf32>
    %822 = arith.mulf %778, %821 : vector<2x8x1xf32>
    %823 = arith.addf %820, %822 : vector<2x8x1xf32>
    %824 = vector.broadcast %745 : vector<2x1x1xf32> to vector<2x8x1xf32>
    %825 = arith.mulf %785, %824 : vector<2x8x1xf32>
    %826 = arith.addf %823, %825 : vector<2x8x1xf32>
    %827 = vector.broadcast %3 : f32 to vector<2x8x1xf32>
    %828 = arith.mulf %826, %827 : vector<2x8x1xf32>
    %cst_233 = arith.constant dense<0xFF800000> : vector<2x1xf32>
    %829 = vector.multi_reduction <maximumf>, %828, %cst_233 [1] : vector<2x8x1xf32> to vector<2x1xf32>
    %830 = vector.shape_cast %829 : vector<2x1xf32> to vector<2x1x1xf32>
    %831 = vector.broadcast %830 : vector<2x1x1xf32> to vector<2x8x1xf32>
    %832 = arith.subf %828, %831 : vector<2x8x1xf32>
    %833 = math.exp %832 : vector<2x8x1xf32>
    %cst_234 = arith.constant dense<0.000000e+00> : vector<2x1xf32>
    %834 = vector.multi_reduction <add>, %833, %cst_234 [1] : vector<2x8x1xf32> to vector<2x1xf32>
    %835 = vector.shape_cast %834 : vector<2x1xf32> to vector<2x1x1xf32>
    %836 = vector.broadcast %835 : vector<2x1x1xf32> to vector<2x8x1xf32>
    %837 = arith.divf %833, %836 : vector<2x8x1xf32>
    %c8_i32_235 = arith.constant 8 : i32
    %838 = arith.muli %arg0, %c8_i32_235 : i32
    %c7_i32_236 = arith.constant 7 : i32
    %839 = arith.addi %838, %c7_i32_236 : i32
    %c3_i32_237 = arith.constant 3 : i32
    %840 = arith.muli %839, %c3_i32_237 : i32
    %c0_i32_238 = arith.constant 0 : i32
    %841 = arith.addi %840, %c0_i32_238 : i32
    %c2_i32_239 = arith.constant 2 : i32
    %842 = arith.muli %841, %c2_i32_239 : i32
    %c0_i32_240 = arith.constant 0 : i32
    %843 = arith.addi %842, %c0_i32_240 : i32
    %844 = arith.index_cast %843 : i32 to index
    %845 = memref.load %arg2[%844] : memref<48xf32, #tpu.memory_space<smem>>
    %846 = vector.broadcast %845 : f32 to vector<1x1x1xf32>
    %c1_i32_241 = arith.constant 1 : i32
    %847 = arith.addi %842, %c1_i32_241 : i32
    %848 = arith.index_cast %847 : i32 to index
    %849 = memref.load %arg2[%848] : memref<48xf32, #tpu.memory_space<smem>>
    %850 = vector.broadcast %849 : f32 to vector<1x1x1xf32>
    %851 = tpu.concatenate %846, %850 in 0 : vector<1x1x1xf32>, vector<1x1x1xf32> -> vector<2x1x1xf32>
    %c3_i32_242 = arith.constant 3 : i32
    %852 = arith.muli %839, %c3_i32_242 : i32
    %c1_i32_243 = arith.constant 1 : i32
    %853 = arith.addi %852, %c1_i32_243 : i32
    %c2_i32_244 = arith.constant 2 : i32
    %854 = arith.muli %853, %c2_i32_244 : i32
    %c0_i32_245 = arith.constant 0 : i32
    %855 = arith.addi %854, %c0_i32_245 : i32
    %856 = arith.index_cast %855 : i32 to index
    %857 = memref.load %arg2[%856] : memref<48xf32, #tpu.memory_space<smem>>
    %858 = vector.broadcast %857 : f32 to vector<1x1x1xf32>
    %c1_i32_246 = arith.constant 1 : i32
    %859 = arith.addi %854, %c1_i32_246 : i32
    %860 = arith.index_cast %859 : i32 to index
    %861 = memref.load %arg2[%860] : memref<48xf32, #tpu.memory_space<smem>>
    %862 = vector.broadcast %861 : f32 to vector<1x1x1xf32>
    %863 = tpu.concatenate %858, %862 in 0 : vector<1x1x1xf32>, vector<1x1x1xf32> -> vector<2x1x1xf32>
    %c3_i32_247 = arith.constant 3 : i32
    %864 = arith.muli %839, %c3_i32_247 : i32
    %c2_i32_248 = arith.constant 2 : i32
    %865 = arith.addi %864, %c2_i32_248 : i32
    %c2_i32_249 = arith.constant 2 : i32
    %866 = arith.muli %865, %c2_i32_249 : i32
    %c0_i32_250 = arith.constant 0 : i32
    %867 = arith.addi %866, %c0_i32_250 : i32
    %868 = arith.index_cast %867 : i32 to index
    %869 = memref.load %arg2[%868] : memref<48xf32, #tpu.memory_space<smem>>
    %870 = vector.broadcast %869 : f32 to vector<1x1x1xf32>
    %c1_i32_251 = arith.constant 1 : i32
    %871 = arith.addi %866, %c1_i32_251 : i32
    %872 = arith.index_cast %871 : i32 to index
    %873 = memref.load %arg2[%872] : memref<48xf32, #tpu.memory_space<smem>>
    %874 = vector.broadcast %873 : f32 to vector<1x1x1xf32>
    %875 = tpu.concatenate %870, %874 in 0 : vector<1x1x1xf32>, vector<1x1x1xf32> -> vector<2x1x1xf32>
    %c3_i32_252 = arith.constant 3 : i32
    %876 = arith.muli %839, %c3_i32_252 : i32
    %c1_i32_253 = arith.constant 1 : i32
    %877 = arith.addi %876, %c1_i32_253 : i32
    %c2_i32_254 = arith.constant 2 : i32
    %878 = arith.muli %877, %c2_i32_254 : i32
    %c0_i32_255 = arith.constant 0 : i32
    %879 = arith.addi %878, %c0_i32_255 : i32
    %880 = arith.index_cast %879 : i32 to index
    %881 = memref.load %arg2[%880] : memref<48xf32, #tpu.memory_space<smem>>
    %882 = vector.broadcast %881 : f32 to vector<1x1xf32>
    %c1_i32_256 = arith.constant 1 : i32
    %883 = arith.addi %878, %c1_i32_256 : i32
    %884 = arith.index_cast %883 : i32 to index
    %885 = memref.load %arg2[%884] : memref<48xf32, #tpu.memory_space<smem>>
    %886 = vector.broadcast %885 : f32 to vector<1x1xf32>
    %887 = tpu.concatenate %882, %886 in 0 : vector<1x1xf32>, vector<1x1xf32> -> vector<2x1xf32>
    %c7 = arith.constant 7 : index
    %c0_257 = arith.constant 0 : index
    %c0_258 = arith.constant 0 : index
    %c0_259 = arith.constant 0 : index
    %888 = vector.load %arg6[%c7, %c0_257, %c0_258, %c0_259] : memref<8x2x1x128xf32, #tpu.memory_space<vmem>>, vector<1x2x1x128xf32>
    %889 = vector.shape_cast %888 : vector<1x2x1x128xf32> to vector<2x1x128xf32>
    %890 = vector.extract_strided_slice %837 {offsets = [0, 7, 0], sizes = [2, 1, 1], strides = [1, 1, 1]} : vector<2x8x1xf32> to vector<2x1x1xf32>
    %891 = vector.extract_strided_slice %837 {offsets = [0, 0, 0], sizes = [2, 7, 1], strides = [1, 1, 1]} : vector<2x8x1xf32> to vector<2x7x1xf32>
    %892 = tpu.concatenate %890, %891 in 1 : vector<2x1x1xf32>, vector<2x7x1xf32> -> vector<2x8x1xf32>
    %893 = vector.extract_strided_slice %892 {offsets = [1, 0, 0], sizes = [1, 8, 1], strides = [1, 1, 1]} : vector<2x8x1xf32> to vector<1x8x1xf32>
    %894 = vector.extract_strided_slice %892 {offsets = [0, 0, 0], sizes = [1, 8, 1], strides = [1, 1, 1]} : vector<2x8x1xf32> to vector<1x8x1xf32>
    %895 = tpu.concatenate %893, %894 in 0 : vector<1x8x1xf32>, vector<1x8x1xf32> -> vector<2x8x1xf32>
    %896 = arith.select %7, %895, %892 : vector<2x8x1xi1>, vector<2x8x1xf32>
    %897 = vector.extract_strided_slice %837 {offsets = [0, 1, 0], sizes = [2, 7, 1], strides = [1, 1, 1]} : vector<2x8x1xf32> to vector<2x7x1xf32>
    %898 = vector.extract_strided_slice %837 {offsets = [0, 0, 0], sizes = [2, 1, 1], strides = [1, 1, 1]} : vector<2x8x1xf32> to vector<2x1x1xf32>
    %899 = tpu.concatenate %897, %898 in 1 : vector<2x7x1xf32>, vector<2x1x1xf32> -> vector<2x8x1xf32>
    %900 = vector.extract_strided_slice %899 {offsets = [1, 0, 0], sizes = [1, 8, 1], strides = [1, 1, 1]} : vector<2x8x1xf32> to vector<1x8x1xf32>
    %901 = vector.extract_strided_slice %899 {offsets = [0, 0, 0], sizes = [1, 8, 1], strides = [1, 1, 1]} : vector<2x8x1xf32> to vector<1x8x1xf32>
    %902 = tpu.concatenate %900, %901 in 0 : vector<1x8x1xf32>, vector<1x8x1xf32> -> vector<2x8x1xf32>
    %903 = arith.select %9, %902, %899 : vector<2x8x1xi1>, vector<2x8x1xf32>
    %904 = vector.broadcast %837 : vector<2x8x1xf32> to vector<2x8x128xf32>
    %905 = arith.mulf %818, %904 : vector<2x8x128xf32>
    %cst_260 = arith.constant dense<0.000000e+00> : vector<2x128xf32>
    %906 = vector.multi_reduction <add>, %905, %cst_260 [1] : vector<2x8x128xf32> to vector<2x128xf32>
    %907 = vector.broadcast %887 : vector<2x1xf32> to vector<2x128xf32>
    %908 = arith.mulf %906, %907 : vector<2x128xf32>
    %c7_261 = arith.constant 7 : index
    %c0_262 = arith.constant 0 : index
    %c0_263 = arith.constant 0 : index
    %909 = vector.load %arg7[%c7_261, %c0_262, %c0_263] : memref<8x2x128xf32, #tpu.memory_space<vmem>>, vector<1x2x128xf32>
    %910 = vector.shape_cast %909 : vector<1x2x128xf32> to vector<2x128xf32>
    %911 = vector.shape_cast %908 : vector<2x128xf32> to vector<1x2x128xf32>
    tpu.vector_store %arg7[%c7_261, %c0_262, %c0_263], %911 {strides = array<i32>} : memref<8x2x128xf32, #tpu.memory_space<vmem>>, vector<1x2x128xf32>,
    %cst_264 = arith.constant 1.000000e+00 : f32
    %912 = vector.broadcast %cst_264 : f32 to vector<2x8x1xf32>
    %913 = arith.subf %912, %896 : vector<2x8x1xf32>
    %914 = vector.broadcast %851 : vector<2x1x1xf32> to vector<2x8x1xf32>
    %915 = arith.mulf %914, %913 : vector<2x8x1xf32>
    %916 = vector.broadcast %875 : vector<2x1x1xf32> to vector<2x8x1xf32>
    %917 = arith.addf %916, %915 : vector<2x8x1xf32>
    %cst_265 = arith.constant 1.000000e+00 : f32
    %918 = vector.broadcast %cst_265 : f32 to vector<2x8x1xf32>
    %919 = arith.subf %918, %837 : vector<2x8x1xf32>
    %920 = vector.broadcast %863 : vector<2x1x1xf32> to vector<2x8x1xf32>
    %921 = arith.mulf %920, %919 : vector<2x8x1xf32>
    %922 = arith.addf %917, %921 : vector<2x8x1xf32>
    %923 = vector.broadcast %851 : vector<2x1x1xf32> to vector<2x8x1xf32>
    %924 = arith.mulf %923, %896 : vector<2x8x1xf32>
    %925 = vector.broadcast %863 : vector<2x1x1xf32> to vector<2x8x1xf32>
    %926 = arith.mulf %925, %837 : vector<2x8x1xf32>
    %927 = vector.broadcast %922 : vector<2x8x1xf32> to vector<2x8x128xf32>
    %928 = arith.mulf %818, %927 : vector<2x8x128xf32>
    %929 = vector.broadcast %889 : vector<2x1x128xf32> to vector<2x8x128xf32>
    %930 = vector.broadcast %924 : vector<2x8x1xf32> to vector<2x8x128xf32>
    %931 = arith.mulf %929, %930 : vector<2x8x128xf32>
    %932 = arith.addf %928, %931 : vector<2x8x128xf32>
    %933 = vector.broadcast %4 : vector<2x1x128xf32> to vector<2x8x128xf32>
    %934 = vector.broadcast %926 : vector<2x8x1xf32> to vector<2x8x128xf32>
    %935 = arith.mulf %933, %934 : vector<2x8x128xf32>
    %936 = arith.addf %932, %935 : vector<2x8x128xf32>
    %937 = vector.broadcast %875 : vector<2x1x1xf32> to vector<2x8x1xf32>
    %938 = arith.mulf %837, %937 : vector<2x8x1xf32>
    %939 = vector.broadcast %851 : vector<2x1x1xf32> to vector<2x8x1xf32>
    %940 = arith.mulf %896, %939 : vector<2x8x1xf32>
    %941 = arith.addf %938, %940 : vector<2x8x1xf32>
    %942 = vector.broadcast %863 : vector<2x1x1xf32> to vector<2x8x1xf32>
    %943 = arith.mulf %903, %942 : vector<2x8x1xf32>
    %944 = arith.addf %941, %943 : vector<2x8x1xf32>
    %945 = vector.broadcast %3 : f32 to vector<2x8x1xf32>
    %946 = arith.mulf %944, %945 : vector<2x8x1xf32>
    %cst_266 = arith.constant dense<0xFF800000> : vector<2x1xf32>
    %947 = vector.multi_reduction <maximumf>, %946, %cst_266 [1] : vector<2x8x1xf32> to vector<2x1xf32>
    %948 = vector.shape_cast %947 : vector<2x1xf32> to vector<2x1x1xf32>
    %949 = vector.broadcast %948 : vector<2x1x1xf32> to vector<2x8x1xf32>
    %950 = arith.subf %946, %949 : vector<2x8x1xf32>
    %951 = math.exp %950 : vector<2x8x1xf32>
    %cst_267 = arith.constant dense<0.000000e+00> : vector<2x1xf32>
    %952 = vector.multi_reduction <add>, %951, %cst_267 [1] : vector<2x8x1xf32> to vector<2x1xf32>
    %953 = vector.shape_cast %952 : vector<2x1xf32> to vector<2x1x1xf32>
    %954 = vector.broadcast %953 : vector<2x1x1xf32> to vector<2x8x1xf32>
    %955 = arith.divf %951, %954 : vector<2x8x1xf32>
    %c0_268 = arith.constant 0 : index
    %c0_269 = arith.constant 0 : index
    %c0_270 = arith.constant 0 : index
    %956 = vector.load %arg8[%c0_268, %c0_269, %c0_270] : memref<2x8x128xf32, #tpu.memory_space<vmem>>, vector<2x8x128xf32>
    tpu.vector_store %arg8[%c0_268, %c0_269, %c0_270], %936 {strides = array<i32>} : memref<2x8x128xf32, #tpu.memory_space<vmem>>, vector<2x8x128xf32>,
    %c0_271 = arith.constant 0 : index
    %c0_272 = arith.constant 0 : index
    %c0_273 = arith.constant 0 : index
    %957 = vector.load %arg9[%c0_271, %c0_272, %c0_273] : memref<2x8x1xf32, #tpu.memory_space<vmem>>, vector<2x8x1xf32>
    tpu.vector_store %arg9[%c0_271, %c0_272, %c0_273], %955 {strides = array<i32>} : memref<2x8x1xf32, #tpu.memory_space<vmem>>, vector<2x8x1xf32>,
    return
  }
  func.func @transform_0(%arg0: i32) -> i32 {
    %c0_i32 = arith.constant 0 : i32
    %c0_i32_0 = arith.constant 0 : i32
    return %c0_i32 : i32
  }
  func.func @transform_1(%arg0: i32) -> i32 {
    %c0_i32 = arith.constant 0 : i32
    %c0_i32_0 = arith.constant 0 : i32
    return %c0_i32 : i32
  }
  func.func @transform_2(%arg0: i32) -> (i32, i32, i32) {
    %c0_i32 = arith.constant 0 : i32
    %c0_i32_0 = arith.constant 0 : i32
    %c0_i32_1 = arith.constant 0 : i32
    %c0_i32_2 = arith.constant 0 : i32
    return %c0_i32, %c0_i32_0, %c0_i32_1 : i32, i32, i32
  }
  func.func @transform_3(%arg0: i32) -> (i32, i32, i32) {
    %c0_i32 = arith.constant 0 : i32
    %c0_i32_0 = arith.constant 0 : i32
    %c0_i32_1 = arith.constant 0 : i32
    %c0_i32_2 = arith.constant 0 : i32
    return %c0_i32, %c0_i32_0, %c0_i32_1 : i32, i32, i32
  }
  func.func @transform_4(%arg0: i32) -> (i32, i32, i32) {
    %c0_i32 = arith.constant 0 : i32
    %c0_i32_0 = arith.constant 0 : i32
    %c0_i32_1 = arith.constant 0 : i32
    %c0_i32_2 = arith.constant 0 : i32
    return %c0_i32, %c0_i32_0, %c0_i32_1 : i32, i32, i32
  }
  func.func @transform_5(%arg0: i32) -> (i32, i32, i32, i32) {
    %c0_i32 = arith.constant 0 : i32
    %c0_i32_0 = arith.constant 0 : i32
    %c0_i32_1 = arith.constant 0 : i32
    %c0_i32_2 = arith.constant 0 : i32
    return %arg0, %c0_i32, %c0_i32_0, %c0_i32_1 : i32, i32, i32, i32
  }
  func.func @transform_6(%arg0: i32) -> (i32, i32, i32) {
    %c0_i32 = arith.constant 0 : i32
    %c0_i32_0 = arith.constant 0 : i32
    %c0_i32_1 = arith.constant 0 : i32
    return %arg0, %c0_i32, %c0_i32_0 : i32, i32, i32
  }
  func.func @transform_7(%arg0: i32) -> (i32, i32, i32) {
    %c0_i32 = arith.constant 0 : i32
    %c0_i32_0 = arith.constant 0 : i32
    %c0_i32_1 = arith.constant 0 : i32
    %c0_i32_2 = arith.constant 0 : i32
    return %c0_i32, %c0_i32_0, %c0_i32_1 : i32, i32, i32
  }
  func.func @transform_8(%arg0: i32) -> (i32, i32, i32) {
    %c0_i32 = arith.constant 0 : i32
    %c0_i32_0 = arith.constant 0 : i32
    %c0_i32_1 = arith.constant 0 : i32
    %c0_i32_2 = arith.constant 0 : i32
    return %c0_i32, %c0_i32_0, %c0_i32_1 : i32, i32, i32
  }
}

</mosaic_0001>

<llo_original>
// kernel: tpu_custom_call.1
$region0: #{tpu_custom_call.1}
  #allocation0 [shape = 'u32[]', space=smem, size = 0x4, offset = 0x4, fixed_abs, tag = 'smem constant byte address 0x4 - core index']
  #allocation1 [shape = 'u32[72,128]{1,0:T(1,128)}', space=vmem, size = 0x9000, scoped, tag = 'internal scratch']
  #allocation2 [shape = 'f32[1]{0:T(128)S(6)}', space=smem, size = 0x200, scoped, tag = 'scoped memory for tpu_custom_call.1']
  %s0 = inlined_call_operand.<no memory space> [shape: f32[1], index: 0, kind: input, shape index: {}]
  %s1 = inlined_call_operand.vmem [shape: f32[48], index: 1, kind: input, shape index: {}]
  %s2 = inlined_call_operand.vmem [shape: f32[2,8,128], index: 2, kind: input, shape index: {}]
  %s3 = inlined_call_operand.vmem [shape: f32[2,8,1], index: 3, kind: input, shape index: {}]
  %s4 = inlined_call_operand.vmem [shape: f32[2,1,128], index: 4, kind: input, shape index: {}]
  %s5 = inlined_call_operand.hbm [shape: f32[8,2,1,128], index: 5, kind: input, shape index: {}]
  %s6 = inlined_call_operand.hbm [shape: f32[8,2,128], index: 6, kind: output, shape index: {0}]
  %s7 = inlined_call_operand.hbm [shape: f32[2,8,128], index: 7, kind: output, shape index: {1}]
  %s8 = inlined_call_operand.vmem [shape: f32[2,8,1], index: 8, kind: output, shape index: {2}]
  %9 = xla_tuple %s6, %s7, %s8
  %s10 = sld [smem:[#allocation0]]
  $region62: #{tpu_custom_call.1} parent=0
    _
  %s12 = ssub.s32 1, %s10
  %s13 = scalar_select 0, %s12, %s10
  %14 = sst [smem:[#allocation2]] %s0
  $region1: #{tpu_custom_call.1} parent=0
    #allocation3 [shape = 'u8[512]{0}', space=smem, size = 0x200, scoped, tag = 'input window, operand 1, single buffered']
    #allocation4 [shape = 's32[1]{0}', space=sflag, size = 0x4, scoped, tag = 'scoped memory for tpu_custom_call.1']
    #allocation5 [shape = 's32[1]{0}', space=sflag, size = 0x4, scoped, tag = 'scoped memory for tpu_custom_call.1']
    #allocation6 [shape = 's32[1]{0}', space=sflag, size = 0x4, scoped, tag = 'scoped memory for tpu_custom_call.1']
    #allocation7 [shape = 'u8[8192]{0}', space=vmem, size = 0x2000, scoped, tag = 'input window, operand 5, single buffered']
    #allocation8 [shape = 'u8[8192]{0}', space=vmem, size = 0x2000, scoped, tag = 'output window, operand 0, single buffered']
    #allocation9 [shape = 'u8[8192]{0}', space=vmem, size = 0x2000, scoped, tag = 'output window, operand 1, single buffered']
    #allocation10 [shape = 's32[1]{0}', space=sflag, size = 0x4, scoped, tag = 'scoped memory for tpu_custom_call.1']
    %15 = vsyncpa [#allocation6], 0
    %16 = vsyncpa [#allocation4], 0
    %17 = vsyncpa [#allocation5], 0
    %18 = vsyncpa [#allocation10], 0
    // Predicated region
    $region2: #{tpu_custom_call.1} parent=1 // pred_check
      _
    $region3: #{tpu_custom_call.1} parent=1 // pred_check_branch
      %20 = sbr.rel (0) target = $region5
    $region4: #{tpu_custom_call.1} parent=1 // pred_region
      _
    $region5: #{tpu_custom_call.1} parent=1 // pred_fallthru
      _
    // Predicated region
    $region6: #{tpu_custom_call.1} parent=1 // pred_check
      _
    $region7: #{tpu_custom_call.1} parent=1 // pred_check_branch
      %22 = sbr.rel (0) target = $region9
    $region8: #{tpu_custom_call.1} parent=1 // pred_region
      %24 = vsyncadd [#allocation6], 0
      %s26 = sshll.u32 %s1, 4
      %s27 = int_to_ptr.vmem [resolvable:$true] %s26
      %29 = dma.vmem_to_smem %s27, 16, [#allocation3], [#allocation6]
    $region9: #{tpu_custom_call.1} parent=1 // pred_fallthru
      _
    // Predicated region
    $region10: #{tpu_custom_call.1} parent=1 // pred_check
      _
    $region11: #{tpu_custom_call.1} parent=1 // pred_check_branch
      %31 = sbr.rel (0) target = $region13
    $region12: #{tpu_custom_call.1} parent=1 // pred_region
      _
    $region13: #{tpu_custom_call.1} parent=1 // pred_fallthru
      _
    // Predicated region
    $region14: #{tpu_custom_call.1} parent=1 // pred_check
      _
    $region15: #{tpu_custom_call.1} parent=1 // pred_check_branch
      %33 = sbr.rel (0) target = $region17
    $region16: #{tpu_custom_call.1} parent=1 // pred_region
      _
    $region17: #{tpu_custom_call.1} parent=1 // pred_fallthru
      _
    // Predicated region
    $region18: #{tpu_custom_call.1} parent=1 // pred_check
      _
    $region19: #{tpu_custom_call.1} parent=1 // pred_check_branch
      %35 = sbr.rel (0) target = $region21
    $region20: #{tpu_custom_call.1} parent=1 // pred_region
      _
    $region21: #{tpu_custom_call.1} parent=1 // pred_fallthru
      _
    // Predicated region
    $region22: #{tpu_custom_call.1} parent=1 // pred_check
      _
    $region23: #{tpu_custom_call.1} parent=1 // pred_check_branch
      %37 = sbr.rel (0) target = $region25
    $region24: #{tpu_custom_call.1} parent=1 // pred_region
      %39 = vsyncadd [#allocation4], 0
      %s40 = sshll.u32 %s5, 4
      %s41 = int_to_ptr.hbm [resolvable:$true] %s40
      %s42 = sshll.u32 [#allocation7], 4
      %s43 = int_to_ptr.vmem [resolvable:$true] %s42
      %48 = dma.hbm_to_vmem [thread:$0]  %s41, 256, %s43, [#allocation4], 16, 16, 1
    $region25: #{tpu_custom_call.1} parent=1 // pred_fallthru
      _
    // Predicated region
    $region26: #{tpu_custom_call.1} parent=1 // pred_check
      _
    $region27: #{tpu_custom_call.1} parent=1 // pred_check_branch
      %50 = sbr.rel (0) target = $region29
    $region28: #{tpu_custom_call.1} parent=1 // pred_region
      %52 = dma.done [#allocation6], 16
    $region29: #{tpu_custom_call.1} parent=1 // pred_fallthru
      _
    // Predicated region
    $region30: #{tpu_custom_call.1} parent=1 // pred_check
      _
    $region31: #{tpu_custom_call.1} parent=1 // pred_check_branch
      %54 = sbr.rel (0) target = $region33
    $region32: #{tpu_custom_call.1} parent=1 // pred_region
      %56 = dma.done [#allocation4], 256
    $region33: #{tpu_custom_call.1} parent=1 // pred_fallthru
      _
    %57 = sfence
    %p58 = scmp.eq.s32.totalorder 0, 0
    // Predicated region
    $region34: #{tpu_custom_call.1} parent=1 // pred_check
      %p59 = pneg %p58
    $region35: #{tpu_custom_call.1} parent=1 // pred_check_branch
      %61 = sbr.rel (%p59) target = $region37
    $region36: #{tpu_custom_call.1} parent=1 // pred_region
      %v62 = vld [vmem:[%s2] sm:$0xff]
      %v63 = vld [vmem:[%s2 + $0x8] sm:$0xff]
      %64 = vst [vmem:[#allocation9] sm:$0xff] %v62
      %65 = vst [vmem:[#allocation9 + $0x8] sm:$0xff] %v63
      %v66 = vld [vmem:[%s3] sm:$0xff]
      %v67 = vld [vmem:[%s3 + $0x8] sm:$0xff]
      %vm68 = vcmask 7168
      %69 = vst.msk [vmem:[%s8] sm:$0xff] %vm68, %v66
      %70 = vst.msk [vmem:[%s8 + $0x8] sm:$0xff] %vm68, %v67
    $region37: #{tpu_custom_call.1} parent=1 // pred_fallthru
      _
    %s71 = sld [smem:[#allocation2]]
    %v72 = vld [vmem:[%s4] sm:$0x1]
    %v73 = vld [vmem:[%s4 + $0x1] sm:$0x1]
    %v74 = vlaneseq
    %v75 = vshrl.u32 %v74, 7
    %vm76 = vcmp.eq.s32.totalorder %v75, 0
    %vm77 = vcmp.eq.s32.totalorder %v75, 7
    %v78 = vld [vmem:[#allocation9] sm:$0xff]
    %v79 = vld [vmem:[#allocation9 + $0x8] sm:$0xff]
    %v80 = vld [vmem:[%s8] sm:$0xff]
    %v81 = vld [vmem:[%s8 + $0x8] sm:$0xff]
    %s82 = smul.u32 0, 48
    %s83 = sld [smem:[#allocation3 + %s82]]
    %v84 = vstv %s83
    %s85 = sadd.s32 %s82, 1
    %s86 = sld [smem:[#allocation3 + %s85]]
    %v87 = vstv %s86
    %s88 = smul.u32 0, 24
    %s89 = sadd.s32 %s88, 1
    %s90 = smul.u32 %s89, 2
    %s91 = sld [smem:[#allocation3 + %s90]]
    %v92 = vstv %s91
    %s93 = sadd.s32 %s90, 1
    %s94 = sld [smem:[#allocation3 + %s93]]
    %v95 = vstv %s94
    %s96 = sadd.s32 %s88, 2
    %s97 = smul.u32 %s96, 2
    %s98 = sld [smem:[#allocation3 + %s97]]
    %v99 = vstv %s98
    %s100 = sadd.s32 %s97, 1
    %s101 = sld [smem:[#allocation3 + %s100]]
    %v102 = vstv %s101
    %vm103 = vcmask 1040384
    %v104 = vsel %vm103, %v92, %v95
    %v105 = vld [vmem:[#allocation7] sm:$0x1]
    %v106 = vld [vmem:[#allocation7 + $0x1] sm:$0x1]
    %v109 = vrot.slane %v80, 7
    %v110 = vrot.slane %v81, 7
    %v113 = vsel %vm103, %v109, %v109
    %v114 = vsel %vm103, %v110, %v110
    %v115 = vsel %vm76, %v114, %v113
    %v116 = vsel %vm76, %v113, %v114
    %v117 = vrot.slane %v80, 1
    %v118 = vrot.slane %v81, 1
    %vm121 = vcmask 1046528
    %v122 = vsel %vm121, %v117, %v117
    %v123 = vsel %vm121, %v118, %v118
    %v124 = vsel %vm77, %v123, %v122
    %v125 = vsel %vm77, %v122, %v123
    %126 = vset.pattern.permute.xlu0 0
    %127 = vperm.xlu0 %126, %v80
    %v128 = vpop.permute.xlu0 %127
    %130 = vset.pattern.permute.xlu0 0
    %131 = vperm.xlu0 %130, %v81
    %v132 = vpop.permute.xlu0 %131
    %v134 = vmul.f32 %v78, %v128
    %v135 = vmul.f32 %v79, %v132
    %v136 = vrot.slane %v134, 4
    %v137 = vadd.f32 %v134, %v136
    %v138 = vrot.slane %v137, 2
    %v139 = vadd.f32 %v137, %v138
    %v140 = vrot.slane %v139, 1
    %v141 = vadd.f32 %v139, %v140
    %v142 = vrot.slane %v135, 4
    %v143 = vadd.f32 %v135, %v142
    %v144 = vrot.slane %v143, 2
    %v145 = vadd.f32 %v143, %v144
    %v146 = vrot.slane %v145, 1
    %v147 = vadd.f32 %v145, %v146
    %149 = vset.pattern.permute.xlu0 0
    %150 = vperm.xlu0 %149, %v104
    %v151 = vpop.permute.xlu0 %150
    %v152 = vrot.slane %v151, 1
    %v155 = vmul.f32 %v141, %v151
    %v156 = vmul.f32 %v147, %v152
    %v159 = vrot.slane %v156, 7
    %vm160 = vcmask 1041409
    %v161 = vsel %vm160, %v159, %v155
    %163 = vst [vmem:[#allocation8] sm:$0x3] %v161
    %v164 = vsub.f32 1.0, %v115
    %v165 = vsub.f32 1.0, %v116
    %v166 = vperm.slane %v84, 0
    %v167 = vperm.slane %v87, 0
    %v168 = vmul.f32 %v166, %v164
    %v169 = vmul.f32 %v167, %v165
    %v170 = vperm.slane %v99, 0
    %v171 = vperm.slane %v102, 0
    %v172 = vadd.f32 %v170, %v168
    %v173 = vadd.f32 %v171, %v169
    %v174 = vsub.f32 1.0, %v80
    %v175 = vsub.f32 1.0, %v81
    %v176 = vperm.slane %v92, 0
    %v177 = vperm.slane %v95, 0
    %v178 = vmul.f32 %v176, %v174
    %v179 = vmul.f32 %v177, %v175
    %v180 = vadd.f32 %v172, %v178
    %v181 = vadd.f32 %v173, %v179
    %v182 = vmul.f32 %v166, %v115
    %v183 = vmul.f32 %v167, %v116
    %v184 = vmul.f32 %v176, %v80
    %v185 = vmul.f32 %v177, %v81
    %187 = vset.pattern.permute.xlu0 0
    %188 = vperm.xlu0 %187, %v180
    %v189 = vpop.permute.xlu0 %188
    %192 = vset.pattern.permute.xlu0 0
    %193 = vperm.xlu0 %192, %v181
    %v194 = vpop.permute.xlu0 %193
    %v196 = vmul.f32 %v78, %v189
    %v197 = vmul.f32 %v79, %v194
    %v200 = vperm.slane %v105, 0
    %v201 = vperm.slane %v106, 0
    %205 = vset.pattern.permute.xlu0 0
    %206 = vperm.xlu0 %205, %v182
    %v207 = vpop.permute.xlu0 %206
    %210 = vset.pattern.permute.xlu0 0
    %211 = vperm.xlu0 %210, %v183
    %v212 = vpop.permute.xlu0 %211
    %v214 = vmul.f32 %v200, %v207
    %v215 = vmul.f32 %v201, %v212
    %v216 = vadd.f32 %v196, %v214
    %v217 = vadd.f32 %v197, %v215
    %v220 = vperm.slane %v72, 0
    %v221 = vperm.slane %v73, 0
    %225 = vset.pattern.permute.xlu0 0
    %226 = vperm.xlu0 %225, %v184
    %v227 = vpop.permute.xlu0 %226
    %230 = vset.pattern.permute.xlu0 0
    %231 = vperm.xlu0 %230, %v185
    %v232 = vpop.permute.xlu0 %231
    %v234 = vmul.f32 %v220, %v227
    %v235 = vmul.f32 %v221, %v232
    %v236 = vadd.f32 %v216, %v234
    %v237 = vadd.f32 %v217, %v235
    %v238 = vmul.f32 %v80, %v170
    %v239 = vmul.f32 %v81, %v171
    %v240 = vadd.f32 %v238, %v182
    %v241 = vadd.f32 %v239, %v183
    %v242 = vmul.f32 %v124, %v176
    %v243 = vmul.f32 %v125, %v177
    %v244 = vadd.f32 %v240, %v242
    %v245 = vadd.f32 %v241, %v243
    %v246 = vstv %s71
    %v247 = vmul.f32 %v244, %v246
    %v248 = vmul.f32 %v245, %v246
    %vm249 = vcmask 7168
    %v250 = vsel %vm249, %v247, -inf
    %v251 = vrot.slane %v250, 4
    %v252 = vmax.f32 %v250, %v251
    %v253 = vrot.slane %v252, 2
    %v254 = vmax.f32 %v252, %v253
    %v255 = vrot.slane %v254, 1
    %v256 = vmax.f32 %v254, %v255
    %v257 = vsel %vm249, %v248, -inf
    %v258 = vrot.slane %v257, 4
    %v259 = vmax.f32 %v257, %v258
    %v260 = vrot.slane %v259, 2
    %v261 = vmax.f32 %v259, %v260
    %v262 = vrot.slane %v261, 1
    %v263 = vmax.f32 %v261, %v262
    %v264 = vsub.f32 %v247, %v256
    %v265 = vsub.f32 %v248, %v263
    %v266 = vmul.f32 %v264, 1.442695
    %v267 = vpow.pop %v266
    %v268 = vmul.f32 %v265, 1.442695
    %v269 = vpow.pop %v268
    %v270 = vsel %vm249, %v267, 0.0
    %v271 = vrot.slane %v270, 4
    %v272 = vadd.f32 %v270, %v271
    %v273 = vrot.slane %v272, 2
    %v274 = vadd.f32 %v272, %v273
    %v275 = vrot.slane %v274, 1
    %v276 = vadd.f32 %v274, %v275
    %v277 = vsel %vm249, %v269, 0.0
    %v278 = vrot.slane %v277, 4
    %v279 = vadd.f32 %v277, %v278
    %v280 = vrot.slane %v279, 2
    %v281 = vadd.f32 %v279, %v280
    %v282 = vrot.slane %v281, 1
    %v283 = vadd.f32 %v281, %v282
    %v284 = vrcp.pop %v276
    %v285 = vmul.f32 %v276, %v284
    %v286 = vsub.f32 1.0, %v285
    %v287 = vmul.f32 %v284, %v286
    %v288 = vadd.f32 %v284, %v287
    %vm289 = vweird.f32 %v276
    %vm290 = vweird.f32 %v284
    %vm291 = vmor %vm289, %vm290
    %v292 = vsel %vm291, %v284, %v288
    %v293 = vand.u32 2147483647, %v276
    %vm294 = vcmp.eq.f32.partialorder %v293, 8.507059e+37
    %v295 = vand.u32 %v276, 2147483648
    %v296 = vor.u32 1.1754944e-38, %v295
    %v297 = vsel %vm294, %v296, %v292
    %v298 = vmul.f32 %v267, %v297
    %v299 = vrcp.pop %v283
    %v300 = vmul.f32 %v283, %v299
    %v301 = vsub.f32 1.0, %v300
    %v302 = vmul.f32 %v299, %v301
    %v303 = vadd.f32 %v299, %v302
    %vm304 = vweird.f32 %v283
    %vm305 = vweird.f32 %v299
    %vm306 = vmor %vm304, %vm305
    %v307 = vsel %vm306, %v299, %v303
    %v308 = vand.u32 2147483647, %v283
    %vm309 = vcmp.eq.f32.partialorder %v308, 8.507059e+37
    %v310 = vand.u32 %v283, 2147483648
    %v311 = vor.u32 1.1754944e-38, %v310
    %v312 = vsel %vm309, %v311, %v307
    %v313 = vmul.f32 %v269, %v312
    %s314 = smul.u32 0, 8
    %s315 = sadd.s32 %s314, 1
    %s316 = smul.u32 %s315, 6
    %s317 = sld [smem:[#allocation3 + %s316]]
    %v318 = vstv %s317
    %s319 = sadd.s32 %s316, 1
    %s320 = sld [smem:[#allocation3 + %s319]]
    %v321 = vstv %s320
    %s322 = smul.u32 %s315, 3
    %s323 = sadd.s32 %s322, 1
    %s324 = smul.u32 %s323, 2
    %s325 = sld [smem:[#allocation3 + %s324]]
    %v326 = vstv %s325
    %s327 = sadd.s32 %s324, 1
    %s328 = sld [smem:[#allocation3 + %s327]]
    %v329 = vstv %s328
    %s330 = sadd.s32 %s322, 2
    %s331 = smul.u32 %s330, 2
    %s332 = sld [smem:[#allocation3 + %s331]]
    %v333 = vstv %s332
    %s334 = sadd.s32 %s331, 1
    %s335 = sld [smem:[#allocation3 + %s334]]
    %v336 = vstv %s335
    %v337 = vsel %vm103, %v326, %v329
    %s338 = scalar_lea.vmem [#allocation7], 2
    %v339 = vld [vmem:[%s338] sm:$0x1]
    %v340 = vld [vmem:[%s338 + $0x1] sm:$0x1]
    %v343 = vrot.slane %v298, 7
    %v344 = vrot.slane %v313, 7
    %v347 = vsel %vm103, %v343, %v343
    %v348 = vsel %vm103, %v344, %v344
    %v349 = vsel %vm76, %v348, %v347
    %v350 = vsel %vm76, %v347, %v348
    %v351 = vrot.slane %v298, 1
    %v352 = vrot.slane %v313, 1
    %v355 = vsel %vm121, %v351, %v351
    %v356 = vsel %vm121, %v352, %v352
    %v357 = vsel %vm77, %v356, %v355
    %v358 = vsel %vm77, %v355, %v356
    %359 = vset.pattern.permute.xlu0 0
    %360 = vperm.xlu0 %359, %v298
    %v361 = vpop.permute.xlu0 %360
    %363 = vset.pattern.permute.xlu0 0
    %364 = vperm.xlu0 %363, %v313
    %v365 = vpop.permute.xlu0 %364
    %v367 = vmul.f32 %v236, %v361
    %v368 = vmul.f32 %v237, %v365
    %v369 = vrot.slane %v367, 4
    %v370 = vadd.f32 %v367, %v369
    %v371 = vrot.slane %v370, 2
    %v372 = vadd.f32 %v370, %v371
    %v373 = vrot.slane %v372, 1
    %v374 = vadd.f32 %v372, %v373
    %v375 = vrot.slane %v368, 4
    %v376 = vadd.f32 %v368, %v375
    %v377 = vrot.slane %v376, 2
    %v378 = vadd.f32 %v376, %v377
    %v379 = vrot.slane %v378, 1
    %v380 = vadd.f32 %v378, %v379
    %382 = vset.pattern.permute.xlu0 0
    %383 = vperm.xlu0 %382, %v337
    %v384 = vpop.permute.xlu0 %383
    %v385 = vrot.slane %v384, 1
    %v388 = vmul.f32 %v374, %v384
    %v389 = vmul.f32 %v380, %v385
    %v392 = vrot.slane %v389, 7
    %v393 = vsel %vm160, %v392, %v388
    %s395 = scalar_lea.vmem [#allocation8], 2
    %396 = vst [vmem:[%s395] sm:$0x3] %v393
    %v397 = vsub.f32 1.0, %v349
    %v398 = vsub.f32 1.0, %v350
    %v399 = vperm.slane %v318, 0
    %v400 = vperm.slane %v321, 0
    %v401 = vmul.f32 %v399, %v397
    %v402 = vmul.f32 %v400, %v398
    %v403 = vperm.slane %v333, 0
    %v404 = vperm.slane %v336, 0
    %v405 = vadd.f32 %v403, %v401
    %v406 = vadd.f32 %v404, %v402
    %v407 = vsub.f32 1.0, %v298
    %v408 = vsub.f32 1.0, %v313
    %v409 = vperm.slane %v326, 0
    %v410 = vperm.slane %v329, 0
    %v411 = vmul.f32 %v409, %v407
    %v412 = vmul.f32 %v410, %v408
    %v413 = vadd.f32 %v405, %v411
    %v414 = vadd.f32 %v406, %v412
    %v415 = vmul.f32 %v399, %v349
    %v416 = vmul.f32 %v400, %v350
    %v417 = vmul.f32 %v409, %v298
    %v418 = vmul.f32 %v410, %v313
    %420 = vset.pattern.permute.xlu0 0
    %421 = vperm.xlu0 %420, %v413
    %v422 = vpop.permute.xlu0 %421
    %425 = vset.pattern.permute.xlu0 0
    %426 = vperm.xlu0 %425, %v414
    %v427 = vpop.permute.xlu0 %426
    %v429 = vmul.f32 %v236, %v422
    %v430 = vmul.f32 %v237, %v427
    %v433 = vperm.slane %v339, 0
    %v434 = vperm.slane %v340, 0
    %438 = vset.pattern.permute.xlu0 0
    %439 = vperm.xlu0 %438, %v415
    %v440 = vpop.permute.xlu0 %439
    %443 = vset.pattern.permute.xlu0 0
    %444 = vperm.xlu0 %443, %v416
    %v445 = vpop.permute.xlu0 %444
    %v447 = vmul.f32 %v433, %v440
    %v448 = vmul.f32 %v434, %v445
    %v449 = vadd.f32 %v429, %v447
    %v450 = vadd.f32 %v430, %v448
    %452 = vset.pattern.permute.xlu0 0
    %453 = vperm.xlu0 %452, %v417
    %v454 = vpop.permute.xlu0 %453
    %457 = vset.pattern.permute.xlu0 0
    %458 = vperm.xlu0 %457, %v418
    %v459 = vpop.permute.xlu0 %458
    %v461 = vmul.f32 %v220, %v454
    %v462 = vmul.f32 %v221, %v459
    %v463 = vadd.f32 %v449, %v461
    %v464 = vadd.f32 %v450, %v462
    %v465 = vmul.f32 %v298, %v403
    %v466 = vmul.f32 %v313, %v404
    %v467 = vadd.f32 %v465, %v415
    %v468 = vadd.f32 %v466, %v416
    %v469 = vmul.f32 %v357, %v409
    %v470 = vmul.f32 %v358, %v410
    %v471 = vadd.f32 %v467, %v469
    %v472 = vadd.f32 %v468, %v470
    %v473 = vmul.f32 %v471, %v246
    %v474 = vmul.f32 %v472, %v246
    %v475 = vsel %vm249, %v473, -inf
    %v476 = vrot.slane %v475, 4
    %v477 = vmax.f32 %v475, %v476
    %v478 = vrot.slane %v477, 2
    %v479 = vmax.f32 %v477, %v478
    %v480 = vrot.slane %v479, 1
    %v481 = vmax.f32 %v479, %v480
    %v482 = vsel %vm249, %v474, -inf
    %v483 = vrot.slane %v482, 4
    %v484 = vmax.f32 %v482, %v483
    %v485 = vrot.slane %v484, 2
    %v486 = vmax.f32 %v484, %v485
    %v487 = vrot.slane %v486, 1
    %v488 = vmax.f32 %v486, %v487
    %v489 = vsub.f32 %v473, %v481
    %v490 = vsub.f32 %v474, %v488
    %v491 = vmul.f32 %v489, 1.442695
    %v492 = vpow.pop %v491
    %v493 = vmul.f32 %v490, 1.442695
    %v494 = vpow.pop %v493
    %v495 = vsel %vm249, %v492, 0.0
    %v496 = vrot.slane %v495, 4
    %v497 = vadd.f32 %v495, %v496
    %v498 = vrot.slane %v497, 2
    %v499 = vadd.f32 %v497, %v498
    %v500 = vrot.slane %v499, 1
    %v501 = vadd.f32 %v499, %v500
    %v502 = vsel %vm249, %v494, 0.0
    %v503 = vrot.slane %v502, 4
    %v504 = vadd.f32 %v502, %v503
    %v505 = vrot.slane %v504, 2
    %v506 = vadd.f32 %v504, %v505
    %v507 = vrot.slane %v506, 1
    %v508 = vadd.f32 %v506, %v507
    %v509 = vrcp.pop %v501
    %v510 = vmul.f32 %v501, %v509
    %v511 = vsub.f32 1.0, %v510
    %v512 = vmul.f32 %v509, %v511
    %v513 = vadd.f32 %v509, %v512
    %vm514 = vweird.f32 %v501
    %vm515 = vweird.f32 %v509
    %vm516 = vmor %vm514, %vm515
    %v517 = vsel %vm516, %v509, %v513
    %v518 = vand.u32 2147483647, %v501
    %vm519 = vcmp.eq.f32.partialorder %v518, 8.507059e+37
    %v520 = vand.u32 %v501, 2147483648
    %v521 = vor.u32 1.1754944e-38, %v520
    %v522 = vsel %vm519, %v521, %v517
    %v523 = vmul.f32 %v492, %v522
    %v524 = vrcp.pop %v508
    %v525 = vmul.f32 %v508, %v524
    %v526 = vsub.f32 1.0, %v525
    %v527 = vmul.f32 %v524, %v526
    %v528 = vadd.f32 %v524, %v527
    %vm529 = vweird.f32 %v508
    %vm530 = vweird.f32 %v524
    %vm531 = vmor %vm529, %vm530
    %v532 = vsel %vm531, %v524, %v528
    %v533 = vand.u32 2147483647, %v508
    %vm534 = vcmp.eq.f32.partialorder %v533, 8.507059e+37
    %v535 = vand.u32 %v508, 2147483648
    %v536 = vor.u32 1.1754944e-38, %v535
    %v537 = vsel %vm534, %v536, %v532
    %v538 = vmul.f32 %v494, %v537
    %s539 = sadd.s32 %s314, 2
    %s540 = smul.u32 %s539, 6
    %s541 = sld [smem:[#allocation3 + %s540]]
    %v542 = vstv %s541
    %s543 = sadd.s32 %s540, 1
    %s544 = sld [smem:[#allocation3 + %s543]]
    %v545 = vstv %s544
    %s546 = smul.u32 %s539, 3
    %s547 = sadd.s32 %s546, 1
    %s548 = smul.u32 %s547, 2
    %s549 = sld [smem:[#allocation3 + %s548]]
    %v550 = vstv %s549
    %s551 = sadd.s32 %s548, 1
    %s552 = sld [smem:[#allocation3 + %s551]]
    %v553 = vstv %s552
    %s554 = sadd.s32 %s546, 2
    %s555 = smul.u32 %s554, 2
    %s556 = sld [smem:[#allocation3 + %s555]]
    %v557 = vstv %s556
    %s558 = sadd.s32 %s555, 1
    %s559 = sld [smem:[#allocation3 + %s558]]
    %v560 = vstv %s559
    %v561 = vsel %vm103, %v550, %v553
    %s562 = scalar_lea.vmem [#allocation7], 4
    %v563 = vld [vmem:[%s562] sm:$0x1]
    %v564 = vld [vmem:[%s562 + $0x1] sm:$0x1]
    %v567 = vrot.slane %v523, 7
    %v568 = vrot.slane %v538, 7
    %v571 = vsel %vm103, %v567, %v567
    %v572 = vsel %vm103, %v568, %v568
    %v573 = vsel %vm76, %v572, %v571
    %v574 = vsel %vm76, %v571, %v572
    %v575 = vrot.slane %v523, 1
    %v576 = vrot.slane %v538, 1
    %v579 = vsel %vm121, %v575, %v575
    %v580 = vsel %vm121, %v576, %v576
    %v581 = vsel %vm77, %v580, %v579
    %v582 = vsel %vm77, %v579, %v580
    %583 = vset.pattern.permute.xlu0 0
    %584 = vperm.xlu0 %583, %v523
    %v585 = vpop.permute.xlu0 %584
    %587 = vset.pattern.permute.xlu0 0
    %588 = vperm.xlu0 %587, %v538
    %v589 = vpop.permute.xlu0 %588
    %v591 = vmul.f32 %v463, %v585
    %v592 = vmul.f32 %v464, %v589
    %v593 = vrot.slane %v591, 4
    %v594 = vadd.f32 %v591, %v593
    %v595 = vrot.slane %v594, 2
    %v596 = vadd.f32 %v594, %v595
    %v597 = vrot.slane %v596, 1
    %v598 = vadd.f32 %v596, %v597
    %v599 = vrot.slane %v592, 4
    %v600 = vadd.f32 %v592, %v599
    %v601 = vrot.slane %v600, 2
    %v602 = vadd.f32 %v600, %v601
    %v603 = vrot.slane %v602, 1
    %v604 = vadd.f32 %v602, %v603
    %606 = vset.pattern.permute.xlu0 0
    %607 = vperm.xlu0 %606, %v561
    %v608 = vpop.permute.xlu0 %607
    %v609 = vrot.slane %v608, 1
    %v612 = vmul.f32 %v598, %v608
    %v613 = vmul.f32 %v604, %v609
    %v616 = vrot.slane %v613, 7
    %v617 = vsel %vm160, %v616, %v612
    %s619 = scalar_lea.vmem [#allocation8], 4
    %620 = vst [vmem:[%s619] sm:$0x3] %v617
    %v621 = vsub.f32 1.0, %v573
    %v622 = vsub.f32 1.0, %v574
    %v623 = vperm.slane %v542, 0
    %v624 = vperm.slane %v545, 0
    %v625 = vmul.f32 %v623, %v621
    %v626 = vmul.f32 %v624, %v622
    %v627 = vperm.slane %v557, 0
    %v628 = vperm.slane %v560, 0
    %v629 = vadd.f32 %v627, %v625
    %v630 = vadd.f32 %v628, %v626
    %v631 = vsub.f32 1.0, %v523
    %v632 = vsub.f32 1.0, %v538
    %v633 = vperm.slane %v550, 0
    %v634 = vperm.slane %v553, 0
    %v635 = vmul.f32 %v633, %v631
    %v636 = vmul.f32 %v634, %v632
    %v637 = vadd.f32 %v629, %v635
    %v638 = vadd.f32 %v630, %v636
    %v639 = vmul.f32 %v623, %v573
    %v640 = vmul.f32 %v624, %v574
    %v641 = vmul.f32 %v633, %v523
    %v642 = vmul.f32 %v634, %v538
    %644 = vset.pattern.permute.xlu0 0
    %645 = vperm.xlu0 %644, %v637
    %v646 = vpop.permute.xlu0 %645
    %649 = vset.pattern.permute.xlu0 0
    %650 = vperm.xlu0 %649, %v638
    %v651 = vpop.permute.xlu0 %650
    %v653 = vmul.f32 %v463, %v646
    %v654 = vmul.f32 %v464, %v651
    %v657 = vperm.slane %v563, 0
    %v658 = vperm.slane %v564, 0
    %662 = vset.pattern.permute.xlu0 0
    %663 = vperm.xlu0 %662, %v639
    %v664 = vpop.permute.xlu0 %663
    %667 = vset.pattern.permute.xlu0 0
    %668 = vperm.xlu0 %667, %v640
    %v669 = vpop.permute.xlu0 %668
    %v671 = vmul.f32 %v657, %v664
    %v672 = vmul.f32 %v658, %v669
    %v673 = vadd.f32 %v653, %v671
    %v674 = vadd.f32 %v654, %v672
    %676 = vset.pattern.permute.xlu0 0
    %677 = vperm.xlu0 %676, %v641
    %v678 = vpop.permute.xlu0 %677
    %681 = vset.pattern.permute.xlu0 0
    %682 = vperm.xlu0 %681, %v642
    %v683 = vpop.permute.xlu0 %682
    %v685 = vmul.f32 %v220, %v678
    %v686 = vmul.f32 %v221, %v683
    %v687 = vadd.f32 %v673, %v685
    %v688 = vadd.f32 %v674, %v686
    %v689 = vmul.f32 %v523, %v627
    %v690 = vmul.f32 %v538, %v628
    %v691 = vadd.f32 %v689, %v639
    %v692 = vadd.f32 %v690, %v640
    %v693 = vmul.f32 %v581, %v633
    %v694 = vmul.f32 %v582, %v634
    %v695 = vadd.f32 %v691, %v693
    %v696 = vadd.f32 %v692, %v694
    %v697 = vmul.f32 %v695, %v246
    %v698 = vmul.f32 %v696, %v246
    %v699 = vsel %vm249, %v697, -inf
    %v700 = vrot.slane %v699, 4
    %v701 = vmax.f32 %v699, %v700
    %v702 = vrot.slane %v701, 2
    %v703 = vmax.f32 %v701, %v702
    %v704 = vrot.slane %v703, 1
    %v705 = vmax.f32 %v703, %v704
    %v706 = vsel %vm249, %v698, -inf
    %v707 = vrot.slane %v706, 4
    %v708 = vmax.f32 %v706, %v707
    %v709 = vrot.slane %v708, 2
    %v710 = vmax.f32 %v708, %v709
    %v711 = vrot.slane %v710, 1
    %v712 = vmax.f32 %v710, %v711
    %v713 = vsub.f32 %v697, %v705
    %v714 = vsub.f32 %v698, %v712
    %v715 = vmul.f32 %v713, 1.442695
    %v716 = vpow.pop %v715
    %v717 = vmul.f32 %v714, 1.442695
    %v718 = vpow.pop %v717
    %v719 = vsel %vm249, %v716, 0.0
    %v720 = vrot.slane %v719, 4
    %v721 = vadd.f32 %v719, %v720
    %v722 = vrot.slane %v721, 2
    %v723 = vadd.f32 %v721, %v722
    %v724 = vrot.slane %v723, 1
    %v725 = vadd.f32 %v723, %v724
    %v726 = vsel %vm249, %v718, 0.0
    %v727 = vrot.slane %v726, 4
    %v728 = vadd.f32 %v726, %v727
    %v729 = vrot.slane %v728, 2
    %v730 = vadd.f32 %v728, %v729
    %v731 = vrot.slane %v730, 1
    %v732 = vadd.f32 %v730, %v731
    %v733 = vrcp.pop %v725
    %v734 = vmul.f32 %v725, %v733
    %v735 = vsub.f32 1.0, %v734
    %v736 = vmul.f32 %v733, %v735
    %v737 = vadd.f32 %v733, %v736
    %vm738 = vweird.f32 %v725
    %vm739 = vweird.f32 %v733
    %vm740 = vmor %vm738, %vm739
    %v741 = vsel %vm740, %v733, %v737
    %v742 = vand.u32 2147483647, %v725
    %vm743 = vcmp.eq.f32.partialorder %v742, 8.507059e+37
    %v744 = vand.u32 %v725, 2147483648
    %v745 = vor.u32 1.1754944e-38, %v744
    %v746 = vsel %vm743, %v745, %v741
    %v747 = vmul.f32 %v716, %v746
    %v748 = vrcp.pop %v732
    %v749 = vmul.f32 %v732, %v748
    %v750 = vsub.f32 1.0, %v749
    %v751 = vmul.f32 %v748, %v750
    %v752 = vadd.f32 %v748, %v751
    %vm753 = vweird.f32 %v732
    %vm754 = vweird.f32 %v748
    %vm755 = vmor %vm753, %vm754
    %v756 = vsel %vm755, %v748, %v752
    %v757 = vand.u32 2147483647, %v732
    %vm758 = vcmp.eq.f32.partialorder %v757, 8.507059e+37
    %v759 = vand.u32 %v732, 2147483648
    %v760 = vor.u32 1.1754944e-38, %v759
    %v761 = vsel %vm758, %v760, %v756
    %v762 = vmul.f32 %v718, %v761
    %s763 = sadd.s32 %s314, 3
    %s764 = smul.u32 %s763, 6
    %s765 = sld [smem:[#allocation3 + %s764]]
    %v766 = vstv %s765
    %s767 = sadd.s32 %s764, 1
    %s768 = sld [smem:[#allocation3 + %s767]]
    %v769 = vstv %s768
    %s770 = smul.u32 %s763, 3
    %s771 = sadd.s32 %s770, 1
    %s772 = smul.u32 %s771, 2
    %s773 = sld [smem:[#allocation3 + %s772]]
    %v774 = vstv %s773
    %s775 = sadd.s32 %s772, 1
    %s776 = sld [smem:[#allocation3 + %s775]]
    %v777 = vstv %s776
    %s778 = sadd.s32 %s770, 2
    %s779 = smul.u32 %s778, 2
    %s780 = sld [smem:[#allocation3 + %s779]]
    %v781 = vstv %s780
    %s782 = sadd.s32 %s779, 1
    %s783 = sld [smem:[#allocation3 + %s782]]
    %v784 = vstv %s783
    %v785 = vsel %vm103, %v774, %v777
    %s786 = scalar_lea.vmem [#allocation7], 6
    %v787 = vld [vmem:[%s786] sm:$0x1]
    %v788 = vld [vmem:[%s786 + $0x1] sm:$0x1]
    %v791 = vrot.slane %v747, 7
    %v792 = vrot.slane %v762, 7
    %v795 = vsel %vm103, %v791, %v791
    %v796 = vsel %vm103, %v792, %v792
    %v797 = vsel %vm76, %v796, %v795
    %v798 = vsel %vm76, %v795, %v796
    %v799 = vrot.slane %v747, 1
    %v800 = vrot.slane %v762, 1
    %v803 = vsel %vm121, %v799, %v799
    %v804 = vsel %vm121, %v800, %v800
    %v805 = vsel %vm77, %v804, %v803
    %v806 = vsel %vm77, %v803, %v804
    %807 = vset.pattern.permute.xlu0 0
    %808 = vperm.xlu0 %807, %v747
    %v809 = vpop.permute.xlu0 %808
    %811 = vset.pattern.permute.xlu0 0
    %812 = vperm.xlu0 %811, %v762
    %v813 = vpop.permute.xlu0 %812
    %v815 = vmul.f32 %v687, %v809
    %v816 = vmul.f32 %v688, %v813
    %v817 = vrot.slane %v815, 4
    %v818 = vadd.f32 %v815, %v817
    %v819 = vrot.slane %v818, 2
    %v820 = vadd.f32 %v818, %v819
    %v821 = vrot.slane %v820, 1
    %v822 = vadd.f32 %v820, %v821
    %v823 = vrot.slane %v816, 4
    %v824 = vadd.f32 %v816, %v823
    %v825 = vrot.slane %v824, 2
    %v826 = vadd.f32 %v824, %v825
    %v827 = vrot.slane %v826, 1
    %v828 = vadd.f32 %v826, %v827
    %830 = vset.pattern.permute.xlu0 0
    %831 = vperm.xlu0 %830, %v785
    %v832 = vpop.permute.xlu0 %831
    %v833 = vrot.slane %v832, 1
    %v836 = vmul.f32 %v822, %v832
    %v837 = vmul.f32 %v828, %v833
    %v840 = vrot.slane %v837, 7
    %v841 = vsel %vm160, %v840, %v836
    %s843 = scalar_lea.vmem [#allocation8], 6
    %844 = vst [vmem:[%s843] sm:$0x3] %v841
    %v845 = vsub.f32 1.0, %v797
    %v846 = vsub.f32 1.0, %v798
    %v847 = vperm.slane %v766, 0
    %v848 = vperm.slane %v769, 0
    %v849 = vmul.f32 %v847, %v845
    %v850 = vmul.f32 %v848, %v846
    %v851 = vperm.slane %v781, 0
    %v852 = vperm.slane %v784, 0
    %v853 = vadd.f32 %v851, %v849
    %v854 = vadd.f32 %v852, %v850
    %v855 = vsub.f32 1.0, %v747
    %v856 = vsub.f32 1.0, %v762
    %v857 = vperm.slane %v774, 0
    %v858 = vperm.slane %v777, 0
    %v859 = vmul.f32 %v857, %v855
    %v860 = vmul.f32 %v858, %v856
    %v861 = vadd.f32 %v853, %v859
    %v862 = vadd.f32 %v854, %v860
    %v863 = vmul.f32 %v847, %v797
    %v864 = vmul.f32 %v848, %v798
    %v865 = vmul.f32 %v857, %v747
    %v866 = vmul.f32 %v858, %v762
    %868 = vset.pattern.permute.xlu0 0
    %869 = vperm.xlu0 %868, %v861
    %v870 = vpop.permute.xlu0 %869
    %873 = vset.pattern.permute.xlu0 0
    %874 = vperm.xlu0 %873, %v862
    %v875 = vpop.permute.xlu0 %874
    %v877 = vmul.f32 %v687, %v870
    %v878 = vmul.f32 %v688, %v875
    %v881 = vperm.slane %v787, 0
    %v882 = vperm.slane %v788, 0
    %886 = vset.pattern.permute.xlu0 0
    %887 = vperm.xlu0 %886, %v863
    %v888 = vpop.permute.xlu0 %887
    %891 = vset.pattern.permute.xlu0 0
    %892 = vperm.xlu0 %891, %v864
    %v893 = vpop.permute.xlu0 %892
    %v895 = vmul.f32 %v881, %v888
    %v896 = vmul.f32 %v882, %v893
    %v897 = vadd.f32 %v877, %v895
    %v898 = vadd.f32 %v878, %v896
    %900 = vset.pattern.permute.xlu0 0
    %901 = vperm.xlu0 %900, %v865
    %v902 = vpop.permute.xlu0 %901
    %905 = vset.pattern.permute.xlu0 0
    %906 = vperm.xlu0 %905, %v866
    %v907 = vpop.permute.xlu0 %906
    %v909 = vmul.f32 %v220, %v902
    %v910 = vmul.f32 %v221, %v907
    %v911 = vadd.f32 %v897, %v909
    %v912 = vadd.f32 %v898, %v910
    %v913 = vmul.f32 %v747, %v851
    %v914 = vmul.f32 %v762, %v852
    %v915 = vadd.f32 %v913, %v863
    %v916 = vadd.f32 %v914, %v864
    %v917 = vmul.f32 %v805, %v857
    %v918 = vmul.f32 %v806, %v858
    %v919 = vadd.f32 %v915, %v917
    %v920 = vadd.f32 %v916, %v918
    %v921 = vmul.f32 %v919, %v246
    %v922 = vmul.f32 %v920, %v246
    %v923 = vsel %vm249, %v921, -inf
    %v924 = vrot.slane %v923, 4
    %v925 = vmax.f32 %v923, %v924
    %v926 = vrot.slane %v925, 2
    %v927 = vmax.f32 %v925, %v926
    %v928 = vrot.slane %v927, 1
    %v929 = vmax.f32 %v927, %v928
    %v930 = vsel %vm249, %v922, -inf
    %v931 = vrot.slane %v930, 4
    %v932 = vmax.f32 %v930, %v931
    %v933 = vrot.slane %v932, 2
    %v934 = vmax.f32 %v932, %v933
    %v935 = vrot.slane %v934, 1
    %v936 = vmax.f32 %v934, %v935
    %v937 = vsub.f32 %v921, %v929
    %v938 = vsub.f32 %v922, %v936
    %v939 = vmul.f32 %v937, 1.442695
    %v940 = vpow.pop %v939
    %v941 = vmul.f32 %v938, 1.442695
    %v942 = vpow.pop %v941
    %v943 = vsel %vm249, %v940, 0.0
    %v944 = vrot.slane %v943, 4
    %v945 = vadd.f32 %v943, %v944
    %v946 = vrot.slane %v945, 2
    %v947 = vadd.f32 %v945, %v946
    %v948 = vrot.slane %v947, 1
    %v949 = vadd.f32 %v947, %v948
    %v950 = vsel %vm249, %v942, 0.0
    %v951 = vrot.slane %v950, 4
    %v952 = vadd.f32 %v950, %v951
    %v953 = vrot.slane %v952, 2
    %v954 = vadd.f32 %v952, %v953
    %v955 = vrot.slane %v954, 1
    %v956 = vadd.f32 %v954, %v955
    %v957 = vrcp.pop %v949
    %v958 = vmul.f32 %v949, %v957
    %v959 = vsub.f32 1.0, %v958
    %v960 = vmul.f32 %v957, %v959
    %v961 = vadd.f32 %v957, %v960
    %vm962 = vweird.f32 %v949
    %vm963 = vweird.f32 %v957
    %vm964 = vmor %vm962, %vm963
    %v965 = vsel %vm964, %v957, %v961
    %v966 = vand.u32 2147483647, %v949
    %vm967 = vcmp.eq.f32.partialorder %v966, 8.507059e+37
    %v968 = vand.u32 %v949, 2147483648
    %v969 = vor.u32 1.1754944e-38, %v968
    %v970 = vsel %vm967, %v969, %v965
    %v971 = vmul.f32 %v940, %v970
    %v972 = vrcp.pop %v956
    %v973 = vmul.f32 %v956, %v972
    %v974 = vsub.f32 1.0, %v973
    %v975 = vmul.f32 %v972, %v974
    %v976 = vadd.f32 %v972, %v975
    %vm977 = vweird.f32 %v956
    %vm978 = vweird.f32 %v972
    %vm979 = vmor %vm977, %vm978
    %v980 = vsel %vm979, %v972, %v976
    %v981 = vand.u32 2147483647, %v956
    %vm982 = vcmp.eq.f32.partialorder %v981, 8.507059e+37
    %v983 = vand.u32 %v956, 2147483648
    %v984 = vor.u32 1.1754944e-38, %v983
    %v985 = vsel %vm982, %v984, %v980
    %v986 = vmul.f32 %v942, %v985
    %s987 = sadd.s32 %s314, 4
    %s988 = smul.u32 %s987, 6
    %s989 = sld [smem:[#allocation3 + %s988]]
    %v990 = vstv %s989
    %s991 = sadd.s32 %s988, 1
    %s992 = sld [smem:[#allocation3 + %s991]]
    %v993 = vstv %s992
    %s994 = smul.u32 %s987, 3
    %s995 = sadd.s32 %s994, 1
    %s996 = smul.u32 %s995, 2
    %s997 = sld [smem:[#allocation3 + %s996]]
    %v998 = vstv %s997
    %s999 = sadd.s32 %s996, 1
    %s1000 = sld [smem:[#allocation3 + %s999]]
    %v1001 = vstv %s1000
    %s1002 = sadd.s32 %s994, 2
    %s1003 = smul.u32 %s1002, 2
    %s1004 = sld [smem:[#allocation3 + %s1003]]
    %v1005 = vstv %s1004
    %s1006 = sadd.s32 %s1003, 1
    %s1007 = sld [smem:[#allocation3 + %s1006]]
    %v1008 = vstv %s1007
    %v1009 = vsel %vm103, %v998, %v1001
    %s1010 = scalar_lea.vmem [#allocation7], 8
    %v1011 = vld [vmem:[%s1010] sm:$0x1]
    %v1012 = vld [vmem:[%s1010 + $0x1] sm:$0x1]
    %v1015 = vrot.slane %v971, 7
    %v1016 = vrot.slane %v986, 7
    %v1019 = vsel %vm103, %v1015, %v1015
    %v1020 = vsel %vm103, %v1016, %v1016
    %v1021 = vsel %vm76, %v1020, %v1019
    %v1022 = vsel %vm76, %v1019, %v1020
    %v1023 = vrot.slane %v971, 1
    %v1024 = vrot.slane %v986, 1
    %v1027 = vsel %vm121, %v1023, %v1023
    %v1028 = vsel %vm121, %v1024, %v1024
    %v1029 = vsel %vm77, %v1028, %v1027
    %v1030 = vsel %vm77, %v1027, %v1028
    %1031 = vset.pattern.permute.xlu0 0
    %1032 = vperm.xlu0 %1031, %v971
    %v1033 = vpop.permute.xlu0 %1032
    %1035 = vset.pattern.permute.xlu0 0
    %1036 = vperm.xlu0 %1035, %v986
    %v1037 = vpop.permute.xlu0 %1036
    %v1039 = vmul.f32 %v911, %v1033
    %v1040 = vmul.f32 %v912, %v1037
    %v1041 = vrot.slane %v1039, 4
    %v1042 = vadd.f32 %v1039, %v1041
    %v1043 = vrot.slane %v1042, 2
    %v1044 = vadd.f32 %v1042, %v1043
    %v1045 = vrot.slane %v1044, 1
    %v1046 = vadd.f32 %v1044, %v1045
    %v1047 = vrot.slane %v1040, 4
    %v1048 = vadd.f32 %v1040, %v1047
    %v1049 = vrot.slane %v1048, 2
    %v1050 = vadd.f32 %v1048, %v1049
    %v1051 = vrot.slane %v1050, 1
    %v1052 = vadd.f32 %v1050, %v1051
    %1054 = vset.pattern.permute.xlu0 0
    %1055 = vperm.xlu0 %1054, %v1009
    %v1056 = vpop.permute.xlu0 %1055
    %v1057 = vrot.slane %v1056, 1
    %v1060 = vmul.f32 %v1046, %v1056
    %v1061 = vmul.f32 %v1052, %v1057
    %v1064 = vrot.slane %v1061, 7
    %v1065 = vsel %vm160, %v1064, %v1060
    %s1067 = scalar_lea.vmem [#allocation8], 8
    %1068 = vst [vmem:[%s1067] sm:$0x3] %v1065
    %v1069 = vsub.f32 1.0, %v1021
    %v1070 = vsub.f32 1.0, %v1022
    %v1071 = vperm.slane %v990, 0
    %v1072 = vperm.slane %v993, 0
    %v1073 = vmul.f32 %v1071, %v1069
    %v1074 = vmul.f32 %v1072, %v1070
    %v1075 = vperm.slane %v1005, 0
    %v1076 = vperm.slane %v1008, 0
    %v1077 = vadd.f32 %v1075, %v1073
    %v1078 = vadd.f32 %v1076, %v1074
    %v1079 = vsub.f32 1.0, %v971
    %v1080 = vsub.f32 1.0, %v986
    %v1081 = vperm.slane %v998, 0
    %v1082 = vperm.slane %v1001, 0
    %v1083 = vmul.f32 %v1081, %v1079
    %v1084 = vmul.f32 %v1082, %v1080
    %v1085 = vadd.f32 %v1077, %v1083
    %v1086 = vadd.f32 %v1078, %v1084
    %v1087 = vmul.f32 %v1071, %v1021
    %v1088 = vmul.f32 %v1072, %v1022
    %v1089 = vmul.f32 %v1081, %v971
    %v1090 = vmul.f32 %v1082, %v986
    %1092 = vset.pattern.permute.xlu0 0
    %1093 = vperm.xlu0 %1092, %v1085
    %v1094 = vpop.permute.xlu0 %1093
    %1097 = vset.pattern.permute.xlu0 0
    %1098 = vperm.xlu0 %1097, %v1086
    %v1099 = vpop.permute.xlu0 %1098
    %v1101 = vmul.f32 %v911, %v1094
    %v1102 = vmul.f32 %v912, %v1099
    %v1105 = vperm.slane %v1011, 0
    %v1106 = vperm.slane %v1012, 0
    %1110 = vset.pattern.permute.xlu0 0
    %1111 = vperm.xlu0 %1110, %v1087
    %v1112 = vpop.permute.xlu0 %1111
    %1115 = vset.pattern.permute.xlu0 0
    %1116 = vperm.xlu0 %1115, %v1088
    %v1117 = vpop.permute.xlu0 %1116
    %v1119 = vmul.f32 %v1105, %v1112
    %v1120 = vmul.f32 %v1106, %v1117
    %v1121 = vadd.f32 %v1101, %v1119
    %v1122 = vadd.f32 %v1102, %v1120
    %1124 = vset.pattern.permute.xlu0 0
    %1125 = vperm.xlu0 %1124, %v1089
    %v1126 = vpop.permute.xlu0 %1125
    %1129 = vset.pattern.permute.xlu0 0
    %1130 = vperm.xlu0 %1129, %v1090
    %v1131 = vpop.permute.xlu0 %1130
    %v1133 = vmul.f32 %v220, %v1126
    %v1134 = vmul.f32 %v221, %v1131
    %v1135 = vadd.f32 %v1121, %v1133
    %v1136 = vadd.f32 %v1122, %v1134
    %v1137 = vmul.f32 %v971, %v1075
    %v1138 = vmul.f32 %v986, %v1076
    %v1139 = vadd.f32 %v1137, %v1087
    %v1140 = vadd.f32 %v1138, %v1088
    %v1141 = vmul.f32 %v1029, %v1081
    %v1142 = vmul.f32 %v1030, %v1082
    %v1143 = vadd.f32 %v1139, %v1141
    %v1144 = vadd.f32 %v1140, %v1142
    %v1145 = vmul.f32 %v1143, %v246
    %v1146 = vmul.f32 %v1144, %v246
    %v1147 = vsel %vm249, %v1145, -inf
    %v1148 = vrot.slane %v1147, 4
    %v1149 = vmax.f32 %v1147, %v1148
    %v1150 = vrot.slane %v1149, 2
    %v1151 = vmax.f32 %v1149, %v1150
    %v1152 = vrot.slane %v1151, 1
    %v1153 = vmax.f32 %v1151, %v1152
    %v1154 = vsel %vm249, %v1146, -inf
    %v1155 = vrot.slane %v1154, 4
    %v1156 = vmax.f32 %v1154, %v1155
    %v1157 = vrot.slane %v1156, 2
    %v1158 = vmax.f32 %v1156, %v1157
    %v1159 = vrot.slane %v1158, 1
    %v1160 = vmax.f32 %v1158, %v1159
    %v1161 = vsub.f32 %v1145, %v1153
    %v1162 = vsub.f32 %v1146, %v1160
    %v1163 = vmul.f32 %v1161, 1.442695
    %v1164 = vpow.pop %v1163
    %v1165 = vmul.f32 %v1162, 1.442695
    %v1166 = vpow.pop %v1165
    %v1167 = vsel %vm249, %v1164, 0.0
    %v1168 = vrot.slane %v1167, 4
    %v1169 = vadd.f32 %v1167, %v1168
    %v1170 = vrot.slane %v1169, 2
    %v1171 = vadd.f32 %v1169, %v1170
    %v1172 = vrot.slane %v1171, 1
    %v1173 = vadd.f32 %v1171, %v1172
    %v1174 = vsel %vm249, %v1166, 0.0
    %v1175 = vrot.slane %v1174, 4
    %v1176 = vadd.f32 %v1174, %v1175
    %v1177 = vrot.slane %v1176, 2
    %v1178 = vadd.f32 %v1176, %v1177
    %v1179 = vrot.slane %v1178, 1
    %v1180 = vadd.f32 %v1178, %v1179
    %v1181 = vrcp.pop %v1173
    %v1182 = vmul.f32 %v1173, %v1181
    %v1183 = vsub.f32 1.0, %v1182
    %v1184 = vmul.f32 %v1181, %v1183
    %v1185 = vadd.f32 %v1181, %v1184
    %vm1186 = vweird.f32 %v1173
    %vm1187 = vweird.f32 %v1181
    %vm1188 = vmor %vm1186, %vm1187
    %v1189 = vsel %vm1188, %v1181, %v1185
    %v1190 = vand.u32 2147483647, %v1173
    %vm1191 = vcmp.eq.f32.partialorder %v1190, 8.507059e+37
    %v1192 = vand.u32 %v1173, 2147483648
    %v1193 = vor.u32 1.1754944e-38, %v1192
    %v1194 = vsel %vm1191, %v1193, %v1189
    %v1195 = vmul.f32 %v1164, %v1194
    %v1196 = vrcp.pop %v1180
    %v1197 = vmul.f32 %v1180, %v1196
    %v1198 = vsub.f32 1.0, %v1197
    %v1199 = vmul.f32 %v1196, %v1198
    %v1200 = vadd.f32 %v1196, %v1199
    %vm1201 = vweird.f32 %v1180
    %vm1202 = vweird.f32 %v1196
    %vm1203 = vmor %vm1201, %vm1202
    %v1204 = vsel %vm1203, %v1196, %v1200
    %v1205 = vand.u32 2147483647, %v1180
    %vm1206 = vcmp.eq.f32.partialorder %v1205, 8.507059e+37
    %v1207 = vand.u32 %v1180, 2147483648
    %v1208 = vor.u32 1.1754944e-38, %v1207
    %v1209 = vsel %vm1206, %v1208, %v1204
    %v1210 = vmul.f32 %v1166, %v1209
    %s1211 = sadd.s32 %s314, 5
    %s1212 = smul.u32 %s1211, 6
    %s1213 = sld [smem:[#allocation3 + %s1212]]
    %v1214 = vstv %s1213
    %s1215 = sadd.s32 %s1212, 1
    %s1216 = sld [smem:[#allocation3 + %s1215]]
    %v1217 = vstv %s1216
    %s1218 = smul.u32 %s1211, 3
    %s1219 = sadd.s32 %s1218, 1
    %s1220 = smul.u32 %s1219, 2
    %s1221 = sld [smem:[#allocation3 + %s1220]]
    %v1222 = vstv %s1221
    %s1223 = sadd.s32 %s1220, 1
    %s1224 = sld [smem:[#allocation3 + %s1223]]
    %v1225 = vstv %s1224
    %s1226 = sadd.s32 %s1218, 2
    %s1227 = smul.u32 %s1226, 2
    %s1228 = sld [smem:[#allocation3 + %s1227]]
    %v1229 = vstv %s1228
    %s1230 = sadd.s32 %s1227, 1
    %s1231 = sld [smem:[#allocation3 + %s1230]]
    %v1232 = vstv %s1231
    %v1233 = vsel %vm103, %v1222, %v1225
    %s1234 = scalar_lea.vmem [#allocation7], 10
    %v1235 = vld [vmem:[%s1234] sm:$0x1]
    %v1236 = vld [vmem:[%s1234 + $0x1] sm:$0x1]
    %v1239 = vrot.slane %v1195, 7
    %v1240 = vrot.slane %v1210, 7
    %v1243 = vsel %vm103, %v1239, %v1239
    %v1244 = vsel %vm103, %v1240, %v1240
    %v1245 = vsel %vm76, %v1244, %v1243
    %v1246 = vsel %vm76, %v1243, %v1244
    %v1247 = vrot.slane %v1195, 1
    %v1248 = vrot.slane %v1210, 1
    %v1251 = vsel %vm121, %v1247, %v1247
    %v1252 = vsel %vm121, %v1248, %v1248
    %v1253 = vsel %vm77, %v1252, %v1251
    %v1254 = vsel %vm77, %v1251, %v1252
    %1255 = vset.pattern.permute.xlu0 0
    %1256 = vperm.xlu0 %1255, %v1195
    %v1257 = vpop.permute.xlu0 %1256
    %1259 = vset.pattern.permute.xlu0 0
    %1260 = vperm.xlu0 %1259, %v1210
    %v1261 = vpop.permute.xlu0 %1260
    %v1263 = vmul.f32 %v1135, %v1257
    %v1264 = vmul.f32 %v1136, %v1261
    %v1265 = vrot.slane %v1263, 4
    %v1266 = vadd.f32 %v1263, %v1265
    %v1267 = vrot.slane %v1266, 2
    %v1268 = vadd.f32 %v1266, %v1267
    %v1269 = vrot.slane %v1268, 1
    %v1270 = vadd.f32 %v1268, %v1269
    %v1271 = vrot.slane %v1264, 4
    %v1272 = vadd.f32 %v1264, %v1271
    %v1273 = vrot.slane %v1272, 2
    %v1274 = vadd.f32 %v1272, %v1273
    %v1275 = vrot.slane %v1274, 1
    %v1276 = vadd.f32 %v1274, %v1275
    %1278 = vset.pattern.permute.xlu0 0
    %1279 = vperm.xlu0 %1278, %v1233
    %v1280 = vpop.permute.xlu0 %1279
    %v1281 = vrot.slane %v1280, 1
    %v1284 = vmul.f32 %v1270, %v1280
    %v1285 = vmul.f32 %v1276, %v1281
    %v1288 = vrot.slane %v1285, 7
    %v1289 = vsel %vm160, %v1288, %v1284
    %s1291 = scalar_lea.vmem [#allocation8], 10
    %1292 = vst [vmem:[%s1291] sm:$0x3] %v1289
    %v1293 = vsub.f32 1.0, %v1245
    %v1294 = vsub.f32 1.0, %v1246
    %v1295 = vperm.slane %v1214, 0
    %v1296 = vperm.slane %v1217, 0
    %v1297 = vmul.f32 %v1295, %v1293
    %v1298 = vmul.f32 %v1296, %v1294
    %v1299 = vperm.slane %v1229, 0
    %v1300 = vperm.slane %v1232, 0
    %v1301 = vadd.f32 %v1299, %v1297
    %v1302 = vadd.f32 %v1300, %v1298
    %v1303 = vsub.f32 1.0, %v1195
    %v1304 = vsub.f32 1.0, %v1210
    %v1305 = vperm.slane %v1222, 0
    %v1306 = vperm.slane %v1225, 0
    %v1307 = vmul.f32 %v1305, %v1303
    %v1308 = vmul.f32 %v1306, %v1304
    %v1309 = vadd.f32 %v1301, %v1307
    %v1310 = vadd.f32 %v1302, %v1308
    %v1311 = vmul.f32 %v1295, %v1245
    %v1312 = vmul.f32 %v1296, %v1246
    %v1313 = vmul.f32 %v1305, %v1195
    %v1314 = vmul.f32 %v1306, %v1210
    %1316 = vset.pattern.permute.xlu0 0
    %1317 = vperm.xlu0 %1316, %v1309
    %v1318 = vpop.permute.xlu0 %1317
    %1321 = vset.pattern.permute.xlu0 0
    %1322 = vperm.xlu0 %1321, %v1310
    %v1323 = vpop.permute.xlu0 %1322
    %v1325 = vmul.f32 %v1135, %v1318
    %v1326 = vmul.f32 %v1136, %v1323
    %v1329 = vperm.slane %v1235, 0
    %v1330 = vperm.slane %v1236, 0
    %1334 = vset.pattern.permute.xlu0 0
    %1335 = vperm.xlu0 %1334, %v1311
    %v1336 = vpop.permute.xlu0 %1335
    %1339 = vset.pattern.permute.xlu0 0
    %1340 = vperm.xlu0 %1339, %v1312
    %v1341 = vpop.permute.xlu0 %1340
    %v1343 = vmul.f32 %v1329, %v1336
    %v1344 = vmul.f32 %v1330, %v1341
    %v1345 = vadd.f32 %v1325, %v1343
    %v1346 = vadd.f32 %v1326, %v1344
    %1348 = vset.pattern.permute.xlu0 0
    %1349 = vperm.xlu0 %1348, %v1313
    %v1350 = vpop.permute.xlu0 %1349
    %1353 = vset.pattern.permute.xlu0 0
    %1354 = vperm.xlu0 %1353, %v1314
    %v1355 = vpop.permute.xlu0 %1354
    %v1357 = vmul.f32 %v220, %v1350
    %v1358 = vmul.f32 %v221, %v1355
    %v1359 = vadd.f32 %v1345, %v1357
    %v1360 = vadd.f32 %v1346, %v1358
    %v1361 = vmul.f32 %v1195, %v1299
    %v1362 = vmul.f32 %v1210, %v1300
    %v1363 = vadd.f32 %v1361, %v1311
    %v1364 = vadd.f32 %v1362, %v1312
    %v1365 = vmul.f32 %v1253, %v1305
    %v1366 = vmul.f32 %v1254, %v1306
    %v1367 = vadd.f32 %v1363, %v1365
    %v1368 = vadd.f32 %v1364, %v1366
    %v1369 = vmul.f32 %v1367, %v246
    %v1370 = vmul.f32 %v1368, %v246
    %v1371 = vsel %vm249, %v1369, -inf
    %v1372 = vrot.slane %v1371, 4
    %v1373 = vmax.f32 %v1371, %v1372
    %v1374 = vrot.slane %v1373, 2
    %v1375 = vmax.f32 %v1373, %v1374
    %v1376 = vrot.slane %v1375, 1
    %v1377 = vmax.f32 %v1375, %v1376
    %v1378 = vsel %vm249, %v1370, -inf
    %v1379 = vrot.slane %v1378, 4
    %v1380 = vmax.f32 %v1378, %v1379
    %v1381 = vrot.slane %v1380, 2
    %v1382 = vmax.f32 %v1380, %v1381
    %v1383 = vrot.slane %v1382, 1
    %v1384 = vmax.f32 %v1382, %v1383
    %v1385 = vsub.f32 %v1369, %v1377
    %v1386 = vsub.f32 %v1370, %v1384
    %v1387 = vmul.f32 %v1385, 1.442695
    %v1388 = vpow.pop %v1387
    %v1389 = vmul.f32 %v1386, 1.442695
    %v1390 = vpow.pop %v1389
    %v1391 = vsel %vm249, %v1388, 0.0
    %v1392 = vrot.slane %v1391, 4
    %v1393 = vadd.f32 %v1391, %v1392
    %v1394 = vrot.slane %v1393, 2
    %v1395 = vadd.f32 %v1393, %v1394
    %v1396 = vrot.slane %v1395, 1
    %v1397 = vadd.f32 %v1395, %v1396
    %v1398 = vsel %vm249, %v1390, 0.0
    %v1399 = vrot.slane %v1398, 4
    %v1400 = vadd.f32 %v1398, %v1399
    %v1401 = vrot.slane %v1400, 2
    %v1402 = vadd.f32 %v1400, %v1401
    %v1403 = vrot.slane %v1402, 1
    %v1404 = vadd.f32 %v1402, %v1403
    %v1405 = vrcp.pop %v1397
    %v1406 = vmul.f32 %v1397, %v1405
    %v1407 = vsub.f32 1.0, %v1406
    %v1408 = vmul.f32 %v1405, %v1407
    %v1409 = vadd.f32 %v1405, %v1408
    %vm1410 = vweird.f32 %v1397
    %vm1411 = vweird.f32 %v1405
    %vm1412 = vmor %vm1410, %vm1411
    %v1413 = vsel %vm1412, %v1405, %v1409
    %v1414 = vand.u32 2147483647, %v1397
    %vm1415 = vcmp.eq.f32.partialorder %v1414, 8.507059e+37
    %v1416 = vand.u32 %v1397, 2147483648
    %v1417 = vor.u32 1.1754944e-38, %v1416
    %v1418 = vsel %vm1415, %v1417, %v1413
    %v1419 = vmul.f32 %v1388, %v1418
    %v1420 = vrcp.pop %v1404
    %v1421 = vmul.f32 %v1404, %v1420
    %v1422 = vsub.f32 1.0, %v1421
    %v1423 = vmul.f32 %v1420, %v1422
    %v1424 = vadd.f32 %v1420, %v1423
    %vm1425 = vweird.f32 %v1404
    %vm1426 = vweird.f32 %v1420
    %vm1427 = vmor %vm1425, %vm1426
    %v1428 = vsel %vm1427, %v1420, %v1424
    %v1429 = vand.u32 2147483647, %v1404
    %vm1430 = vcmp.eq.f32.partialorder %v1429, 8.507059e+37
    %v1431 = vand.u32 %v1404, 2147483648
    %v1432 = vor.u32 1.1754944e-38, %v1431
    %v1433 = vsel %vm1430, %v1432, %v1428
    %v1434 = vmul.f32 %v1390, %v1433
    %s1435 = sadd.s32 %s314, 6
    %s1436 = smul.u32 %s1435, 6
    %s1437 = sld [smem:[#allocation3 + %s1436]]
    %v1438 = vstv %s1437
    %s1439 = sadd.s32 %s1436, 1
    %s1440 = sld [smem:[#allocation3 + %s1439]]
    %v1441 = vstv %s1440
    %s1442 = smul.u32 %s1435, 3
    %s1443 = sadd.s32 %s1442, 1
    %s1444 = smul.u32 %s1443, 2
    %s1445 = sld [smem:[#allocation3 + %s1444]]
    %v1446 = vstv %s1445
    %s1447 = sadd.s32 %s1444, 1
    %s1448 = sld [smem:[#allocation3 + %s1447]]
    %v1449 = vstv %s1448
    %s1450 = sadd.s32 %s1442, 2
    %s1451 = smul.u32 %s1450, 2
    %s1452 = sld [smem:[#allocation3 + %s1451]]
    %v1453 = vstv %s1452
    %s1454 = sadd.s32 %s1451, 1
    %s1455 = sld [smem:[#allocation3 + %s1454]]
    %v1456 = vstv %s1455
    %v1457 = vsel %vm103, %v1446, %v1449
    %s1458 = scalar_lea.vmem [#allocation7], 12
    %v1459 = vld [vmem:[%s1458] sm:$0x1]
    %v1460 = vld [vmem:[%s1458 + $0x1] sm:$0x1]
    %v1463 = vrot.slane %v1419, 7
    %v1464 = vrot.slane %v1434, 7
    %v1467 = vsel %vm103, %v1463, %v1463
    %v1468 = vsel %vm103, %v1464, %v1464
    %v1469 = vsel %vm76, %v1468, %v1467
    %v1470 = vsel %vm76, %v1467, %v1468
    %v1471 = vrot.slane %v1419, 1
    %v1472 = vrot.slane %v1434, 1
    %v1475 = vsel %vm121, %v1471, %v1471
    %v1476 = vsel %vm121, %v1472, %v1472
    %v1477 = vsel %vm77, %v1476, %v1475
    %v1478 = vsel %vm77, %v1475, %v1476
    %1479 = vset.pattern.permute.xlu0 0
    %1480 = vperm.xlu0 %1479, %v1419
    %v1481 = vpop.permute.xlu0 %1480
    %1483 = vset.pattern.permute.xlu0 0
    %1484 = vperm.xlu0 %1483, %v1434
    %v1485 = vpop.permute.xlu0 %1484
    %v1487 = vmul.f32 %v1359, %v1481
    %v1488 = vmul.f32 %v1360, %v1485
    %v1489 = vrot.slane %v1487, 4
    %v1490 = vadd.f32 %v1487, %v1489
    %v1491 = vrot.slane %v1490, 2
    %v1492 = vadd.f32 %v1490, %v1491
    %v1493 = vrot.slane %v1492, 1
    %v1494 = vadd.f32 %v1492, %v1493
    %v1495 = vrot.slane %v1488, 4
    %v1496 = vadd.f32 %v1488, %v1495
    %v1497 = vrot.slane %v1496, 2
    %v1498 = vadd.f32 %v1496, %v1497
    %v1499 = vrot.slane %v1498, 1
    %v1500 = vadd.f32 %v1498, %v1499
    %1502 = vset.pattern.permute.xlu0 0
    %1503 = vperm.xlu0 %1502, %v1457
    %v1504 = vpop.permute.xlu0 %1503
    %v1505 = vrot.slane %v1504, 1
    %v1508 = vmul.f32 %v1494, %v1504
    %v1509 = vmul.f32 %v1500, %v1505
    %v1512 = vrot.slane %v1509, 7
    %v1513 = vsel %vm160, %v1512, %v1508
    %s1515 = scalar_lea.vmem [#allocation8], 12
    %1516 = vst [vmem:[%s1515] sm:$0x3] %v1513
    %v1517 = vsub.f32 1.0, %v1469
    %v1518 = vsub.f32 1.0, %v1470
    %v1519 = vperm.slane %v1438, 0
    %v1520 = vperm.slane %v1441, 0
    %v1521 = vmul.f32 %v1519, %v1517
    %v1522 = vmul.f32 %v1520, %v1518
    %v1523 = vperm.slane %v1453, 0
    %v1524 = vperm.slane %v1456, 0
    %v1525 = vadd.f32 %v1523, %v1521
    %v1526 = vadd.f32 %v1524, %v1522
    %v1527 = vsub.f32 1.0, %v1419
    %v1528 = vsub.f32 1.0, %v1434
    %v1529 = vperm.slane %v1446, 0
    %v1530 = vperm.slane %v1449, 0
    %v1531 = vmul.f32 %v1529, %v1527
    %v1532 = vmul.f32 %v1530, %v1528
    %v1533 = vadd.f32 %v1525, %v1531
    %v1534 = vadd.f32 %v1526, %v1532
    %v1535 = vmul.f32 %v1519, %v1469
    %v1536 = vmul.f32 %v1520, %v1470
    %v1537 = vmul.f32 %v1529, %v1419
    %v1538 = vmul.f32 %v1530, %v1434
    %1540 = vset.pattern.permute.xlu0 0
    %1541 = vperm.xlu0 %1540, %v1533
    %v1542 = vpop.permute.xlu0 %1541
    %1545 = vset.pattern.permute.xlu0 0
    %1546 = vperm.xlu0 %1545, %v1534
    %v1547 = vpop.permute.xlu0 %1546
    %v1549 = vmul.f32 %v1359, %v1542
    %v1550 = vmul.f32 %v1360, %v1547
    %v1553 = vperm.slane %v1459, 0
    %v1554 = vperm.slane %v1460, 0
    %1558 = vset.pattern.permute.xlu0 0
    %1559 = vperm.xlu0 %1558, %v1535
    %v1560 = vpop.permute.xlu0 %1559
    %1563 = vset.pattern.permute.xlu0 0
    %1564 = vperm.xlu0 %1563, %v1536
    %v1565 = vpop.permute.xlu0 %1564
    %v1567 = vmul.f32 %v1553, %v1560
    %v1568 = vmul.f32 %v1554, %v1565
    %v1569 = vadd.f32 %v1549, %v1567
    %v1570 = vadd.f32 %v1550, %v1568
    %1572 = vset.pattern.permute.xlu0 0
    %1573 = vperm.xlu0 %1572, %v1537
    %v1574 = vpop.permute.xlu0 %1573
    %1577 = vset.pattern.permute.xlu0 0
    %1578 = vperm.xlu0 %1577, %v1538
    %v1579 = vpop.permute.xlu0 %1578
    %v1581 = vmul.f32 %v220, %v1574
    %v1582 = vmul.f32 %v221, %v1579
    %v1583 = vadd.f32 %v1569, %v1581
    %v1584 = vadd.f32 %v1570, %v1582
    %v1585 = vmul.f32 %v1419, %v1523
    %v1586 = vmul.f32 %v1434, %v1524
    %v1587 = vadd.f32 %v1585, %v1535
    %v1588 = vadd.f32 %v1586, %v1536
    %v1589 = vmul.f32 %v1477, %v1529
    %v1590 = vmul.f32 %v1478, %v1530
    %v1591 = vadd.f32 %v1587, %v1589
    %v1592 = vadd.f32 %v1588, %v1590
    %v1593 = vmul.f32 %v1591, %v246
    %v1594 = vmul.f32 %v1592, %v246
    %v1595 = vsel %vm249, %v1593, -inf
    %v1596 = vrot.slane %v1595, 4
    %v1597 = vmax.f32 %v1595, %v1596
    %v1598 = vrot.slane %v1597, 2
    %v1599 = vmax.f32 %v1597, %v1598
    %v1600 = vrot.slane %v1599, 1
    %v1601 = vmax.f32 %v1599, %v1600
    %v1602 = vsel %vm249, %v1594, -inf
    %v1603 = vrot.slane %v1602, 4
    %v1604 = vmax.f32 %v1602, %v1603
    %v1605 = vrot.slane %v1604, 2
    %v1606 = vmax.f32 %v1604, %v1605
    %v1607 = vrot.slane %v1606, 1
    %v1608 = vmax.f32 %v1606, %v1607
    %v1609 = vsub.f32 %v1593, %v1601
    %v1610 = vsub.f32 %v1594, %v1608
    %v1611 = vmul.f32 %v1609, 1.442695
    %v1612 = vpow.pop %v1611
    %v1613 = vmul.f32 %v1610, 1.442695
    %v1614 = vpow.pop %v1613
    %v1615 = vsel %vm249, %v1612, 0.0
    %v1616 = vrot.slane %v1615, 4
    %v1617 = vadd.f32 %v1615, %v1616
    %v1618 = vrot.slane %v1617, 2
    %v1619 = vadd.f32 %v1617, %v1618
    %v1620 = vrot.slane %v1619, 1
    %v1621 = vadd.f32 %v1619, %v1620
    %v1622 = vsel %vm249, %v1614, 0.0
    %v1623 = vrot.slane %v1622, 4
    %v1624 = vadd.f32 %v1622, %v1623
    %v1625 = vrot.slane %v1624, 2
    %v1626 = vadd.f32 %v1624, %v1625
    %v1627 = vrot.slane %v1626, 1
    %v1628 = vadd.f32 %v1626, %v1627
    %v1629 = vrcp.pop %v1621
    %v1630 = vmul.f32 %v1621, %v1629
    %v1631 = vsub.f32 1.0, %v1630
    %v1632 = vmul.f32 %v1629, %v1631
    %v1633 = vadd.f32 %v1629, %v1632
    %vm1634 = vweird.f32 %v1621
    %vm1635 = vweird.f32 %v1629
    %vm1636 = vmor %vm1634, %vm1635
    %v1637 = vsel %vm1636, %v1629, %v1633
    %v1638 = vand.u32 2147483647, %v1621
    %vm1639 = vcmp.eq.f32.partialorder %v1638, 8.507059e+37
    %v1640 = vand.u32 %v1621, 2147483648
    %v1641 = vor.u32 1.1754944e-38, %v1640
    %v1642 = vsel %vm1639, %v1641, %v1637
    %v1643 = vmul.f32 %v1612, %v1642
    %v1644 = vrcp.pop %v1628
    %v1645 = vmul.f32 %v1628, %v1644
    %v1646 = vsub.f32 1.0, %v1645
    %v1647 = vmul.f32 %v1644, %v1646
    %v1648 = vadd.f32 %v1644, %v1647
    %vm1649 = vweird.f32 %v1628
    %vm1650 = vweird.f32 %v1644
    %vm1651 = vmor %vm1649, %vm1650
    %v1652 = vsel %vm1651, %v1644, %v1648
    %v1653 = vand.u32 2147483647, %v1628
    %vm1654 = vcmp.eq.f32.partialorder %v1653, 8.507059e+37
    %v1655 = vand.u32 %v1628, 2147483648
    %v1656 = vor.u32 1.1754944e-38, %v1655
    %v1657 = vsel %vm1654, %v1656, %v1652
    %v1658 = vmul.f32 %v1614, %v1657
    %s1659 = sadd.s32 %s314, 7
    %s1660 = smul.u32 %s1659, 6
    %s1661 = sld [smem:[#allocation3 + %s1660]]
    %v1662 = vstv %s1661
    %s1663 = sadd.s32 %s1660, 1
    %s1664 = sld [smem:[#allocation3 + %s1663]]
    %v1665 = vstv %s1664
    %s1666 = smul.u32 %s1659, 3
    %s1667 = sadd.s32 %s1666, 1
    %s1668 = smul.u32 %s1667, 2
    %s1669 = sld [smem:[#allocation3 + %s1668]]
    %v1670 = vstv %s1669
    %s1671 = sadd.s32 %s1668, 1
    %s1672 = sld [smem:[#allocation3 + %s1671]]
    %v1673 = vstv %s1672
    %s1674 = sadd.s32 %s1666, 2
    %s1675 = smul.u32 %s1674, 2
    %s1676 = sld [smem:[#allocation3 + %s1675]]
    %v1677 = vstv %s1676
    %s1678 = sadd.s32 %s1675, 1
    %s1679 = sld [smem:[#allocation3 + %s1678]]
    %v1680 = vstv %s1679
    %v1681 = vsel %vm103, %v1670, %v1673
    %s1682 = scalar_lea.vmem [#allocation7], 14
    %v1683 = vld [vmem:[%s1682] sm:$0x1]
    %v1684 = vld [vmem:[%s1682 + $0x1] sm:$0x1]
    %v1687 = vrot.slane %v1643, 7
    %v1688 = vrot.slane %v1658, 7
    %v1691 = vsel %vm103, %v1687, %v1687
    %v1692 = vsel %vm103, %v1688, %v1688
    %v1693 = vsel %vm76, %v1692, %v1691
    %v1694 = vsel %vm76, %v1691, %v1692
    %v1695 = vrot.slane %v1643, 1
    %v1696 = vrot.slane %v1658, 1
    %v1699 = vsel %vm121, %v1695, %v1695
    %v1700 = vsel %vm121, %v1696, %v1696
    %v1701 = vsel %vm77, %v1700, %v1699
    %v1702 = vsel %vm77, %v1699, %v1700
    %1703 = vset.pattern.permute.xlu0 0
    %1704 = vperm.xlu0 %1703, %v1643
    %v1705 = vpop.permute.xlu0 %1704
    %1707 = vset.pattern.permute.xlu0 0
    %1708 = vperm.xlu0 %1707, %v1658
    %v1709 = vpop.permute.xlu0 %1708
    %v1711 = vmul.f32 %v1583, %v1705
    %v1712 = vmul.f32 %v1584, %v1709
    %v1713 = vrot.slane %v1711, 4
    %v1714 = vadd.f32 %v1711, %v1713
    %v1715 = vrot.slane %v1714, 2
    %v1716 = vadd.f32 %v1714, %v1715
    %v1717 = vrot.slane %v1716, 1
    %v1718 = vadd.f32 %v1716, %v1717
    %v1719 = vrot.slane %v1712, 4
    %v1720 = vadd.f32 %v1712, %v1719
    %v1721 = vrot.slane %v1720, 2
    %v1722 = vadd.f32 %v1720, %v1721
    %v1723 = vrot.slane %v1722, 1
    %v1724 = vadd.f32 %v1722, %v1723
    %1726 = vset.pattern.permute.xlu0 0
    %1727 = vperm.xlu0 %1726, %v1681
    %v1728 = vpop.permute.xlu0 %1727
    %v1729 = vrot.slane %v1728, 1
    %v1732 = vmul.f32 %v1718, %v1728
    %v1733 = vmul.f32 %v1724, %v1729
    %v1736 = vrot.slane %v1733, 7
    %v1737 = vsel %vm160, %v1736, %v1732
    %s1739 = scalar_lea.vmem [#allocation8], 14
    %1740 = vst [vmem:[%s1739] sm:$0x3] %v1737
    %v1741 = vsub.f32 1.0, %v1693
    %v1742 = vsub.f32 1.0, %v1694
    %v1743 = vperm.slane %v1662, 0
    %v1744 = vperm.slane %v1665, 0
    %v1745 = vmul.f32 %v1743, %v1741
    %v1746 = vmul.f32 %v1744, %v1742
    %v1747 = vperm.slane %v1677, 0
    %v1748 = vperm.slane %v1680, 0
    %v1749 = vadd.f32 %v1747, %v1745
    %v1750 = vadd.f32 %v1748, %v1746
    %v1751 = vsub.f32 1.0, %v1643
    %v1752 = vsub.f32 1.0, %v1658
    %v1753 = vperm.slane %v1670, 0
    %v1754 = vperm.slane %v1673, 0
    %v1755 = vmul.f32 %v1753, %v1751
    %v1756 = vmul.f32 %v1754, %v1752
    %v1757 = vadd.f32 %v1749, %v1755
    %v1758 = vadd.f32 %v1750, %v1756
    %v1759 = vmul.f32 %v1743, %v1693
    %v1760 = vmul.f32 %v1744, %v1694
    %v1761 = vmul.f32 %v1753, %v1643
    %v1762 = vmul.f32 %v1754, %v1658
    %1764 = vset.pattern.permute.xlu0 0
    %1765 = vperm.xlu0 %1764, %v1757
    %v1766 = vpop.permute.xlu0 %1765
    %1769 = vset.pattern.permute.xlu0 0
    %1770 = vperm.xlu0 %1769, %v1758
    %v1771 = vpop.permute.xlu0 %1770
    %v1773 = vmul.f32 %v1583, %v1766
    %v1774 = vmul.f32 %v1584, %v1771
    %v1777 = vperm.slane %v1683, 0
    %v1778 = vperm.slane %v1684, 0
    %1782 = vset.pattern.permute.xlu0 0
    %1783 = vperm.xlu0 %1782, %v1759
    %v1784 = vpop.permute.xlu0 %1783
    %1787 = vset.pattern.permute.xlu0 0
    %1788 = vperm.xlu0 %1787, %v1760
    %v1789 = vpop.permute.xlu0 %1788
    %v1791 = vmul.f32 %v1777, %v1784
    %v1792 = vmul.f32 %v1778, %v1789
    %v1793 = vadd.f32 %v1773, %v1791
    %v1794 = vadd.f32 %v1774, %v1792
    %1796 = vset.pattern.permute.xlu0 0
    %1797 = vperm.xlu0 %1796, %v1761
    %v1798 = vpop.permute.xlu0 %1797
    %1801 = vset.pattern.permute.xlu0 0
    %1802 = vperm.xlu0 %1801, %v1762
    %v1803 = vpop.permute.xlu0 %1802
    %v1805 = vmul.f32 %v220, %v1798
    %v1806 = vmul.f32 %v221, %v1803
    %v1807 = vadd.f32 %v1793, %v1805
    %v1808 = vadd.f32 %v1794, %v1806
    %v1809 = vmul.f32 %v1643, %v1747
    %v1810 = vmul.f32 %v1658, %v1748
    %v1811 = vadd.f32 %v1809, %v1759
    %v1812 = vadd.f32 %v1810, %v1760
    %v1813 = vmul.f32 %v1701, %v1753
    %v1814 = vmul.f32 %v1702, %v1754
    %v1815 = vadd.f32 %v1811, %v1813
    %v1816 = vadd.f32 %v1812, %v1814
    %v1817 = vmul.f32 %v1815, %v246
    %v1818 = vmul.f32 %v1816, %v246
    %v1819 = vsel %vm249, %v1817, -inf
    %v1820 = vrot.slane %v1819, 4
    %v1821 = vmax.f32 %v1819, %v1820
    %v1822 = vrot.slane %v1821, 2
    %v1823 = vmax.f32 %v1821, %v1822
    %v1824 = vrot.slane %v1823, 1
    %v1825 = vmax.f32 %v1823, %v1824
    %v1826 = vsel %vm249, %v1818, -inf
    %v1827 = vrot.slane %v1826, 4
    %v1828 = vmax.f32 %v1826, %v1827
    %v1829 = vrot.slane %v1828, 2
    %v1830 = vmax.f32 %v1828, %v1829
    %v1831 = vrot.slane %v1830, 1
    %v1832 = vmax.f32 %v1830, %v1831
    %v1833 = vsub.f32 %v1817, %v1825
    %v1834 = vsub.f32 %v1818, %v1832
    %v1835 = vmul.f32 %v1833, 1.442695
    %v1836 = vpow.pop %v1835
    %v1837 = vmul.f32 %v1834, 1.442695
    %v1838 = vpow.pop %v1837
    %v1839 = vsel %vm249, %v1836, 0.0
    %v1840 = vrot.slane %v1839, 4
    %v1841 = vadd.f32 %v1839, %v1840
    %v1842 = vrot.slane %v1841, 2
    %v1843 = vadd.f32 %v1841, %v1842
    %v1844 = vrot.slane %v1843, 1
    %v1845 = vadd.f32 %v1843, %v1844
    %v1846 = vsel %vm249, %v1838, 0.0
    %v1847 = vrot.slane %v1846, 4
    %v1848 = vadd.f32 %v1846, %v1847
    %v1849 = vrot.slane %v1848, 2
    %v1850 = vadd.f32 %v1848, %v1849
    %v1851 = vrot.slane %v1850, 1
    %v1852 = vadd.f32 %v1850, %v1851
    %v1853 = vrcp.pop %v1845
    %v1854 = vmul.f32 %v1845, %v1853
    %v1855 = vsub.f32 1.0, %v1854
    %v1856 = vmul.f32 %v1853, %v1855
    %v1857 = vadd.f32 %v1853, %v1856
    %vm1858 = vweird.f32 %v1845
    %vm1859 = vweird.f32 %v1853
    %vm1860 = vmor %vm1858, %vm1859
    %v1861 = vsel %vm1860, %v1853, %v1857
    %v1862 = vand.u32 2147483647, %v1845
    %vm1863 = vcmp.eq.f32.partialorder %v1862, 8.507059e+37
    %v1864 = vand.u32 %v1845, 2147483648
    %v1865 = vor.u32 1.1754944e-38, %v1864
    %v1866 = vsel %vm1863, %v1865, %v1861
    %v1867 = vmul.f32 %v1836, %v1866
    %v1868 = vrcp.pop %v1852
    %v1869 = vmul.f32 %v1852, %v1868
    %v1870 = vsub.f32 1.0, %v1869
    %v1871 = vmul.f32 %v1868, %v1870
    %v1872 = vadd.f32 %v1868, %v1871
    %vm1873 = vweird.f32 %v1852
    %vm1874 = vweird.f32 %v1868
    %vm1875 = vmor %vm1873, %vm1874
    %v1876 = vsel %vm1875, %v1868, %v1872
    %v1877 = vand.u32 2147483647, %v1852
    %vm1878 = vcmp.eq.f32.partialorder %v1877, 8.507059e+37
    %v1879 = vand.u32 %v1852, 2147483648
    %v1880 = vor.u32 1.1754944e-38, %v1879
    %v1881 = vsel %vm1878, %v1880, %v1876
    %v1882 = vmul.f32 %v1838, %v1881
    %1883 = vst [vmem:[#allocation9] sm:$0xff] %v1807
    %1884 = vst [vmem:[#allocation9 + $0x8] sm:$0xff] %v1808
    %1885 = vst.msk [vmem:[%s8] sm:$0xff] %vm249, %v1867
    %1886 = vst.msk [vmem:[%s8 + $0x8] sm:$0xff] %vm249, %v1882
    // Predicated region
    $region38: #{tpu_custom_call.1} parent=1 // pred_check
      _
    $region39: #{tpu_custom_call.1} parent=1 // pred_check_branch
      %1888 = sbr.rel (0) target = $region41
    $region40: #{tpu_custom_call.1} parent=1 // pred_region
      %1890 = vsyncadd [#allocation5], 0
      %s1891 = sshll.u32 [#allocation8], 4
      %s1892 = int_to_ptr.vmem [resolvable:$true] %s1891
      %s1893 = sshll.u32 %s6, 4
      %s1894 = int_to_ptr.hbm [resolvable:$true] %s1893
      %1899 = dma.vmem_to_hbm [thread:$0]  %s1892, 256, %s1894, [#allocation5], 32, 32, 2
    $region41: #{tpu_custom_call.1} parent=1 // pred_fallthru
      _
    // Predicated region
    $region42: #{tpu_custom_call.1} parent=1 // pred_check
      _
    $region43: #{tpu_custom_call.1} parent=1 // pred_check_branch
      %1901 = sbr.rel (0) target = $region45
    $region44: #{tpu_custom_call.1} parent=1 // pred_region
      %1903 = vsyncadd [#allocation10], 0
      %s1904 = sshll.u32 [#allocation9], 4
      %s1905 = int_to_ptr.vmem [resolvable:$true] %s1904
      %s1906 = sshll.u32 %s7, 4
      %s1907 = int_to_ptr.hbm [resolvable:$true] %s1906
      %1912 = dma.vmem_to_hbm [thread:$0]  %s1905, 256, %s1907, [#allocation10], 128, 128, 8
    $region45: #{tpu_custom_call.1} parent=1 // pred_fallthru
      _
    // Predicated region
    $region46: #{tpu_custom_call.1} parent=1 // pred_check
      _
    $region47: #{tpu_custom_call.1} parent=1 // pred_check_branch
      %1914 = sbr.rel (0) target = $region49
    $region48: #{tpu_custom_call.1} parent=1 // pred_region
      _
    $region49: #{tpu_custom_call.1} parent=1 // pred_fallthru
      _
    // Predicated region
    $region50: #{tpu_custom_call.1} parent=1 // pred_check
      _
    $region51: #{tpu_custom_call.1} parent=1 // pred_check_branch
      %1916 = sbr.rel (0) target = $region53
    $region52: #{tpu_custom_call.1} parent=1 // pred_region
      %1918 = dma.done [#allocation5], 256
    $region53: #{tpu_custom_call.1} parent=1 // pred_fallthru
      _
    // Predicated region
    $region54: #{tpu_custom_call.1} parent=1 // pred_check
      _
    $region55: #{tpu_custom_call.1} parent=1 // pred_check_branch
      %1920 = sbr.rel (0) target = $region57
    $region56: #{tpu_custom_call.1} parent=1 // pred_region
      %1922 = dma.done [#allocation10], 256
    $region57: #{tpu_custom_call.1} parent=1 // pred_fallthru
      _
    // Predicated region
    $region58: #{tpu_custom_call.1} parent=1 // pred_check
      _
    $region59: #{tpu_custom_call.1} parent=1 // pred_check_branch
      %1924 = sbr.rel (0) target = $region61
    $region60: #{tpu_custom_call.1} parent=1 // pred_region
      _
    $region61: #{tpu_custom_call.1} parent=1 // pred_fallthru
      _
    %1925 = vsyncpa [#allocation4], 1
    %1926 = vsyncpa [#allocation5], 1
    %1927 = vsyncpa [#allocation10], 1
    %1928 = vsyncpa [#allocation6], 1

</llo_original>
